<compile_context>
chip_gen: v6e
topology: v6e:2x2x1
jax: 0.10.0
libtpu: 0.0.40
codegen_flags: <defaults>
</compile_context>

<pallas_src>
import numpy as np
import jax
import jax.numpy as jnp
from jax import lax
from jax.experimental import pallas as pl
from jax.experimental.pallas import tpu as pltpu

_ROW_TILE = 8  # agent rows per grid step (sublane tile of the output)


# -----------------------------------------------------------------------------
# Fused kernel: pairwise social features + 3-layer MLP + masked attention pooling
# -----------------------------------------------------------------------------
def _fused_kernel(scal_ref,          # SMEM (NP, 8): [px, py, vx, vy, sb_id, valid, 0, 0]
                  tab_ref,           # VMEM (NP, 8): same table, column (sublane) oriented
                  h_ref,             # VMEM (NP, H): encoder hidden states
                  w1_ref, b1_ref,    # (3, 32), (1, 32)
                  w2_ref, b2_ref,    # (32, 64), (1, 64)
                  w3_ref, b3_ref,    # (64, F), (1, F)
                  wa_ref, ba_ref,    # (H, F), (1, F)
                  out_ref):          # VMEM (ROW_TILE, H)
    blk = pl.program_id(0)
    n_all = tab_ref.shape[0]
    br, hdim = out_ref.shape

    # ---- per-grid-step resident values (hoisted out of the row loop) ---------
    tab = tab_ref[...]
    px, py = tab[:, 0:1], tab[:, 1:2]          # (NP, 1) agent state, j on sublanes
    vx, vy = tab[:, 2:3], tab[:, 3:4]
    sb = tab[:, 4:5]                           # sub-batch id of agent j
    h_all = h_ref[...]                         # (NP, H)
    w1 = w1_ref[...]; b1 = b1_ref[...]
    w2 = w2_ref[...]; b2 = b2_ref[...]
    w3 = w3_ref[...]; b3 = b3_ref[...]
    # Wh = W(h), shared by every row of this tile.
    wh = jnp.dot(h_all, wa_ref[...], preferred_element_type=jnp.float32) + ba_ref[...]
    jidx = lax.broadcasted_iota(jnp.int32, (n_all, 1), 0)
    ridx = lax.broadcasted_iota(jnp.int32, (br, 1), 0)

    def row_body(r, acc):
        g = blk * br + r                       # global agent (row) index i
        pxi = scal_ref[g, 0]; pyi = scal_ref[g, 1]
        vxi = scal_ref[g, 2]; vyi = scal_ref[g, 3]
        sbi = scal_ref[g, 4]; vali = scal_ref[g, 5]

        # ---- social features of agent i vs every agent j, all (NP, 1) --------
        dpx = pxi - px
        dpy = pyi - py
        dvx = vxi - vx
        dvy = vyi - vy
        l2 = jnp.sqrt(dpx * dpx + dpy * dpy)
        vni = jnp.sqrt(vxi * vxi + vyi * vyi)
        cosb = (dpx * vxi + dpy * vyi) / (l2 * vni + 1e-6)
        ttca = -(dpx * dvx + dpy * dvy) / (dvx * dvx + dvy * dvy + 1e-6)
        dcx = dpx + ttca * dvx
        dcy = dpy + ttca * dvy
        dca = jnp.sqrt(dcx * dcx + dcy * dcy)

        # ---- EmbedSocialFeatures MLP -----------------------------------------
        # layer 1 (3 -> 32): K=3 contraction done on the VPU as broadcast MACs.
        h1 = jnp.maximum(l2 * w1[0:1, :] + cosb * w1[1:2, :] + dca * w1[2:3, :] + b1, 0.0)
        h2 = jnp.maximum(jnp.dot(h1, w2, preferred_element_type=jnp.float32) + b2, 0.0)
        emb = jnp.dot(h2, w3, preferred_element_type=jnp.float32) + b3        # (NP, F)

        # ---- AttentionPooling for row i ---------------------------------------
        sigma = jnp.sum(emb * wh, axis=1, keepdims=True)                       # (NP, 1)
        same = sb == sbi                       # same sub-batch as agent i
        is_self = jidx == g
        logits = jnp.where(same, jnp.where(is_self, -1000.0, sigma), -1e30)
        m = jnp.max(logits, axis=0, keepdims=True)
        e = jnp.exp(logits - m)
        denom = jnp.sum(e, axis=0, keepdims=True)
        # reciprocal-multiply (approx=True would move it fully onto the EUP but
        # loosens the match vs. the exact-division reference).
        attn = e * pl.reciprocal(denom, approx=False)                          # (NP, 1)
        srow = jnp.sum(attn * h_all, axis=0, keepdims=True) * vali             # (1, H)

        # scatter the row into the output tile without dynamic stores
        onehot = (ridx == r).astype(jnp.float32)                               # (br, 1)
        return acc + onehot * srow

    acc0 = jnp.zeros((br, hdim), jnp.float32)
    out_ref[...] = lax.fori_loop(0, br, row_body, acc0, unroll=True)


# -----------------------------------------------------------------------------
# Glue / wrapper
# -----------------------------------------------------------------------------
def _subbatch_metadata(sub_batches, n_pad):
    sbid = np.full((n_pad,), -1.0, np.float32)     # padded agents get id -1
    valid = np.zeros((n_pad,), np.float32)
    for k, (s, e) in enumerate(sub_batches):
        sbid[s:e] = float(k)
        if e - s > 1:
            valid[s:e] = 1.0
    return sbid, valid


def social_attention_forward(in_xy, in_dxdy, enc_h, sub_batches, params):
    """Fused Pallas forward of SocialAttention."""
    w1, b1, w2, b2, w3, b3, wa, ba = params
    n, hdim = enc_h.shape
    br = _ROW_TILE
    n_pad = ((n + br - 1) // br) * br              # pad agents to a multiple of 8

    pos = in_xy[-1][:, :2].astype(jnp.float32)
    vel = in_dxdy[-1][:, :2].astype(jnp.float32)
    x4 = jnp.concatenate([pos, vel], axis=-1)                     # (n, 4)
    x4 = jnp.pad(x4, ((0, n_pad - n), (0, 0)))

    sbid, valid = _subbatch_metadata(sub_batches, n_pad)
    tab = jnp.concatenate(
        [x4, jnp.asarray(sbid)[:, None], jnp.asarray(valid)[:, None],
         jnp.zeros((n_pad, 2), jnp.float32)], axis=-1)            # (n_pad, 8)

    h = jnp.pad(enc_h.astype(jnp.float32), ((0, n_pad - n), (0, 0)))

    args = (tab, tab, h,
            w1.astype(jnp.float32), b1.reshape(1, -1).astype(jnp.float32),
            w2.astype(jnp.float32), b2.reshape(1, -1).astype(jnp.float32),
            w3.astype(jnp.float32), b3.reshape(1, -1).astype(jnp.float32),
            wa.astype(jnp.float32), ba.reshape(1, -1).astype(jnp.float32))

    def resident(arr):       # whole array resident in VMEM, same block every step
        return pl.BlockSpec(arr.shape, lambda i: (0, 0))

    in_specs = [pl.BlockSpec(memory_space=pltpu.MemorySpace.SMEM)]   # scalar table
    in_specs += [resident(a) for a in args[1:]]

    out = pl.pallas_call(
        _fused_kernel,
        out_shape=jax.ShapeDtypeStruct((n_pad, hdim), jnp.float32),
        grid=(n_pad // br,),
        in_specs=in_specs,
        out_specs=pl.BlockSpec((br, hdim), lambda i: (i, 0)),
        compiler_params=pltpu.CompilerParams(
            dimension_semantics=("parallel",)),    # row tiles shard across TCs (v7x)
    )(*args)

    return out[:n]


# -----------------------------------------------------------------------------
# Pure-JAX reference (mirrors PyTorch semantics, python sub-batch loops included)
# -----------------------------------------------------------------------------
def reference_forward(in_xy, in_dxdy, enc_h, sub_batches, params):
    w1, b1, w2, b2, w3, b3, wa, ba = params
    pos = in_xy[-1][:, :2]
    vel = in_dxdy[-1][:, :2]
    x = jnp.concatenate([pos, vel], axis=-1)
    px, py, vx, vy = x[:, 0], x[:, 1], x[:, 2], x[:, 3]

    dpx = px[:, None] - px[None, :]
    dpy = py[:, None] - py[None, :]
    dvx = vx[:, None] - vx[None, :]
    dvy = vy[:, None] - vy[None, :]
    l2 = jnp.sqrt(dpx * dpx + dpy * dpy)
    vni = jnp.sqrt(vx * vx + vy * vy)[:, None]
    cos = (dpx * vx[:, None] + dpy * vy[:, None]) / (l2 * vni + 1e-6)
    ttca = -(dpx * dvx + dpy * dvy) / (dvx * dvx + dvy * dvy + 1e-6)
    dcx = dpx + ttca * dvx
    dcy = dpy + ttca * dvy
    dca = jnp.sqrt(dcx * dcx + dcy * dcy)

    h1 = jnp.maximum(l2[..., None] * w1[0] + cos[..., None] * w1[1]
                     + dca[..., None] * w1[2] + b1, 0.0)
    h2 = jnp.maximum(h1 @ w2 + b2, 0.0)
    emb = h2 @ w3 + b3                        # (n, n, F)

    wh = enc_h @ wa + ba                      # (n, F)
    s = jnp.zeros_like(enc_h)
    for (a, e) in sub_batches:
        if e - a == 1:
            continue
        for i in range(a, e):
            sig = jnp.sum(emb[i, a:e] * wh[a:e], axis=1)
            sig = sig.at[i - a].set(-1000.0)
            att = jax.nn.softmax(sig)
            s = s.at[i].set(jnp.sum(att[:, None] * enc_h[a:e], axis=0))
    return s


# -----------------------------------------------------------------------------
if __name__ == "__main__":
    T, N, H, F = 4, 8, 32, 16          # timesteps, agents, hidden_size, social_feat_size
    key = jax.random.PRNGKey(0)
    ks = jax.random.split(key, 12)

    in_xy = jax.random.normal(ks[0], (T, N, 2), jnp.float32) * 2.0
    in_dxdy = jax.random.normal(ks[1], (T, N, 2), jnp.float32)
    enc_h = jax.random.normal(ks[2], (N, H), jnp.float32)
    sub_batches = [(0, 5), (5, 7), (7, 8)]   # last sub-batch has size 1 -> zero rows

    # torch Linear weights stored transposed: (in, out)
    w1 = jax.random.normal(ks[3], (3, 32), jnp.float32) * 0.3
    b1 = jax.random.normal(ks[4], (32,), jnp.float32) * 0.1
    w2 = jax.random.normal(ks[5], (32, 64), jnp.float32) * 0.2
    b2 = jax.random.normal(ks[6], (64,), jnp.float32) * 0.1
    w3 = jax.random.normal(ks[7], (64, F), jnp.float32) * 0.2
    b3 = jax.random.normal(ks[8], (F,), jnp.float32) * 0.1
    wa = jax.random.normal(ks[9], (H, F), jnp.float32) * 0.2
    ba = jax.random.normal(ks[10], (F,), jnp.float32) * 0.1
    params = (w1, b1, w2, b2, w3, b3, wa, ba)

    out = social_attention_forward(in_xy, in_dxdy, enc_h, sub_batches, params)
    out = jax.block_until_ready(out)

    ref = reference_forward(in_xy, in_dxdy, enc_h, sub_batches, params)
    ref = jax.block_until_ready(ref)

    assert out.shape == (N, H), out.shape
    # small cushion for MXU default-precision matmuls inside vs. outside the kernel
    np.testing.assert_allclose(np.asarray(out), np.asarray(ref), rtol=2e-4, atol=2e-4)

    print("KERNEL_OK")
</pallas_src>

<mosaic_0001>
module attributes {stable_mosaic.version = 11 : i64} {
  func.func @_fused_kernel(%arg0: i32, %arg1: memref<8x8xf32, #tpu.memory_space<smem>>, %arg2: memref<8x8xf32, #tpu.memory_space<vmem>>, %arg3: memref<8x32xf32, #tpu.memory_space<vmem>>, %arg4: memref<3x32xf32, #tpu.memory_space<vmem>>, %arg5: memref<1x32xf32, #tpu.memory_space<vmem>>, %arg6: memref<32x64xf32, #tpu.memory_space<vmem>>, %arg7: memref<1x64xf32, #tpu.memory_space<vmem>>, %arg8: memref<64x16xf32, #tpu.memory_space<vmem>>, %arg9: memref<1x16xf32, #tpu.memory_space<vmem>>, %arg10: memref<32x16xf32, #tpu.memory_space<vmem>>, %arg11: memref<1x16xf32, #tpu.memory_space<vmem>>, %arg12: memref<8x32xf32, #tpu.memory_space<vmem>>) attributes {dimension_semantics = [#tpu.dimension_semantics<parallel>], iteration_bounds = array<i64: 1>, scalar_prefetch = 0 : i64, scratch_operands = 0 : i64, tpu.core_type = #tpu.core_type<tc>, window_params = [{transform_indices = @transform_0, window_bounds = array<i64: 8, 8>}, {pipeline_mode = #tpu.pipeline_mode<synchronous>, transform_indices = @transform_1, window_bounds = array<i64: 8, 8>}, {pipeline_mode = #tpu.pipeline_mode<synchronous>, transform_indices = @transform_2, window_bounds = array<i64: 8, 32>}, {pipeline_mode = #tpu.pipeline_mode<synchronous>, transform_indices = @transform_3, window_bounds = array<i64: 3, 32>}, {pipeline_mode = #tpu.pipeline_mode<synchronous>, transform_indices = @transform_4, window_bounds = array<i64: 1, 32>}, {pipeline_mode = #tpu.pipeline_mode<synchronous>, transform_indices = @transform_5, window_bounds = array<i64: 32, 64>}, {pipeline_mode = #tpu.pipeline_mode<synchronous>, transform_indices = @transform_6, window_bounds = array<i64: 1, 64>}, {pipeline_mode = #tpu.pipeline_mode<synchronous>, transform_indices = @transform_7, window_bounds = array<i64: 64, 16>}, {pipeline_mode = #tpu.pipeline_mode<synchronous>, transform_indices = @transform_8, window_bounds = array<i64: 1, 16>}, {pipeline_mode = #tpu.pipeline_mode<synchronous>, transform_indices = @transform_9, window_bounds = array<i64: 32, 16>}, {pipeline_mode = #tpu.pipeline_mode<synchronous>, transform_indices = @transform_10, window_bounds = array<i64: 1, 16>}, {transform_indices = @transform_11, window_bounds = array<i64: 8, 32>}]} {
    %c0 = arith.constant 0 : index
    %c0_0 = arith.constant 0 : index
    %0 = vector.load %arg2[%c0, %c0_0] : memref<8x8xf32, #tpu.memory_space<vmem>>, vector<8x8xf32>
    %1 = vector.extract_strided_slice %0 {offsets = [0, 0], sizes = [8, 1], strides = [1, 1]} : vector<8x8xf32> to vector<8x1xf32>
    %2 = vector.extract_strided_slice %0 {offsets = [0, 1], sizes = [8, 1], strides = [1, 1]} : vector<8x8xf32> to vector<8x1xf32>
    %3 = vector.extract_strided_slice %0 {offsets = [0, 2], sizes = [8, 1], strides = [1, 1]} : vector<8x8xf32> to vector<8x1xf32>
    %4 = vector.extract_strided_slice %0 {offsets = [0, 3], sizes = [8, 1], strides = [1, 1]} : vector<8x8xf32> to vector<8x1xf32>
    %5 = vector.extract_strided_slice %0 {offsets = [0, 4], sizes = [8, 1], strides = [1, 1]} : vector<8x8xf32> to vector<8x1xf32>
    %c0_1 = arith.constant 0 : index
    %c0_2 = arith.constant 0 : index
    %6 = vector.load %arg3[%c0_1, %c0_2] : memref<8x32xf32, #tpu.memory_space<vmem>>, vector<8x32xf32>
    %c0_3 = arith.constant 0 : index
    %c0_4 = arith.constant 0 : index
    %7 = vector.load %arg4[%c0_3, %c0_4] : memref<3x32xf32, #tpu.memory_space<vmem>>, vector<3x32xf32>
    %c0_5 = arith.constant 0 : index
    %c0_6 = arith.constant 0 : index
    %8 = vector.load %arg5[%c0_5, %c0_6] : memref<1x32xf32, #tpu.memory_space<vmem>>, vector<1x32xf32>
    %c0_7 = arith.constant 0 : index
    %c0_8 = arith.constant 0 : index
    %9 = vector.load %arg6[%c0_7, %c0_8] : memref<32x64xf32, #tpu.memory_space<vmem>>, vector<32x64xf32>
    %c0_9 = arith.constant 0 : index
    %c0_10 = arith.constant 0 : index
    %10 = vector.load %arg7[%c0_9, %c0_10] : memref<1x64xf32, #tpu.memory_space<vmem>>, vector<1x64xf32>
    %c0_11 = arith.constant 0 : index
    %c0_12 = arith.constant 0 : index
    %11 = vector.load %arg8[%c0_11, %c0_12] : memref<64x16xf32, #tpu.memory_space<vmem>>, vector<64x16xf32>
    %c0_13 = arith.constant 0 : index
    %c0_14 = arith.constant 0 : index
    %12 = vector.load %arg9[%c0_13, %c0_14] : memref<1x16xf32, #tpu.memory_space<vmem>>, vector<1x16xf32>
    %c0_15 = arith.constant 0 : index
    %c0_16 = arith.constant 0 : index
    %13 = vector.load %arg10[%c0_15, %c0_16] : memref<32x16xf32, #tpu.memory_space<vmem>>, vector<32x16xf32>
    %cst = arith.constant dense<0.000000e+00> : vector<8x16xf32>
    %14 = tpu.matmul %6, %13, %cst {dimension_numbers = #tpu.dot_dimension_numbers<[1], [0], [0], [1], [0, 0, 1, 1], [], []>} : vector<8x32xf32>, vector<32x16xf32>, vector<8x16xf32> -> vector<8x16xf32>
    %c0_17 = arith.constant 0 : index
    %c0_18 = arith.constant 0 : index
    %15 = vector.load %arg11[%c0_17, %c0_18] : memref<1x16xf32, #tpu.memory_space<vmem>>, vector<1x16xf32>
    %16 = vector.broadcast %15 : vector<1x16xf32> to vector<8x16xf32>
    %17 = arith.addf %14, %16 : vector<8x16xf32>
    %18 = tpu.iota {dimensions = array<i32: 0>} : vector<8x1xi32>
    %19 = tpu.iota {dimensions = array<i32: 0>} : vector<8x1xi32>
    %cst_19 = arith.constant 0.000000e+00 : f32
    %20 = vector.broadcast %cst_19 : f32 to vector<8x32xf32>
    %c0_i32 = arith.constant 0 : i32
    %c8_i32 = arith.constant 8 : i32
    %21 = arith.muli %arg0, %c8_i32 : i32
    %22 = arith.addi %21, %c0_i32 : i32
    %23 = arith.index_cast %22 : i32 to index
    %c0_20 = arith.constant 0 : index
    %24 = memref.load %arg1[%23, %c0_20] : memref<8x8xf32, #tpu.memory_space<smem>>
    %25 = arith.index_cast %22 : i32 to index
    %c1 = arith.constant 1 : index
    %26 = memref.load %arg1[%25, %c1] : memref<8x8xf32, #tpu.memory_space<smem>>
    %27 = arith.index_cast %22 : i32 to index
    %c2 = arith.constant 2 : index
    %28 = memref.load %arg1[%27, %c2] : memref<8x8xf32, #tpu.memory_space<smem>>
    %29 = arith.index_cast %22 : i32 to index
    %c3 = arith.constant 3 : index
    %30 = memref.load %arg1[%29, %c3] : memref<8x8xf32, #tpu.memory_space<smem>>
    %31 = arith.index_cast %22 : i32 to index
    %c4 = arith.constant 4 : index
    %32 = memref.load %arg1[%31, %c4] : memref<8x8xf32, #tpu.memory_space<smem>>
    %33 = arith.index_cast %22 : i32 to index
    %c5 = arith.constant 5 : index
    %34 = memref.load %arg1[%33, %c5] : memref<8x8xf32, #tpu.memory_space<smem>>
    %35 = vector.broadcast %24 : f32 to vector<8x1xf32>
    %36 = arith.subf %35, %1 : vector<8x1xf32>
    %37 = vector.broadcast %26 : f32 to vector<8x1xf32>
    %38 = arith.subf %37, %2 : vector<8x1xf32>
    %39 = vector.broadcast %28 : f32 to vector<8x1xf32>
    %40 = arith.subf %39, %3 : vector<8x1xf32>
    %41 = vector.broadcast %30 : f32 to vector<8x1xf32>
    %42 = arith.subf %41, %4 : vector<8x1xf32>
    %43 = arith.mulf %36, %36 : vector<8x1xf32>
    %44 = arith.mulf %38, %38 : vector<8x1xf32>
    %45 = arith.addf %43, %44 : vector<8x1xf32>
    %46 = math.sqrt %45 : vector<8x1xf32>
    %47 = arith.mulf %28, %28 : f32
    %48 = arith.mulf %30, %30 : f32
    %49 = arith.addf %47, %48 : f32
    %50 = math.sqrt %49 : f32
    %51 = vector.broadcast %28 : f32 to vector<8x1xf32>
    %52 = arith.mulf %36, %51 : vector<8x1xf32>
    %53 = vector.broadcast %30 : f32 to vector<8x1xf32>
    %54 = arith.mulf %38, %53 : vector<8x1xf32>
    %55 = arith.addf %52, %54 : vector<8x1xf32>
    %56 = vector.broadcast %50 : f32 to vector<8x1xf32>
    %57 = arith.mulf %46, %56 : vector<8x1xf32>
    %cst_21 = arith.constant 9.99999997E-7 : f32
    %58 = vector.broadcast %cst_21 : f32 to vector<8x1xf32>
    %59 = arith.addf %57, %58 : vector<8x1xf32>
    %60 = arith.divf %55, %59 : vector<8x1xf32>
    %61 = arith.mulf %36, %40 : vector<8x1xf32>
    %62 = arith.mulf %38, %42 : vector<8x1xf32>
    %63 = arith.addf %61, %62 : vector<8x1xf32>
    %cst_22 = arith.constant 0.000000e+00 : f32
    %64 = vector.broadcast %cst_22 : f32 to vector<8x1xf32>
    %65 = arith.subf %64, %63 : vector<8x1xf32>
    %66 = arith.mulf %40, %40 : vector<8x1xf32>
    %67 = arith.mulf %42, %42 : vector<8x1xf32>
    %68 = arith.addf %66, %67 : vector<8x1xf32>
    %cst_23 = arith.constant 9.99999997E-7 : f32
    %69 = vector.broadcast %cst_23 : f32 to vector<8x1xf32>
    %70 = arith.addf %68, %69 : vector<8x1xf32>
    %71 = arith.divf %65, %70 : vector<8x1xf32>
    %72 = arith.mulf %71, %40 : vector<8x1xf32>
    %73 = arith.addf %36, %72 : vector<8x1xf32>
    %74 = arith.mulf %71, %42 : vector<8x1xf32>
    %75 = arith.addf %38, %74 : vector<8x1xf32>
    %76 = arith.mulf %73, %73 : vector<8x1xf32>
    %77 = arith.mulf %75, %75 : vector<8x1xf32>
    %78 = arith.addf %76, %77 : vector<8x1xf32>
    %79 = math.sqrt %78 : vector<8x1xf32>
    %80 = vector.extract_strided_slice %7 {offsets = [0, 0], sizes = [1, 32], strides = [1, 1]} : vector<3x32xf32> to vector<1x32xf32>
    %81 = vector.broadcast %46 : vector<8x1xf32> to vector<8x32xf32>
    %82 = vector.broadcast %80 : vector<1x32xf32> to vector<8x32xf32>
    %83 = arith.mulf %81, %82 : vector<8x32xf32>
    %84 = vector.extract_strided_slice %7 {offsets = [1, 0], sizes = [1, 32], strides = [1, 1]} : vector<3x32xf32> to vector<1x32xf32>
    %85 = vector.broadcast %60 : vector<8x1xf32> to vector<8x32xf32>
    %86 = vector.broadcast %84 : vector<1x32xf32> to vector<8x32xf32>
    %87 = arith.mulf %85, %86 : vector<8x32xf32>
    %88 = arith.addf %83, %87 : vector<8x32xf32>
    %89 = vector.extract_strided_slice %7 {offsets = [2, 0], sizes = [1, 32], strides = [1, 1]} : vector<3x32xf32> to vector<1x32xf32>
    %90 = vector.broadcast %79 : vector<8x1xf32> to vector<8x32xf32>
    %91 = vector.broadcast %89 : vector<1x32xf32> to vector<8x32xf32>
    %92 = arith.mulf %90, %91 : vector<8x32xf32>
    %93 = arith.addf %88, %92 : vector<8x32xf32>
    %94 = vector.broadcast %8 : vector<1x32xf32> to vector<8x32xf32>
    %95 = arith.addf %93, %94 : vector<8x32xf32>
    %cst_24 = arith.constant 0.000000e+00 : f32
    %96 = vector.broadcast %cst_24 : f32 to vector<8x32xf32>
    %97 = arith.maximumf %95, %96 : vector<8x32xf32>
    %cst_25 = arith.constant dense<0.000000e+00> : vector<8x64xf32>
    %98 = tpu.matmul %97, %9, %cst_25 {dimension_numbers = #tpu.dot_dimension_numbers<[1], [0], [0], [1], [0, 0, 1, 1], [], []>} : vector<8x32xf32>, vector<32x64xf32>, vector<8x64xf32> -> vector<8x64xf32>
    %99 = vector.broadcast %10 : vector<1x64xf32> to vector<8x64xf32>
    %100 = arith.addf %98, %99 : vector<8x64xf32>
    %cst_26 = arith.constant 0.000000e+00 : f32
    %101 = vector.broadcast %cst_26 : f32 to vector<8x64xf32>
    %102 = arith.maximumf %100, %101 : vector<8x64xf32>
    %cst_27 = arith.constant dense<0.000000e+00> : vector<8x16xf32>
    %103 = tpu.matmul %102, %11, %cst_27 {dimension_numbers = #tpu.dot_dimension_numbers<[1], [0], [0], [1], [0, 0, 1, 1], [], []>} : vector<8x64xf32>, vector<64x16xf32>, vector<8x16xf32> -> vector<8x16xf32>
    %104 = vector.broadcast %12 : vector<1x16xf32> to vector<8x16xf32>
    %105 = arith.addf %103, %104 : vector<8x16xf32>
    %106 = arith.mulf %105, %17 : vector<8x16xf32>
    %cst_28 = arith.constant dense<0.000000e+00> : vector<8xf32>
    %107 = vector.multi_reduction <add>, %106, %cst_28 [1] : vector<8x16xf32> to vector<8xf32>
    %108 = vector.shape_cast %107 : vector<8xf32> to vector<8x1xf32>
    %109 = vector.broadcast %32 : f32 to vector<8x1xf32>
    %110 = arith.cmpf oeq, %5, %109 : vector<8x1xf32>
    %111 = vector.broadcast %22 : i32 to vector<8x1xi32>
    %112 = arith.cmpi eq, %18, %111 : vector<8x1xi32>
    %cst_29 = arith.constant -1.000000e+03 : f32
    %113 = vector.broadcast %cst_29 : f32 to vector<8x1xf32>
    %114 = arith.select %112, %113, %108 : vector<8x1xi1>, vector<8x1xf32>
    %cst_30 = arith.constant -1.000000e+30 : f32
    %115 = vector.broadcast %cst_30 : f32 to vector<8x1xf32>
    %116 = arith.select %110, %114, %115 : vector<8x1xi1>, vector<8x1xf32>
    %cst_31 = arith.constant dense<0xFF800000> : vector<1xf32>
    %117 = vector.multi_reduction <maximumf>, %116, %cst_31 [0] : vector<8x1xf32> to vector<1xf32>
    %118 = vector.shape_cast %117 : vector<1xf32> to vector<1x1xf32>
    %119 = vector.broadcast %118 : vector<1x1xf32> to vector<8x1xf32>
    %120 = arith.subf %116, %119 : vector<8x1xf32>
    %121 = math.exp %120 : vector<8x1xf32>
    %cst_32 = arith.constant dense<0.000000e+00> : vector<1xf32>
    %122 = vector.multi_reduction <add>, %121, %cst_32 [0] : vector<8x1xf32> to vector<1xf32>
    %123 = vector.shape_cast %122 : vector<1xf32> to vector<1x1xf32>
    %124 = tpu.reciprocal %123 : vector<1x1xf32> -> vector<1x1xf32>
    %125 = vector.broadcast %124 : vector<1x1xf32> to vector<8x1xf32>
    %126 = arith.mulf %121, %125 : vector<8x1xf32>
    %127 = vector.broadcast %126 : vector<8x1xf32> to vector<8x32xf32>
    %128 = arith.mulf %127, %6 : vector<8x32xf32>
    %cst_33 = arith.constant dense<0.000000e+00> : vector<32xf32>
    %129 = vector.multi_reduction <add>, %128, %cst_33 [0] : vector<8x32xf32> to vector<32xf32>
    %130 = vector.shape_cast %129 : vector<32xf32> to vector<1x32xf32>
    %131 = vector.broadcast %34 : f32 to vector<1x32xf32>
    %132 = arith.mulf %130, %131 : vector<1x32xf32>
    %133 = vector.broadcast %c0_i32 : i32 to vector<8x1xi32>
    %134 = arith.cmpi eq, %19, %133 : vector<8x1xi32>
    %135 = arith.extui %134 : vector<8x1xi1> to vector<8x1xi32>
    %136 = arith.sitofp %135 : vector<8x1xi32> to vector<8x1xf32>
    %137 = vector.broadcast %136 : vector<8x1xf32> to vector<8x32xf32>
    %138 = vector.broadcast %132 : vector<1x32xf32> to vector<8x32xf32>
    %139 = arith.mulf %137, %138 : vector<8x32xf32>
    %140 = arith.addf %20, %139 : vector<8x32xf32>
    %c1_i32 = arith.constant 1 : i32
    %c8_i32_34 = arith.constant 8 : i32
    %141 = arith.muli %arg0, %c8_i32_34 : i32
    %142 = arith.addi %141, %c1_i32 : i32
    %143 = arith.index_cast %142 : i32 to index
    %c0_35 = arith.constant 0 : index
    %144 = memref.load %arg1[%143, %c0_35] : memref<8x8xf32, #tpu.memory_space<smem>>
    %145 = arith.index_cast %142 : i32 to index
    %c1_36 = arith.constant 1 : index
    %146 = memref.load %arg1[%145, %c1_36] : memref<8x8xf32, #tpu.memory_space<smem>>
    %147 = arith.index_cast %142 : i32 to index
    %c2_37 = arith.constant 2 : index
    %148 = memref.load %arg1[%147, %c2_37] : memref<8x8xf32, #tpu.memory_space<smem>>
    %149 = arith.index_cast %142 : i32 to index
    %c3_38 = arith.constant 3 : index
    %150 = memref.load %arg1[%149, %c3_38] : memref<8x8xf32, #tpu.memory_space<smem>>
    %151 = arith.index_cast %142 : i32 to index
    %c4_39 = arith.constant 4 : index
    %152 = memref.load %arg1[%151, %c4_39] : memref<8x8xf32, #tpu.memory_space<smem>>
    %153 = arith.index_cast %142 : i32 to index
    %c5_40 = arith.constant 5 : index
    %154 = memref.load %arg1[%153, %c5_40] : memref<8x8xf32, #tpu.memory_space<smem>>
    %155 = vector.broadcast %144 : f32 to vector<8x1xf32>
    %156 = arith.subf %155, %1 : vector<8x1xf32>
    %157 = vector.broadcast %146 : f32 to vector<8x1xf32>
    %158 = arith.subf %157, %2 : vector<8x1xf32>
    %159 = vector.broadcast %148 : f32 to vector<8x1xf32>
    %160 = arith.subf %159, %3 : vector<8x1xf32>
    %161 = vector.broadcast %150 : f32 to vector<8x1xf32>
    %162 = arith.subf %161, %4 : vector<8x1xf32>
    %163 = arith.mulf %156, %156 : vector<8x1xf32>
    %164 = arith.mulf %158, %158 : vector<8x1xf32>
    %165 = arith.addf %163, %164 : vector<8x1xf32>
    %166 = math.sqrt %165 : vector<8x1xf32>
    %167 = arith.mulf %148, %148 : f32
    %168 = arith.mulf %150, %150 : f32
    %169 = arith.addf %167, %168 : f32
    %170 = math.sqrt %169 : f32
    %171 = vector.broadcast %148 : f32 to vector<8x1xf32>
    %172 = arith.mulf %156, %171 : vector<8x1xf32>
    %173 = vector.broadcast %150 : f32 to vector<8x1xf32>
    %174 = arith.mulf %158, %173 : vector<8x1xf32>
    %175 = arith.addf %172, %174 : vector<8x1xf32>
    %176 = vector.broadcast %170 : f32 to vector<8x1xf32>
    %177 = arith.mulf %166, %176 : vector<8x1xf32>
    %cst_41 = arith.constant 9.99999997E-7 : f32
    %178 = vector.broadcast %cst_41 : f32 to vector<8x1xf32>
    %179 = arith.addf %177, %178 : vector<8x1xf32>
    %180 = arith.divf %175, %179 : vector<8x1xf32>
    %181 = arith.mulf %156, %160 : vector<8x1xf32>
    %182 = arith.mulf %158, %162 : vector<8x1xf32>
    %183 = arith.addf %181, %182 : vector<8x1xf32>
    %cst_42 = arith.constant 0.000000e+00 : f32
    %184 = vector.broadcast %cst_42 : f32 to vector<8x1xf32>
    %185 = arith.subf %184, %183 : vector<8x1xf32>
    %186 = arith.mulf %160, %160 : vector<8x1xf32>
    %187 = arith.mulf %162, %162 : vector<8x1xf32>
    %188 = arith.addf %186, %187 : vector<8x1xf32>
    %cst_43 = arith.constant 9.99999997E-7 : f32
    %189 = vector.broadcast %cst_43 : f32 to vector<8x1xf32>
    %190 = arith.addf %188, %189 : vector<8x1xf32>
    %191 = arith.divf %185, %190 : vector<8x1xf32>
    %192 = arith.mulf %191, %160 : vector<8x1xf32>
    %193 = arith.addf %156, %192 : vector<8x1xf32>
    %194 = arith.mulf %191, %162 : vector<8x1xf32>
    %195 = arith.addf %158, %194 : vector<8x1xf32>
    %196 = arith.mulf %193, %193 : vector<8x1xf32>
    %197 = arith.mulf %195, %195 : vector<8x1xf32>
    %198 = arith.addf %196, %197 : vector<8x1xf32>
    %199 = math.sqrt %198 : vector<8x1xf32>
    %200 = vector.extract_strided_slice %7 {offsets = [0, 0], sizes = [1, 32], strides = [1, 1]} : vector<3x32xf32> to vector<1x32xf32>
    %201 = vector.broadcast %166 : vector<8x1xf32> to vector<8x32xf32>
    %202 = vector.broadcast %200 : vector<1x32xf32> to vector<8x32xf32>
    %203 = arith.mulf %201, %202 : vector<8x32xf32>
    %204 = vector.extract_strided_slice %7 {offsets = [1, 0], sizes = [1, 32], strides = [1, 1]} : vector<3x32xf32> to vector<1x32xf32>
    %205 = vector.broadcast %180 : vector<8x1xf32> to vector<8x32xf32>
    %206 = vector.broadcast %204 : vector<1x32xf32> to vector<8x32xf32>
    %207 = arith.mulf %205, %206 : vector<8x32xf32>
    %208 = arith.addf %203, %207 : vector<8x32xf32>
    %209 = vector.extract_strided_slice %7 {offsets = [2, 0], sizes = [1, 32], strides = [1, 1]} : vector<3x32xf32> to vector<1x32xf32>
    %210 = vector.broadcast %199 : vector<8x1xf32> to vector<8x32xf32>
    %211 = vector.broadcast %209 : vector<1x32xf32> to vector<8x32xf32>
    %212 = arith.mulf %210, %211 : vector<8x32xf32>
    %213 = arith.addf %208, %212 : vector<8x32xf32>
    %214 = vector.broadcast %8 : vector<1x32xf32> to vector<8x32xf32>
    %215 = arith.addf %213, %214 : vector<8x32xf32>
    %cst_44 = arith.constant 0.000000e+00 : f32
    %216 = vector.broadcast %cst_44 : f32 to vector<8x32xf32>
    %217 = arith.maximumf %215, %216 : vector<8x32xf32>
    %cst_45 = arith.constant dense<0.000000e+00> : vector<8x64xf32>
    %218 = tpu.matmul %217, %9, %cst_45 {dimension_numbers = #tpu.dot_dimension_numbers<[1], [0], [0], [1], [0, 0, 1, 1], [], []>} : vector<8x32xf32>, vector<32x64xf32>, vector<8x64xf32> -> vector<8x64xf32>
    %219 = vector.broadcast %10 : vector<1x64xf32> to vector<8x64xf32>
    %220 = arith.addf %218, %219 : vector<8x64xf32>
    %cst_46 = arith.constant 0.000000e+00 : f32
    %221 = vector.broadcast %cst_46 : f32 to vector<8x64xf32>
    %222 = arith.maximumf %220, %221 : vector<8x64xf32>
    %cst_47 = arith.constant dense<0.000000e+00> : vector<8x16xf32>
    %223 = tpu.matmul %222, %11, %cst_47 {dimension_numbers = #tpu.dot_dimension_numbers<[1], [0], [0], [1], [0, 0, 1, 1], [], []>} : vector<8x64xf32>, vector<64x16xf32>, vector<8x16xf32> -> vector<8x16xf32>
    %224 = vector.broadcast %12 : vector<1x16xf32> to vector<8x16xf32>
    %225 = arith.addf %223, %224 : vector<8x16xf32>
    %226 = arith.mulf %225, %17 : vector<8x16xf32>
    %cst_48 = arith.constant dense<0.000000e+00> : vector<8xf32>
    %227 = vector.multi_reduction <add>, %226, %cst_48 [1] : vector<8x16xf32> to vector<8xf32>
    %228 = vector.shape_cast %227 : vector<8xf32> to vector<8x1xf32>
    %229 = vector.broadcast %152 : f32 to vector<8x1xf32>
    %230 = arith.cmpf oeq, %5, %229 : vector<8x1xf32>
    %231 = vector.broadcast %142 : i32 to vector<8x1xi32>
    %232 = arith.cmpi eq, %18, %231 : vector<8x1xi32>
    %cst_49 = arith.constant -1.000000e+03 : f32
    %233 = vector.broadcast %cst_49 : f32 to vector<8x1xf32>
    %234 = arith.select %232, %233, %228 : vector<8x1xi1>, vector<8x1xf32>
    %cst_50 = arith.constant -1.000000e+30 : f32
    %235 = vector.broadcast %cst_50 : f32 to vector<8x1xf32>
    %236 = arith.select %230, %234, %235 : vector<8x1xi1>, vector<8x1xf32>
    %cst_51 = arith.constant dense<0xFF800000> : vector<1xf32>
    %237 = vector.multi_reduction <maximumf>, %236, %cst_51 [0] : vector<8x1xf32> to vector<1xf32>
    %238 = vector.shape_cast %237 : vector<1xf32> to vector<1x1xf32>
    %239 = vector.broadcast %238 : vector<1x1xf32> to vector<8x1xf32>
    %240 = arith.subf %236, %239 : vector<8x1xf32>
    %241 = math.exp %240 : vector<8x1xf32>
    %cst_52 = arith.constant dense<0.000000e+00> : vector<1xf32>
    %242 = vector.multi_reduction <add>, %241, %cst_52 [0] : vector<8x1xf32> to vector<1xf32>
    %243 = vector.shape_cast %242 : vector<1xf32> to vector<1x1xf32>
    %244 = tpu.reciprocal %243 : vector<1x1xf32> -> vector<1x1xf32>
    %245 = vector.broadcast %244 : vector<1x1xf32> to vector<8x1xf32>
    %246 = arith.mulf %241, %245 : vector<8x1xf32>
    %247 = vector.broadcast %246 : vector<8x1xf32> to vector<8x32xf32>
    %248 = arith.mulf %247, %6 : vector<8x32xf32>
    %cst_53 = arith.constant dense<0.000000e+00> : vector<32xf32>
    %249 = vector.multi_reduction <add>, %248, %cst_53 [0] : vector<8x32xf32> to vector<32xf32>
    %250 = vector.shape_cast %249 : vector<32xf32> to vector<1x32xf32>
    %251 = vector.broadcast %154 : f32 to vector<1x32xf32>
    %252 = arith.mulf %250, %251 : vector<1x32xf32>
    %253 = vector.broadcast %c1_i32 : i32 to vector<8x1xi32>
    %254 = arith.cmpi eq, %19, %253 : vector<8x1xi32>
    %255 = arith.extui %254 : vector<8x1xi1> to vector<8x1xi32>
    %256 = arith.sitofp %255 : vector<8x1xi32> to vector<8x1xf32>
    %257 = vector.broadcast %256 : vector<8x1xf32> to vector<8x32xf32>
    %258 = vector.broadcast %252 : vector<1x32xf32> to vector<8x32xf32>
    %259 = arith.mulf %257, %258 : vector<8x32xf32>
    %260 = arith.addf %140, %259 : vector<8x32xf32>
    %c2_i32 = arith.constant 2 : i32
    %c8_i32_54 = arith.constant 8 : i32
    %261 = arith.muli %arg0, %c8_i32_54 : i32
    %262 = arith.addi %261, %c2_i32 : i32
    %263 = arith.index_cast %262 : i32 to index
    %c0_55 = arith.constant 0 : index
    %264 = memref.load %arg1[%263, %c0_55] : memref<8x8xf32, #tpu.memory_space<smem>>
    %265 = arith.index_cast %262 : i32 to index
    %c1_56 = arith.constant 1 : index
    %266 = memref.load %arg1[%265, %c1_56] : memref<8x8xf32, #tpu.memory_space<smem>>
    %267 = arith.index_cast %262 : i32 to index
    %c2_57 = arith.constant 2 : index
    %268 = memref.load %arg1[%267, %c2_57] : memref<8x8xf32, #tpu.memory_space<smem>>
    %269 = arith.index_cast %262 : i32 to index
    %c3_58 = arith.constant 3 : index
    %270 = memref.load %arg1[%269, %c3_58] : memref<8x8xf32, #tpu.memory_space<smem>>
    %271 = arith.index_cast %262 : i32 to index
    %c4_59 = arith.constant 4 : index
    %272 = memref.load %arg1[%271, %c4_59] : memref<8x8xf32, #tpu.memory_space<smem>>
    %273 = arith.index_cast %262 : i32 to index
    %c5_60 = arith.constant 5 : index
    %274 = memref.load %arg1[%273, %c5_60] : memref<8x8xf32, #tpu.memory_space<smem>>
    %275 = vector.broadcast %264 : f32 to vector<8x1xf32>
    %276 = arith.subf %275, %1 : vector<8x1xf32>
    %277 = vector.broadcast %266 : f32 to vector<8x1xf32>
    %278 = arith.subf %277, %2 : vector<8x1xf32>
    %279 = vector.broadcast %268 : f32 to vector<8x1xf32>
    %280 = arith.subf %279, %3 : vector<8x1xf32>
    %281 = vector.broadcast %270 : f32 to vector<8x1xf32>
    %282 = arith.subf %281, %4 : vector<8x1xf32>
    %283 = arith.mulf %276, %276 : vector<8x1xf32>
    %284 = arith.mulf %278, %278 : vector<8x1xf32>
    %285 = arith.addf %283, %284 : vector<8x1xf32>
    %286 = math.sqrt %285 : vector<8x1xf32>
    %287 = arith.mulf %268, %268 : f32
    %288 = arith.mulf %270, %270 : f32
    %289 = arith.addf %287, %288 : f32
    %290 = math.sqrt %289 : f32
    %291 = vector.broadcast %268 : f32 to vector<8x1xf32>
    %292 = arith.mulf %276, %291 : vector<8x1xf32>
    %293 = vector.broadcast %270 : f32 to vector<8x1xf32>
    %294 = arith.mulf %278, %293 : vector<8x1xf32>
    %295 = arith.addf %292, %294 : vector<8x1xf32>
    %296 = vector.broadcast %290 : f32 to vector<8x1xf32>
    %297 = arith.mulf %286, %296 : vector<8x1xf32>
    %cst_61 = arith.constant 9.99999997E-7 : f32
    %298 = vector.broadcast %cst_61 : f32 to vector<8x1xf32>
    %299 = arith.addf %297, %298 : vector<8x1xf32>
    %300 = arith.divf %295, %299 : vector<8x1xf32>
    %301 = arith.mulf %276, %280 : vector<8x1xf32>
    %302 = arith.mulf %278, %282 : vector<8x1xf32>
    %303 = arith.addf %301, %302 : vector<8x1xf32>
    %cst_62 = arith.constant 0.000000e+00 : f32
    %304 = vector.broadcast %cst_62 : f32 to vector<8x1xf32>
    %305 = arith.subf %304, %303 : vector<8x1xf32>
    %306 = arith.mulf %280, %280 : vector<8x1xf32>
    %307 = arith.mulf %282, %282 : vector<8x1xf32>
    %308 = arith.addf %306, %307 : vector<8x1xf32>
    %cst_63 = arith.constant 9.99999997E-7 : f32
    %309 = vector.broadcast %cst_63 : f32 to vector<8x1xf32>
    %310 = arith.addf %308, %309 : vector<8x1xf32>
    %311 = arith.divf %305, %310 : vector<8x1xf32>
    %312 = arith.mulf %311, %280 : vector<8x1xf32>
    %313 = arith.addf %276, %312 : vector<8x1xf32>
    %314 = arith.mulf %311, %282 : vector<8x1xf32>
    %315 = arith.addf %278, %314 : vector<8x1xf32>
    %316 = arith.mulf %313, %313 : vector<8x1xf32>
    %317 = arith.mulf %315, %315 : vector<8x1xf32>
    %318 = arith.addf %316, %317 : vector<8x1xf32>
    %319 = math.sqrt %318 : vector<8x1xf32>
    %320 = vector.extract_strided_slice %7 {offsets = [0, 0], sizes = [1, 32], strides = [1, 1]} : vector<3x32xf32> to vector<1x32xf32>
    %321 = vector.broadcast %286 : vector<8x1xf32> to vector<8x32xf32>
    %322 = vector.broadcast %320 : vector<1x32xf32> to vector<8x32xf32>
    %323 = arith.mulf %321, %322 : vector<8x32xf32>
    %324 = vector.extract_strided_slice %7 {offsets = [1, 0], sizes = [1, 32], strides = [1, 1]} : vector<3x32xf32> to vector<1x32xf32>
    %325 = vector.broadcast %300 : vector<8x1xf32> to vector<8x32xf32>
    %326 = vector.broadcast %324 : vector<1x32xf32> to vector<8x32xf32>
    %327 = arith.mulf %325, %326 : vector<8x32xf32>
    %328 = arith.addf %323, %327 : vector<8x32xf32>
    %329 = vector.extract_strided_slice %7 {offsets = [2, 0], sizes = [1, 32], strides = [1, 1]} : vector<3x32xf32> to vector<1x32xf32>
    %330 = vector.broadcast %319 : vector<8x1xf32> to vector<8x32xf32>
    %331 = vector.broadcast %329 : vector<1x32xf32> to vector<8x32xf32>
    %332 = arith.mulf %330, %331 : vector<8x32xf32>
    %333 = arith.addf %328, %332 : vector<8x32xf32>
    %334 = vector.broadcast %8 : vector<1x32xf32> to vector<8x32xf32>
    %335 = arith.addf %333, %334 : vector<8x32xf32>
    %cst_64 = arith.constant 0.000000e+00 : f32
    %336 = vector.broadcast %cst_64 : f32 to vector<8x32xf32>
    %337 = arith.maximumf %335, %336 : vector<8x32xf32>
    %cst_65 = arith.constant dense<0.000000e+00> : vector<8x64xf32>
    %338 = tpu.matmul %337, %9, %cst_65 {dimension_numbers = #tpu.dot_dimension_numbers<[1], [0], [0], [1], [0, 0, 1, 1], [], []>} : vector<8x32xf32>, vector<32x64xf32>, vector<8x64xf32> -> vector<8x64xf32>
    %339 = vector.broadcast %10 : vector<1x64xf32> to vector<8x64xf32>
    %340 = arith.addf %338, %339 : vector<8x64xf32>
    %cst_66 = arith.constant 0.000000e+00 : f32
    %341 = vector.broadcast %cst_66 : f32 to vector<8x64xf32>
    %342 = arith.maximumf %340, %341 : vector<8x64xf32>
    %cst_67 = arith.constant dense<0.000000e+00> : vector<8x16xf32>
    %343 = tpu.matmul %342, %11, %cst_67 {dimension_numbers = #tpu.dot_dimension_numbers<[1], [0], [0], [1], [0, 0, 1, 1], [], []>} : vector<8x64xf32>, vector<64x16xf32>, vector<8x16xf32> -> vector<8x16xf32>
    %344 = vector.broadcast %12 : vector<1x16xf32> to vector<8x16xf32>
    %345 = arith.addf %343, %344 : vector<8x16xf32>
    %346 = arith.mulf %345, %17 : vector<8x16xf32>
    %cst_68 = arith.constant dense<0.000000e+00> : vector<8xf32>
    %347 = vector.multi_reduction <add>, %346, %cst_68 [1] : vector<8x16xf32> to vector<8xf32>
    %348 = vector.shape_cast %347 : vector<8xf32> to vector<8x1xf32>
    %349 = vector.broadcast %272 : f32 to vector<8x1xf32>
    %350 = arith.cmpf oeq, %5, %349 : vector<8x1xf32>
    %351 = vector.broadcast %262 : i32 to vector<8x1xi32>
    %352 = arith.cmpi eq, %18, %351 : vector<8x1xi32>
    %cst_69 = arith.constant -1.000000e+03 : f32
    %353 = vector.broadcast %cst_69 : f32 to vector<8x1xf32>
    %354 = arith.select %352, %353, %348 : vector<8x1xi1>, vector<8x1xf32>
    %cst_70 = arith.constant -1.000000e+30 : f32
    %355 = vector.broadcast %cst_70 : f32 to vector<8x1xf32>
    %356 = arith.select %350, %354, %355 : vector<8x1xi1>, vector<8x1xf32>
    %cst_71 = arith.constant dense<0xFF800000> : vector<1xf32>
    %357 = vector.multi_reduction <maximumf>, %356, %cst_71 [0] : vector<8x1xf32> to vector<1xf32>
    %358 = vector.shape_cast %357 : vector<1xf32> to vector<1x1xf32>
    %359 = vector.broadcast %358 : vector<1x1xf32> to vector<8x1xf32>
    %360 = arith.subf %356, %359 : vector<8x1xf32>
    %361 = math.exp %360 : vector<8x1xf32>
    %cst_72 = arith.constant dense<0.000000e+00> : vector<1xf32>
    %362 = vector.multi_reduction <add>, %361, %cst_72 [0] : vector<8x1xf32> to vector<1xf32>
    %363 = vector.shape_cast %362 : vector<1xf32> to vector<1x1xf32>
    %364 = tpu.reciprocal %363 : vector<1x1xf32> -> vector<1x1xf32>
    %365 = vector.broadcast %364 : vector<1x1xf32> to vector<8x1xf32>
    %366 = arith.mulf %361, %365 : vector<8x1xf32>
    %367 = vector.broadcast %366 : vector<8x1xf32> to vector<8x32xf32>
    %368 = arith.mulf %367, %6 : vector<8x32xf32>
    %cst_73 = arith.constant dense<0.000000e+00> : vector<32xf32>
    %369 = vector.multi_reduction <add>, %368, %cst_73 [0] : vector<8x32xf32> to vector<32xf32>
    %370 = vector.shape_cast %369 : vector<32xf32> to vector<1x32xf32>
    %371 = vector.broadcast %274 : f32 to vector<1x32xf32>
    %372 = arith.mulf %370, %371 : vector<1x32xf32>
    %373 = vector.broadcast %c2_i32 : i32 to vector<8x1xi32>
    %374 = arith.cmpi eq, %19, %373 : vector<8x1xi32>
    %375 = arith.extui %374 : vector<8x1xi1> to vector<8x1xi32>
    %376 = arith.sitofp %375 : vector<8x1xi32> to vector<8x1xf32>
    %377 = vector.broadcast %376 : vector<8x1xf32> to vector<8x32xf32>
    %378 = vector.broadcast %372 : vector<1x32xf32> to vector<8x32xf32>
    %379 = arith.mulf %377, %378 : vector<8x32xf32>
    %380 = arith.addf %260, %379 : vector<8x32xf32>
    %c3_i32 = arith.constant 3 : i32
    %c8_i32_74 = arith.constant 8 : i32
    %381 = arith.muli %arg0, %c8_i32_74 : i32
    %382 = arith.addi %381, %c3_i32 : i32
    %383 = arith.index_cast %382 : i32 to index
    %c0_75 = arith.constant 0 : index
    %384 = memref.load %arg1[%383, %c0_75] : memref<8x8xf32, #tpu.memory_space<smem>>
    %385 = arith.index_cast %382 : i32 to index
    %c1_76 = arith.constant 1 : index
    %386 = memref.load %arg1[%385, %c1_76] : memref<8x8xf32, #tpu.memory_space<smem>>
    %387 = arith.index_cast %382 : i32 to index
    %c2_77 = arith.constant 2 : index
    %388 = memref.load %arg1[%387, %c2_77] : memref<8x8xf32, #tpu.memory_space<smem>>
    %389 = arith.index_cast %382 : i32 to index
    %c3_78 = arith.constant 3 : index
    %390 = memref.load %arg1[%389, %c3_78] : memref<8x8xf32, #tpu.memory_space<smem>>
    %391 = arith.index_cast %382 : i32 to index
    %c4_79 = arith.constant 4 : index
    %392 = memref.load %arg1[%391, %c4_79] : memref<8x8xf32, #tpu.memory_space<smem>>
    %393 = arith.index_cast %382 : i32 to index
    %c5_80 = arith.constant 5 : index
    %394 = memref.load %arg1[%393, %c5_80] : memref<8x8xf32, #tpu.memory_space<smem>>
    %395 = vector.broadcast %384 : f32 to vector<8x1xf32>
    %396 = arith.subf %395, %1 : vector<8x1xf32>
    %397 = vector.broadcast %386 : f32 to vector<8x1xf32>
    %398 = arith.subf %397, %2 : vector<8x1xf32>
    %399 = vector.broadcast %388 : f32 to vector<8x1xf32>
    %400 = arith.subf %399, %3 : vector<8x1xf32>
    %401 = vector.broadcast %390 : f32 to vector<8x1xf32>
    %402 = arith.subf %401, %4 : vector<8x1xf32>
    %403 = arith.mulf %396, %396 : vector<8x1xf32>
    %404 = arith.mulf %398, %398 : vector<8x1xf32>
    %405 = arith.addf %403, %404 : vector<8x1xf32>
    %406 = math.sqrt %405 : vector<8x1xf32>
    %407 = arith.mulf %388, %388 : f32
    %408 = arith.mulf %390, %390 : f32
    %409 = arith.addf %407, %408 : f32
    %410 = math.sqrt %409 : f32
    %411 = vector.broadcast %388 : f32 to vector<8x1xf32>
    %412 = arith.mulf %396, %411 : vector<8x1xf32>
    %413 = vector.broadcast %390 : f32 to vector<8x1xf32>
    %414 = arith.mulf %398, %413 : vector<8x1xf32>
    %415 = arith.addf %412, %414 : vector<8x1xf32>
    %416 = vector.broadcast %410 : f32 to vector<8x1xf32>
    %417 = arith.mulf %406, %416 : vector<8x1xf32>
    %cst_81 = arith.constant 9.99999997E-7 : f32
    %418 = vector.broadcast %cst_81 : f32 to vector<8x1xf32>
    %419 = arith.addf %417, %418 : vector<8x1xf32>
    %420 = arith.divf %415, %419 : vector<8x1xf32>
    %421 = arith.mulf %396, %400 : vector<8x1xf32>
    %422 = arith.mulf %398, %402 : vector<8x1xf32>
    %423 = arith.addf %421, %422 : vector<8x1xf32>
    %cst_82 = arith.constant 0.000000e+00 : f32
    %424 = vector.broadcast %cst_82 : f32 to vector<8x1xf32>
    %425 = arith.subf %424, %423 : vector<8x1xf32>
    %426 = arith.mulf %400, %400 : vector<8x1xf32>
    %427 = arith.mulf %402, %402 : vector<8x1xf32>
    %428 = arith.addf %426, %427 : vector<8x1xf32>
    %cst_83 = arith.constant 9.99999997E-7 : f32
    %429 = vector.broadcast %cst_83 : f32 to vector<8x1xf32>
    %430 = arith.addf %428, %429 : vector<8x1xf32>
    %431 = arith.divf %425, %430 : vector<8x1xf32>
    %432 = arith.mulf %431, %400 : vector<8x1xf32>
    %433 = arith.addf %396, %432 : vector<8x1xf32>
    %434 = arith.mulf %431, %402 : vector<8x1xf32>
    %435 = arith.addf %398, %434 : vector<8x1xf32>
    %436 = arith.mulf %433, %433 : vector<8x1xf32>
    %437 = arith.mulf %435, %435 : vector<8x1xf32>
    %438 = arith.addf %436, %437 : vector<8x1xf32>
    %439 = math.sqrt %438 : vector<8x1xf32>
    %440 = vector.extract_strided_slice %7 {offsets = [0, 0], sizes = [1, 32], strides = [1, 1]} : vector<3x32xf32> to vector<1x32xf32>
    %441 = vector.broadcast %406 : vector<8x1xf32> to vector<8x32xf32>
    %442 = vector.broadcast %440 : vector<1x32xf32> to vector<8x32xf32>
    %443 = arith.mulf %441, %442 : vector<8x32xf32>
    %444 = vector.extract_strided_slice %7 {offsets = [1, 0], sizes = [1, 32], strides = [1, 1]} : vector<3x32xf32> to vector<1x32xf32>
    %445 = vector.broadcast %420 : vector<8x1xf32> to vector<8x32xf32>
    %446 = vector.broadcast %444 : vector<1x32xf32> to vector<8x32xf32>
    %447 = arith.mulf %445, %446 : vector<8x32xf32>
    %448 = arith.addf %443, %447 : vector<8x32xf32>
    %449 = vector.extract_strided_slice %7 {offsets = [2, 0], sizes = [1, 32], strides = [1, 1]} : vector<3x32xf32> to vector<1x32xf32>
    %450 = vector.broadcast %439 : vector<8x1xf32> to vector<8x32xf32>
    %451 = vector.broadcast %449 : vector<1x32xf32> to vector<8x32xf32>
    %452 = arith.mulf %450, %451 : vector<8x32xf32>
    %453 = arith.addf %448, %452 : vector<8x32xf32>
    %454 = vector.broadcast %8 : vector<1x32xf32> to vector<8x32xf32>
    %455 = arith.addf %453, %454 : vector<8x32xf32>
    %cst_84 = arith.constant 0.000000e+00 : f32
    %456 = vector.broadcast %cst_84 : f32 to vector<8x32xf32>
    %457 = arith.maximumf %455, %456 : vector<8x32xf32>
    %cst_85 = arith.constant dense<0.000000e+00> : vector<8x64xf32>
    %458 = tpu.matmul %457, %9, %cst_85 {dimension_numbers = #tpu.dot_dimension_numbers<[1], [0], [0], [1], [0, 0, 1, 1], [], []>} : vector<8x32xf32>, vector<32x64xf32>, vector<8x64xf32> -> vector<8x64xf32>
    %459 = vector.broadcast %10 : vector<1x64xf32> to vector<8x64xf32>
    %460 = arith.addf %458, %459 : vector<8x64xf32>
    %cst_86 = arith.constant 0.000000e+00 : f32
    %461 = vector.broadcast %cst_86 : f32 to vector<8x64xf32>
    %462 = arith.maximumf %460, %461 : vector<8x64xf32>
    %cst_87 = arith.constant dense<0.000000e+00> : vector<8x16xf32>
    %463 = tpu.matmul %462, %11, %cst_87 {dimension_numbers = #tpu.dot_dimension_numbers<[1], [0], [0], [1], [0, 0, 1, 1], [], []>} : vector<8x64xf32>, vector<64x16xf32>, vector<8x16xf32> -> vector<8x16xf32>
    %464 = vector.broadcast %12 : vector<1x16xf32> to vector<8x16xf32>
    %465 = arith.addf %463, %464 : vector<8x16xf32>
    %466 = arith.mulf %465, %17 : vector<8x16xf32>
    %cst_88 = arith.constant dense<0.000000e+00> : vector<8xf32>
    %467 = vector.multi_reduction <add>, %466, %cst_88 [1] : vector<8x16xf32> to vector<8xf32>
    %468 = vector.shape_cast %467 : vector<8xf32> to vector<8x1xf32>
    %469 = vector.broadcast %392 : f32 to vector<8x1xf32>
    %470 = arith.cmpf oeq, %5, %469 : vector<8x1xf32>
    %471 = vector.broadcast %382 : i32 to vector<8x1xi32>
    %472 = arith.cmpi eq, %18, %471 : vector<8x1xi32>
    %cst_89 = arith.constant -1.000000e+03 : f32
    %473 = vector.broadcast %cst_89 : f32 to vector<8x1xf32>
    %474 = arith.select %472, %473, %468 : vector<8x1xi1>, vector<8x1xf32>
    %cst_90 = arith.constant -1.000000e+30 : f32
    %475 = vector.broadcast %cst_90 : f32 to vector<8x1xf32>
    %476 = arith.select %470, %474, %475 : vector<8x1xi1>, vector<8x1xf32>
    %cst_91 = arith.constant dense<0xFF800000> : vector<1xf32>
    %477 = vector.multi_reduction <maximumf>, %476, %cst_91 [0] : vector<8x1xf32> to vector<1xf32>
    %478 = vector.shape_cast %477 : vector<1xf32> to vector<1x1xf32>
    %479 = vector.broadcast %478 : vector<1x1xf32> to vector<8x1xf32>
    %480 = arith.subf %476, %479 : vector<8x1xf32>
    %481 = math.exp %480 : vector<8x1xf32>
    %cst_92 = arith.constant dense<0.000000e+00> : vector<1xf32>
    %482 = vector.multi_reduction <add>, %481, %cst_92 [0] : vector<8x1xf32> to vector<1xf32>
    %483 = vector.shape_cast %482 : vector<1xf32> to vector<1x1xf32>
    %484 = tpu.reciprocal %483 : vector<1x1xf32> -> vector<1x1xf32>
    %485 = vector.broadcast %484 : vector<1x1xf32> to vector<8x1xf32>
    %486 = arith.mulf %481, %485 : vector<8x1xf32>
    %487 = vector.broadcast %486 : vector<8x1xf32> to vector<8x32xf32>
    %488 = arith.mulf %487, %6 : vector<8x32xf32>
    %cst_93 = arith.constant dense<0.000000e+00> : vector<32xf32>
    %489 = vector.multi_reduction <add>, %488, %cst_93 [0] : vector<8x32xf32> to vector<32xf32>
    %490 = vector.shape_cast %489 : vector<32xf32> to vector<1x32xf32>
    %491 = vector.broadcast %394 : f32 to vector<1x32xf32>
    %492 = arith.mulf %490, %491 : vector<1x32xf32>
    %493 = vector.broadcast %c3_i32 : i32 to vector<8x1xi32>
    %494 = arith.cmpi eq, %19, %493 : vector<8x1xi32>
    %495 = arith.extui %494 : vector<8x1xi1> to vector<8x1xi32>
    %496 = arith.sitofp %495 : vector<8x1xi32> to vector<8x1xf32>
    %497 = vector.broadcast %496 : vector<8x1xf32> to vector<8x32xf32>
    %498 = vector.broadcast %492 : vector<1x32xf32> to vector<8x32xf32>
    %499 = arith.mulf %497, %498 : vector<8x32xf32>
    %500 = arith.addf %380, %499 : vector<8x32xf32>
    %c4_i32 = arith.constant 4 : i32
    %c8_i32_94 = arith.constant 8 : i32
    %501 = arith.muli %arg0, %c8_i32_94 : i32
    %502 = arith.addi %501, %c4_i32 : i32
    %503 = arith.index_cast %502 : i32 to index
    %c0_95 = arith.constant 0 : index
    %504 = memref.load %arg1[%503, %c0_95] : memref<8x8xf32, #tpu.memory_space<smem>>
    %505 = arith.index_cast %502 : i32 to index
    %c1_96 = arith.constant 1 : index
    %506 = memref.load %arg1[%505, %c1_96] : memref<8x8xf32, #tpu.memory_space<smem>>
    %507 = arith.index_cast %502 : i32 to index
    %c2_97 = arith.constant 2 : index
    %508 = memref.load %arg1[%507, %c2_97] : memref<8x8xf32, #tpu.memory_space<smem>>
    %509 = arith.index_cast %502 : i32 to index
    %c3_98 = arith.constant 3 : index
    %510 = memref.load %arg1[%509, %c3_98] : memref<8x8xf32, #tpu.memory_space<smem>>
    %511 = arith.index_cast %502 : i32 to index
    %c4_99 = arith.constant 4 : index
    %512 = memref.load %arg1[%511, %c4_99] : memref<8x8xf32, #tpu.memory_space<smem>>
    %513 = arith.index_cast %502 : i32 to index
    %c5_100 = arith.constant 5 : index
    %514 = memref.load %arg1[%513, %c5_100] : memref<8x8xf32, #tpu.memory_space<smem>>
    %515 = vector.broadcast %504 : f32 to vector<8x1xf32>
    %516 = arith.subf %515, %1 : vector<8x1xf32>
    %517 = vector.broadcast %506 : f32 to vector<8x1xf32>
    %518 = arith.subf %517, %2 : vector<8x1xf32>
    %519 = vector.broadcast %508 : f32 to vector<8x1xf32>
    %520 = arith.subf %519, %3 : vector<8x1xf32>
    %521 = vector.broadcast %510 : f32 to vector<8x1xf32>
    %522 = arith.subf %521, %4 : vector<8x1xf32>
    %523 = arith.mulf %516, %516 : vector<8x1xf32>
    %524 = arith.mulf %518, %518 : vector<8x1xf32>
    %525 = arith.addf %523, %524 : vector<8x1xf32>
    %526 = math.sqrt %525 : vector<8x1xf32>
    %527 = arith.mulf %508, %508 : f32
    %528 = arith.mulf %510, %510 : f32
    %529 = arith.addf %527, %528 : f32
    %530 = math.sqrt %529 : f32
    %531 = vector.broadcast %508 : f32 to vector<8x1xf32>
    %532 = arith.mulf %516, %531 : vector<8x1xf32>
    %533 = vector.broadcast %510 : f32 to vector<8x1xf32>
    %534 = arith.mulf %518, %533 : vector<8x1xf32>
    %535 = arith.addf %532, %534 : vector<8x1xf32>
    %536 = vector.broadcast %530 : f32 to vector<8x1xf32>
    %537 = arith.mulf %526, %536 : vector<8x1xf32>
    %cst_101 = arith.constant 9.99999997E-7 : f32
    %538 = vector.broadcast %cst_101 : f32 to vector<8x1xf32>
    %539 = arith.addf %537, %538 : vector<8x1xf32>
    %540 = arith.divf %535, %539 : vector<8x1xf32>
    %541 = arith.mulf %516, %520 : vector<8x1xf32>
    %542 = arith.mulf %518, %522 : vector<8x1xf32>
    %543 = arith.addf %541, %542 : vector<8x1xf32>
    %cst_102 = arith.constant 0.000000e+00 : f32
    %544 = vector.broadcast %cst_102 : f32 to vector<8x1xf32>
    %545 = arith.subf %544, %543 : vector<8x1xf32>
    %546 = arith.mulf %520, %520 : vector<8x1xf32>
    %547 = arith.mulf %522, %522 : vector<8x1xf32>
    %548 = arith.addf %546, %547 : vector<8x1xf32>
    %cst_103 = arith.constant 9.99999997E-7 : f32
    %549 = vector.broadcast %cst_103 : f32 to vector<8x1xf32>
    %550 = arith.addf %548, %549 : vector<8x1xf32>
    %551 = arith.divf %545, %550 : vector<8x1xf32>
    %552 = arith.mulf %551, %520 : vector<8x1xf32>
    %553 = arith.addf %516, %552 : vector<8x1xf32>
    %554 = arith.mulf %551, %522 : vector<8x1xf32>
    %555 = arith.addf %518, %554 : vector<8x1xf32>
    %556 = arith.mulf %553, %553 : vector<8x1xf32>
    %557 = arith.mulf %555, %555 : vector<8x1xf32>
    %558 = arith.addf %556, %557 : vector<8x1xf32>
    %559 = math.sqrt %558 : vector<8x1xf32>
    %560 = vector.extract_strided_slice %7 {offsets = [0, 0], sizes = [1, 32], strides = [1, 1]} : vector<3x32xf32> to vector<1x32xf32>
    %561 = vector.broadcast %526 : vector<8x1xf32> to vector<8x32xf32>
    %562 = vector.broadcast %560 : vector<1x32xf32> to vector<8x32xf32>
    %563 = arith.mulf %561, %562 : vector<8x32xf32>
    %564 = vector.extract_strided_slice %7 {offsets = [1, 0], sizes = [1, 32], strides = [1, 1]} : vector<3x32xf32> to vector<1x32xf32>
    %565 = vector.broadcast %540 : vector<8x1xf32> to vector<8x32xf32>
    %566 = vector.broadcast %564 : vector<1x32xf32> to vector<8x32xf32>
    %567 = arith.mulf %565, %566 : vector<8x32xf32>
    %568 = arith.addf %563, %567 : vector<8x32xf32>
    %569 = vector.extract_strided_slice %7 {offsets = [2, 0], sizes = [1, 32], strides = [1, 1]} : vector<3x32xf32> to vector<1x32xf32>
    %570 = vector.broadcast %559 : vector<8x1xf32> to vector<8x32xf32>
    %571 = vector.broadcast %569 : vector<1x32xf32> to vector<8x32xf32>
    %572 = arith.mulf %570, %571 : vector<8x32xf32>
    %573 = arith.addf %568, %572 : vector<8x32xf32>
    %574 = vector.broadcast %8 : vector<1x32xf32> to vector<8x32xf32>
    %575 = arith.addf %573, %574 : vector<8x32xf32>
    %cst_104 = arith.constant 0.000000e+00 : f32
    %576 = vector.broadcast %cst_104 : f32 to vector<8x32xf32>
    %577 = arith.maximumf %575, %576 : vector<8x32xf32>
    %cst_105 = arith.constant dense<0.000000e+00> : vector<8x64xf32>
    %578 = tpu.matmul %577, %9, %cst_105 {dimension_numbers = #tpu.dot_dimension_numbers<[1], [0], [0], [1], [0, 0, 1, 1], [], []>} : vector<8x32xf32>, vector<32x64xf32>, vector<8x64xf32> -> vector<8x64xf32>
    %579 = vector.broadcast %10 : vector<1x64xf32> to vector<8x64xf32>
    %580 = arith.addf %578, %579 : vector<8x64xf32>
    %cst_106 = arith.constant 0.000000e+00 : f32
    %581 = vector.broadcast %cst_106 : f32 to vector<8x64xf32>
    %582 = arith.maximumf %580, %581 : vector<8x64xf32>
    %cst_107 = arith.constant dense<0.000000e+00> : vector<8x16xf32>
    %583 = tpu.matmul %582, %11, %cst_107 {dimension_numbers = #tpu.dot_dimension_numbers<[1], [0], [0], [1], [0, 0, 1, 1], [], []>} : vector<8x64xf32>, vector<64x16xf32>, vector<8x16xf32> -> vector<8x16xf32>
    %584 = vector.broadcast %12 : vector<1x16xf32> to vector<8x16xf32>
    %585 = arith.addf %583, %584 : vector<8x16xf32>
    %586 = arith.mulf %585, %17 : vector<8x16xf32>
    %cst_108 = arith.constant dense<0.000000e+00> : vector<8xf32>
    %587 = vector.multi_reduction <add>, %586, %cst_108 [1] : vector<8x16xf32> to vector<8xf32>
    %588 = vector.shape_cast %587 : vector<8xf32> to vector<8x1xf32>
    %589 = vector.broadcast %512 : f32 to vector<8x1xf32>
    %590 = arith.cmpf oeq, %5, %589 : vector<8x1xf32>
    %591 = vector.broadcast %502 : i32 to vector<8x1xi32>
    %592 = arith.cmpi eq, %18, %591 : vector<8x1xi32>
    %cst_109 = arith.constant -1.000000e+03 : f32
    %593 = vector.broadcast %cst_109 : f32 to vector<8x1xf32>
    %594 = arith.select %592, %593, %588 : vector<8x1xi1>, vector<8x1xf32>
    %cst_110 = arith.constant -1.000000e+30 : f32
    %595 = vector.broadcast %cst_110 : f32 to vector<8x1xf32>
    %596 = arith.select %590, %594, %595 : vector<8x1xi1>, vector<8x1xf32>
    %cst_111 = arith.constant dense<0xFF800000> : vector<1xf32>
    %597 = vector.multi_reduction <maximumf>, %596, %cst_111 [0] : vector<8x1xf32> to vector<1xf32>
    %598 = vector.shape_cast %597 : vector<1xf32> to vector<1x1xf32>
    %599 = vector.broadcast %598 : vector<1x1xf32> to vector<8x1xf32>
    %600 = arith.subf %596, %599 : vector<8x1xf32>
    %601 = math.exp %600 : vector<8x1xf32>
    %cst_112 = arith.constant dense<0.000000e+00> : vector<1xf32>
    %602 = vector.multi_reduction <add>, %601, %cst_112 [0] : vector<8x1xf32> to vector<1xf32>
    %603 = vector.shape_cast %602 : vector<1xf32> to vector<1x1xf32>
    %604 = tpu.reciprocal %603 : vector<1x1xf32> -> vector<1x1xf32>
    %605 = vector.broadcast %604 : vector<1x1xf32> to vector<8x1xf32>
    %606 = arith.mulf %601, %605 : vector<8x1xf32>
    %607 = vector.broadcast %606 : vector<8x1xf32> to vector<8x32xf32>
    %608 = arith.mulf %607, %6 : vector<8x32xf32>
    %cst_113 = arith.constant dense<0.000000e+00> : vector<32xf32>
    %609 = vector.multi_reduction <add>, %608, %cst_113 [0] : vector<8x32xf32> to vector<32xf32>
    %610 = vector.shape_cast %609 : vector<32xf32> to vector<1x32xf32>
    %611 = vector.broadcast %514 : f32 to vector<1x32xf32>
    %612 = arith.mulf %610, %611 : vector<1x32xf32>
    %613 = vector.broadcast %c4_i32 : i32 to vector<8x1xi32>
    %614 = arith.cmpi eq, %19, %613 : vector<8x1xi32>
    %615 = arith.extui %614 : vector<8x1xi1> to vector<8x1xi32>
    %616 = arith.sitofp %615 : vector<8x1xi32> to vector<8x1xf32>
    %617 = vector.broadcast %616 : vector<8x1xf32> to vector<8x32xf32>
    %618 = vector.broadcast %612 : vector<1x32xf32> to vector<8x32xf32>
    %619 = arith.mulf %617, %618 : vector<8x32xf32>
    %620 = arith.addf %500, %619 : vector<8x32xf32>
    %c5_i32 = arith.constant 5 : i32
    %c8_i32_114 = arith.constant 8 : i32
    %621 = arith.muli %arg0, %c8_i32_114 : i32
    %622 = arith.addi %621, %c5_i32 : i32
    %623 = arith.index_cast %622 : i32 to index
    %c0_115 = arith.constant 0 : index
    %624 = memref.load %arg1[%623, %c0_115] : memref<8x8xf32, #tpu.memory_space<smem>>
    %625 = arith.index_cast %622 : i32 to index
    %c1_116 = arith.constant 1 : index
    %626 = memref.load %arg1[%625, %c1_116] : memref<8x8xf32, #tpu.memory_space<smem>>
    %627 = arith.index_cast %622 : i32 to index
    %c2_117 = arith.constant 2 : index
    %628 = memref.load %arg1[%627, %c2_117] : memref<8x8xf32, #tpu.memory_space<smem>>
    %629 = arith.index_cast %622 : i32 to index
    %c3_118 = arith.constant 3 : index
    %630 = memref.load %arg1[%629, %c3_118] : memref<8x8xf32, #tpu.memory_space<smem>>
    %631 = arith.index_cast %622 : i32 to index
    %c4_119 = arith.constant 4 : index
    %632 = memref.load %arg1[%631, %c4_119] : memref<8x8xf32, #tpu.memory_space<smem>>
    %633 = arith.index_cast %622 : i32 to index
    %c5_120 = arith.constant 5 : index
    %634 = memref.load %arg1[%633, %c5_120] : memref<8x8xf32, #tpu.memory_space<smem>>
    %635 = vector.broadcast %624 : f32 to vector<8x1xf32>
    %636 = arith.subf %635, %1 : vector<8x1xf32>
    %637 = vector.broadcast %626 : f32 to vector<8x1xf32>
    %638 = arith.subf %637, %2 : vector<8x1xf32>
    %639 = vector.broadcast %628 : f32 to vector<8x1xf32>
    %640 = arith.subf %639, %3 : vector<8x1xf32>
    %641 = vector.broadcast %630 : f32 to vector<8x1xf32>
    %642 = arith.subf %641, %4 : vector<8x1xf32>
    %643 = arith.mulf %636, %636 : vector<8x1xf32>
    %644 = arith.mulf %638, %638 : vector<8x1xf32>
    %645 = arith.addf %643, %644 : vector<8x1xf32>
    %646 = math.sqrt %645 : vector<8x1xf32>
    %647 = arith.mulf %628, %628 : f32
    %648 = arith.mulf %630, %630 : f32
    %649 = arith.addf %647, %648 : f32
    %650 = math.sqrt %649 : f32
    %651 = vector.broadcast %628 : f32 to vector<8x1xf32>
    %652 = arith.mulf %636, %651 : vector<8x1xf32>
    %653 = vector.broadcast %630 : f32 to vector<8x1xf32>
    %654 = arith.mulf %638, %653 : vector<8x1xf32>
    %655 = arith.addf %652, %654 : vector<8x1xf32>
    %656 = vector.broadcast %650 : f32 to vector<8x1xf32>
    %657 = arith.mulf %646, %656 : vector<8x1xf32>
    %cst_121 = arith.constant 9.99999997E-7 : f32
    %658 = vector.broadcast %cst_121 : f32 to vector<8x1xf32>
    %659 = arith.addf %657, %658 : vector<8x1xf32>
    %660 = arith.divf %655, %659 : vector<8x1xf32>
    %661 = arith.mulf %636, %640 : vector<8x1xf32>
    %662 = arith.mulf %638, %642 : vector<8x1xf32>
    %663 = arith.addf %661, %662 : vector<8x1xf32>
    %cst_122 = arith.constant 0.000000e+00 : f32
    %664 = vector.broadcast %cst_122 : f32 to vector<8x1xf32>
    %665 = arith.subf %664, %663 : vector<8x1xf32>
    %666 = arith.mulf %640, %640 : vector<8x1xf32>
    %667 = arith.mulf %642, %642 : vector<8x1xf32>
    %668 = arith.addf %666, %667 : vector<8x1xf32>
    %cst_123 = arith.constant 9.99999997E-7 : f32
    %669 = vector.broadcast %cst_123 : f32 to vector<8x1xf32>
    %670 = arith.addf %668, %669 : vector<8x1xf32>
    %671 = arith.divf %665, %670 : vector<8x1xf32>
    %672 = arith.mulf %671, %640 : vector<8x1xf32>
    %673 = arith.addf %636, %672 : vector<8x1xf32>
    %674 = arith.mulf %671, %642 : vector<8x1xf32>
    %675 = arith.addf %638, %674 : vector<8x1xf32>
    %676 = arith.mulf %673, %673 : vector<8x1xf32>
    %677 = arith.mulf %675, %675 : vector<8x1xf32>
    %678 = arith.addf %676, %677 : vector<8x1xf32>
    %679 = math.sqrt %678 : vector<8x1xf32>
    %680 = vector.extract_strided_slice %7 {offsets = [0, 0], sizes = [1, 32], strides = [1, 1]} : vector<3x32xf32> to vector<1x32xf32>
    %681 = vector.broadcast %646 : vector<8x1xf32> to vector<8x32xf32>
    %682 = vector.broadcast %680 : vector<1x32xf32> to vector<8x32xf32>
    %683 = arith.mulf %681, %682 : vector<8x32xf32>
    %684 = vector.extract_strided_slice %7 {offsets = [1, 0], sizes = [1, 32], strides = [1, 1]} : vector<3x32xf32> to vector<1x32xf32>
    %685 = vector.broadcast %660 : vector<8x1xf32> to vector<8x32xf32>
    %686 = vector.broadcast %684 : vector<1x32xf32> to vector<8x32xf32>
    %687 = arith.mulf %685, %686 : vector<8x32xf32>
    %688 = arith.addf %683, %687 : vector<8x32xf32>
    %689 = vector.extract_strided_slice %7 {offsets = [2, 0], sizes = [1, 32], strides = [1, 1]} : vector<3x32xf32> to vector<1x32xf32>
    %690 = vector.broadcast %679 : vector<8x1xf32> to vector<8x32xf32>
    %691 = vector.broadcast %689 : vector<1x32xf32> to vector<8x32xf32>
    %692 = arith.mulf %690, %691 : vector<8x32xf32>
    %693 = arith.addf %688, %692 : vector<8x32xf32>
    %694 = vector.broadcast %8 : vector<1x32xf32> to vector<8x32xf32>
    %695 = arith.addf %693, %694 : vector<8x32xf32>
    %cst_124 = arith.constant 0.000000e+00 : f32
    %696 = vector.broadcast %cst_124 : f32 to vector<8x32xf32>
    %697 = arith.maximumf %695, %696 : vector<8x32xf32>
    %cst_125 = arith.constant dense<0.000000e+00> : vector<8x64xf32>
    %698 = tpu.matmul %697, %9, %cst_125 {dimension_numbers = #tpu.dot_dimension_numbers<[1], [0], [0], [1], [0, 0, 1, 1], [], []>} : vector<8x32xf32>, vector<32x64xf32>, vector<8x64xf32> -> vector<8x64xf32>
    %699 = vector.broadcast %10 : vector<1x64xf32> to vector<8x64xf32>
    %700 = arith.addf %698, %699 : vector<8x64xf32>
    %cst_126 = arith.constant 0.000000e+00 : f32
    %701 = vector.broadcast %cst_126 : f32 to vector<8x64xf32>
    %702 = arith.maximumf %700, %701 : vector<8x64xf32>
    %cst_127 = arith.constant dense<0.000000e+00> : vector<8x16xf32>
    %703 = tpu.matmul %702, %11, %cst_127 {dimension_numbers = #tpu.dot_dimension_numbers<[1], [0], [0], [1], [0, 0, 1, 1], [], []>} : vector<8x64xf32>, vector<64x16xf32>, vector<8x16xf32> -> vector<8x16xf32>
    %704 = vector.broadcast %12 : vector<1x16xf32> to vector<8x16xf32>
    %705 = arith.addf %703, %704 : vector<8x16xf32>
    %706 = arith.mulf %705, %17 : vector<8x16xf32>
    %cst_128 = arith.constant dense<0.000000e+00> : vector<8xf32>
    %707 = vector.multi_reduction <add>, %706, %cst_128 [1] : vector<8x16xf32> to vector<8xf32>
    %708 = vector.shape_cast %707 : vector<8xf32> to vector<8x1xf32>
    %709 = vector.broadcast %632 : f32 to vector<8x1xf32>
    %710 = arith.cmpf oeq, %5, %709 : vector<8x1xf32>
    %711 = vector.broadcast %622 : i32 to vector<8x1xi32>
    %712 = arith.cmpi eq, %18, %711 : vector<8x1xi32>
    %cst_129 = arith.constant -1.000000e+03 : f32
    %713 = vector.broadcast %cst_129 : f32 to vector<8x1xf32>
    %714 = arith.select %712, %713, %708 : vector<8x1xi1>, vector<8x1xf32>
    %cst_130 = arith.constant -1.000000e+30 : f32
    %715 = vector.broadcast %cst_130 : f32 to vector<8x1xf32>
    %716 = arith.select %710, %714, %715 : vector<8x1xi1>, vector<8x1xf32>
    %cst_131 = arith.constant dense<0xFF800000> : vector<1xf32>
    %717 = vector.multi_reduction <maximumf>, %716, %cst_131 [0] : vector<8x1xf32> to vector<1xf32>
    %718 = vector.shape_cast %717 : vector<1xf32> to vector<1x1xf32>
    %719 = vector.broadcast %718 : vector<1x1xf32> to vector<8x1xf32>
    %720 = arith.subf %716, %719 : vector<8x1xf32>
    %721 = math.exp %720 : vector<8x1xf32>
    %cst_132 = arith.constant dense<0.000000e+00> : vector<1xf32>
    %722 = vector.multi_reduction <add>, %721, %cst_132 [0] : vector<8x1xf32> to vector<1xf32>
    %723 = vector.shape_cast %722 : vector<1xf32> to vector<1x1xf32>
    %724 = tpu.reciprocal %723 : vector<1x1xf32> -> vector<1x1xf32>
    %725 = vector.broadcast %724 : vector<1x1xf32> to vector<8x1xf32>
    %726 = arith.mulf %721, %725 : vector<8x1xf32>
    %727 = vector.broadcast %726 : vector<8x1xf32> to vector<8x32xf32>
    %728 = arith.mulf %727, %6 : vector<8x32xf32>
    %cst_133 = arith.constant dense<0.000000e+00> : vector<32xf32>
    %729 = vector.multi_reduction <add>, %728, %cst_133 [0] : vector<8x32xf32> to vector<32xf32>
    %730 = vector.shape_cast %729 : vector<32xf32> to vector<1x32xf32>
    %731 = vector.broadcast %634 : f32 to vector<1x32xf32>
    %732 = arith.mulf %730, %731 : vector<1x32xf32>
    %733 = vector.broadcast %c5_i32 : i32 to vector<8x1xi32>
    %734 = arith.cmpi eq, %19, %733 : vector<8x1xi32>
    %735 = arith.extui %734 : vector<8x1xi1> to vector<8x1xi32>
    %736 = arith.sitofp %735 : vector<8x1xi32> to vector<8x1xf32>
    %737 = vector.broadcast %736 : vector<8x1xf32> to vector<8x32xf32>
    %738 = vector.broadcast %732 : vector<1x32xf32> to vector<8x32xf32>
    %739 = arith.mulf %737, %738 : vector<8x32xf32>
    %740 = arith.addf %620, %739 : vector<8x32xf32>
    %c6_i32 = arith.constant 6 : i32
    %c8_i32_134 = arith.constant 8 : i32
    %741 = arith.muli %arg0, %c8_i32_134 : i32
    %742 = arith.addi %741, %c6_i32 : i32
    %743 = arith.index_cast %742 : i32 to index
    %c0_135 = arith.constant 0 : index
    %744 = memref.load %arg1[%743, %c0_135] : memref<8x8xf32, #tpu.memory_space<smem>>
    %745 = arith.index_cast %742 : i32 to index
    %c1_136 = arith.constant 1 : index
    %746 = memref.load %arg1[%745, %c1_136] : memref<8x8xf32, #tpu.memory_space<smem>>
    %747 = arith.index_cast %742 : i32 to index
    %c2_137 = arith.constant 2 : index
    %748 = memref.load %arg1[%747, %c2_137] : memref<8x8xf32, #tpu.memory_space<smem>>
    %749 = arith.index_cast %742 : i32 to index
    %c3_138 = arith.constant 3 : index
    %750 = memref.load %arg1[%749, %c3_138] : memref<8x8xf32, #tpu.memory_space<smem>>
    %751 = arith.index_cast %742 : i32 to index
    %c4_139 = arith.constant 4 : index
    %752 = memref.load %arg1[%751, %c4_139] : memref<8x8xf32, #tpu.memory_space<smem>>
    %753 = arith.index_cast %742 : i32 to index
    %c5_140 = arith.constant 5 : index
    %754 = memref.load %arg1[%753, %c5_140] : memref<8x8xf32, #tpu.memory_space<smem>>
    %755 = vector.broadcast %744 : f32 to vector<8x1xf32>
    %756 = arith.subf %755, %1 : vector<8x1xf32>
    %757 = vector.broadcast %746 : f32 to vector<8x1xf32>
    %758 = arith.subf %757, %2 : vector<8x1xf32>
    %759 = vector.broadcast %748 : f32 to vector<8x1xf32>
    %760 = arith.subf %759, %3 : vector<8x1xf32>
    %761 = vector.broadcast %750 : f32 to vector<8x1xf32>
    %762 = arith.subf %761, %4 : vector<8x1xf32>
    %763 = arith.mulf %756, %756 : vector<8x1xf32>
    %764 = arith.mulf %758, %758 : vector<8x1xf32>
    %765 = arith.addf %763, %764 : vector<8x1xf32>
    %766 = math.sqrt %765 : vector<8x1xf32>
    %767 = arith.mulf %748, %748 : f32
    %768 = arith.mulf %750, %750 : f32
    %769 = arith.addf %767, %768 : f32
    %770 = math.sqrt %769 : f32
    %771 = vector.broadcast %748 : f32 to vector<8x1xf32>
    %772 = arith.mulf %756, %771 : vector<8x1xf32>
    %773 = vector.broadcast %750 : f32 to vector<8x1xf32>
    %774 = arith.mulf %758, %773 : vector<8x1xf32>
    %775 = arith.addf %772, %774 : vector<8x1xf32>
    %776 = vector.broadcast %770 : f32 to vector<8x1xf32>
    %777 = arith.mulf %766, %776 : vector<8x1xf32>
    %cst_141 = arith.constant 9.99999997E-7 : f32
    %778 = vector.broadcast %cst_141 : f32 to vector<8x1xf32>
    %779 = arith.addf %777, %778 : vector<8x1xf32>
    %780 = arith.divf %775, %779 : vector<8x1xf32>
    %781 = arith.mulf %756, %760 : vector<8x1xf32>
    %782 = arith.mulf %758, %762 : vector<8x1xf32>
    %783 = arith.addf %781, %782 : vector<8x1xf32>
    %cst_142 = arith.constant 0.000000e+00 : f32
    %784 = vector.broadcast %cst_142 : f32 to vector<8x1xf32>
    %785 = arith.subf %784, %783 : vector<8x1xf32>
    %786 = arith.mulf %760, %760 : vector<8x1xf32>
    %787 = arith.mulf %762, %762 : vector<8x1xf32>
    %788 = arith.addf %786, %787 : vector<8x1xf32>
    %cst_143 = arith.constant 9.99999997E-7 : f32
    %789 = vector.broadcast %cst_143 : f32 to vector<8x1xf32>
    %790 = arith.addf %788, %789 : vector<8x1xf32>
    %791 = arith.divf %785, %790 : vector<8x1xf32>
    %792 = arith.mulf %791, %760 : vector<8x1xf32>
    %793 = arith.addf %756, %792 : vector<8x1xf32>
    %794 = arith.mulf %791, %762 : vector<8x1xf32>
    %795 = arith.addf %758, %794 : vector<8x1xf32>
    %796 = arith.mulf %793, %793 : vector<8x1xf32>
    %797 = arith.mulf %795, %795 : vector<8x1xf32>
    %798 = arith.addf %796, %797 : vector<8x1xf32>
    %799 = math.sqrt %798 : vector<8x1xf32>
    %800 = vector.extract_strided_slice %7 {offsets = [0, 0], sizes = [1, 32], strides = [1, 1]} : vector<3x32xf32> to vector<1x32xf32>
    %801 = vector.broadcast %766 : vector<8x1xf32> to vector<8x32xf32>
    %802 = vector.broadcast %800 : vector<1x32xf32> to vector<8x32xf32>
    %803 = arith.mulf %801, %802 : vector<8x32xf32>
    %804 = vector.extract_strided_slice %7 {offsets = [1, 0], sizes = [1, 32], strides = [1, 1]} : vector<3x32xf32> to vector<1x32xf32>
    %805 = vector.broadcast %780 : vector<8x1xf32> to vector<8x32xf32>
    %806 = vector.broadcast %804 : vector<1x32xf32> to vector<8x32xf32>
    %807 = arith.mulf %805, %806 : vector<8x32xf32>
    %808 = arith.addf %803, %807 : vector<8x32xf32>
    %809 = vector.extract_strided_slice %7 {offsets = [2, 0], sizes = [1, 32], strides = [1, 1]} : vector<3x32xf32> to vector<1x32xf32>
    %810 = vector.broadcast %799 : vector<8x1xf32> to vector<8x32xf32>
    %811 = vector.broadcast %809 : vector<1x32xf32> to vector<8x32xf32>
    %812 = arith.mulf %810, %811 : vector<8x32xf32>
    %813 = arith.addf %808, %812 : vector<8x32xf32>
    %814 = vector.broadcast %8 : vector<1x32xf32> to vector<8x32xf32>
    %815 = arith.addf %813, %814 : vector<8x32xf32>
    %cst_144 = arith.constant 0.000000e+00 : f32
    %816 = vector.broadcast %cst_144 : f32 to vector<8x32xf32>
    %817 = arith.maximumf %815, %816 : vector<8x32xf32>
    %cst_145 = arith.constant dense<0.000000e+00> : vector<8x64xf32>
    %818 = tpu.matmul %817, %9, %cst_145 {dimension_numbers = #tpu.dot_dimension_numbers<[1], [0], [0], [1], [0, 0, 1, 1], [], []>} : vector<8x32xf32>, vector<32x64xf32>, vector<8x64xf32> -> vector<8x64xf32>
    %819 = vector.broadcast %10 : vector<1x64xf32> to vector<8x64xf32>
    %820 = arith.addf %818, %819 : vector<8x64xf32>
    %cst_146 = arith.constant 0.000000e+00 : f32
    %821 = vector.broadcast %cst_146 : f32 to vector<8x64xf32>
    %822 = arith.maximumf %820, %821 : vector<8x64xf32>
    %cst_147 = arith.constant dense<0.000000e+00> : vector<8x16xf32>
    %823 = tpu.matmul %822, %11, %cst_147 {dimension_numbers = #tpu.dot_dimension_numbers<[1], [0], [0], [1], [0, 0, 1, 1], [], []>} : vector<8x64xf32>, vector<64x16xf32>, vector<8x16xf32> -> vector<8x16xf32>
    %824 = vector.broadcast %12 : vector<1x16xf32> to vector<8x16xf32>
    %825 = arith.addf %823, %824 : vector<8x16xf32>
    %826 = arith.mulf %825, %17 : vector<8x16xf32>
    %cst_148 = arith.constant dense<0.000000e+00> : vector<8xf32>
    %827 = vector.multi_reduction <add>, %826, %cst_148 [1] : vector<8x16xf32> to vector<8xf32>
    %828 = vector.shape_cast %827 : vector<8xf32> to vector<8x1xf32>
    %829 = vector.broadcast %752 : f32 to vector<8x1xf32>
    %830 = arith.cmpf oeq, %5, %829 : vector<8x1xf32>
    %831 = vector.broadcast %742 : i32 to vector<8x1xi32>
    %832 = arith.cmpi eq, %18, %831 : vector<8x1xi32>
    %cst_149 = arith.constant -1.000000e+03 : f32
    %833 = vector.broadcast %cst_149 : f32 to vector<8x1xf32>
    %834 = arith.select %832, %833, %828 : vector<8x1xi1>, vector<8x1xf32>
    %cst_150 = arith.constant -1.000000e+30 : f32
    %835 = vector.broadcast %cst_150 : f32 to vector<8x1xf32>
    %836 = arith.select %830, %834, %835 : vector<8x1xi1>, vector<8x1xf32>
    %cst_151 = arith.constant dense<0xFF800000> : vector<1xf32>
    %837 = vector.multi_reduction <maximumf>, %836, %cst_151 [0] : vector<8x1xf32> to vector<1xf32>
    %838 = vector.shape_cast %837 : vector<1xf32> to vector<1x1xf32>
    %839 = vector.broadcast %838 : vector<1x1xf32> to vector<8x1xf32>
    %840 = arith.subf %836, %839 : vector<8x1xf32>
    %841 = math.exp %840 : vector<8x1xf32>
    %cst_152 = arith.constant dense<0.000000e+00> : vector<1xf32>
    %842 = vector.multi_reduction <add>, %841, %cst_152 [0] : vector<8x1xf32> to vector<1xf32>
    %843 = vector.shape_cast %842 : vector<1xf32> to vector<1x1xf32>
    %844 = tpu.reciprocal %843 : vector<1x1xf32> -> vector<1x1xf32>
    %845 = vector.broadcast %844 : vector<1x1xf32> to vector<8x1xf32>
    %846 = arith.mulf %841, %845 : vector<8x1xf32>
    %847 = vector.broadcast %846 : vector<8x1xf32> to vector<8x32xf32>
    %848 = arith.mulf %847, %6 : vector<8x32xf32>
    %cst_153 = arith.constant dense<0.000000e+00> : vector<32xf32>
    %849 = vector.multi_reduction <add>, %848, %cst_153 [0] : vector<8x32xf32> to vector<32xf32>
    %850 = vector.shape_cast %849 : vector<32xf32> to vector<1x32xf32>
    %851 = vector.broadcast %754 : f32 to vector<1x32xf32>
    %852 = arith.mulf %850, %851 : vector<1x32xf32>
    %853 = vector.broadcast %c6_i32 : i32 to vector<8x1xi32>
    %854 = arith.cmpi eq, %19, %853 : vector<8x1xi32>
    %855 = arith.extui %854 : vector<8x1xi1> to vector<8x1xi32>
    %856 = arith.sitofp %855 : vector<8x1xi32> to vector<8x1xf32>
    %857 = vector.broadcast %856 : vector<8x1xf32> to vector<8x32xf32>
    %858 = vector.broadcast %852 : vector<1x32xf32> to vector<8x32xf32>
    %859 = arith.mulf %857, %858 : vector<8x32xf32>
    %860 = arith.addf %740, %859 : vector<8x32xf32>
    %c7_i32 = arith.constant 7 : i32
    %c8_i32_154 = arith.constant 8 : i32
    %861 = arith.muli %arg0, %c8_i32_154 : i32
    %862 = arith.addi %861, %c7_i32 : i32
    %863 = arith.index_cast %862 : i32 to index
    %c0_155 = arith.constant 0 : index
    %864 = memref.load %arg1[%863, %c0_155] : memref<8x8xf32, #tpu.memory_space<smem>>
    %865 = arith.index_cast %862 : i32 to index
    %c1_156 = arith.constant 1 : index
    %866 = memref.load %arg1[%865, %c1_156] : memref<8x8xf32, #tpu.memory_space<smem>>
    %867 = arith.index_cast %862 : i32 to index
    %c2_157 = arith.constant 2 : index
    %868 = memref.load %arg1[%867, %c2_157] : memref<8x8xf32, #tpu.memory_space<smem>>
    %869 = arith.index_cast %862 : i32 to index
    %c3_158 = arith.constant 3 : index
    %870 = memref.load %arg1[%869, %c3_158] : memref<8x8xf32, #tpu.memory_space<smem>>
    %871 = arith.index_cast %862 : i32 to index
    %c4_159 = arith.constant 4 : index
    %872 = memref.load %arg1[%871, %c4_159] : memref<8x8xf32, #tpu.memory_space<smem>>
    %873 = arith.index_cast %862 : i32 to index
    %c5_160 = arith.constant 5 : index
    %874 = memref.load %arg1[%873, %c5_160] : memref<8x8xf32, #tpu.memory_space<smem>>
    %875 = vector.broadcast %864 : f32 to vector<8x1xf32>
    %876 = arith.subf %875, %1 : vector<8x1xf32>
    %877 = vector.broadcast %866 : f32 to vector<8x1xf32>
    %878 = arith.subf %877, %2 : vector<8x1xf32>
    %879 = vector.broadcast %868 : f32 to vector<8x1xf32>
    %880 = arith.subf %879, %3 : vector<8x1xf32>
    %881 = vector.broadcast %870 : f32 to vector<8x1xf32>
    %882 = arith.subf %881, %4 : vector<8x1xf32>
    %883 = arith.mulf %876, %876 : vector<8x1xf32>
    %884 = arith.mulf %878, %878 : vector<8x1xf32>
    %885 = arith.addf %883, %884 : vector<8x1xf32>
    %886 = math.sqrt %885 : vector<8x1xf32>
    %887 = arith.mulf %868, %868 : f32
    %888 = arith.mulf %870, %870 : f32
    %889 = arith.addf %887, %888 : f32
    %890 = math.sqrt %889 : f32
    %891 = vector.broadcast %868 : f32 to vector<8x1xf32>
    %892 = arith.mulf %876, %891 : vector<8x1xf32>
    %893 = vector.broadcast %870 : f32 to vector<8x1xf32>
    %894 = arith.mulf %878, %893 : vector<8x1xf32>
    %895 = arith.addf %892, %894 : vector<8x1xf32>
    %896 = vector.broadcast %890 : f32 to vector<8x1xf32>
    %897 = arith.mulf %886, %896 : vector<8x1xf32>
    %cst_161 = arith.constant 9.99999997E-7 : f32
    %898 = vector.broadcast %cst_161 : f32 to vector<8x1xf32>
    %899 = arith.addf %897, %898 : vector<8x1xf32>
    %900 = arith.divf %895, %899 : vector<8x1xf32>
    %901 = arith.mulf %876, %880 : vector<8x1xf32>
    %902 = arith.mulf %878, %882 : vector<8x1xf32>
    %903 = arith.addf %901, %902 : vector<8x1xf32>
    %cst_162 = arith.constant 0.000000e+00 : f32
    %904 = vector.broadcast %cst_162 : f32 to vector<8x1xf32>
    %905 = arith.subf %904, %903 : vector<8x1xf32>
    %906 = arith.mulf %880, %880 : vector<8x1xf32>
    %907 = arith.mulf %882, %882 : vector<8x1xf32>
    %908 = arith.addf %906, %907 : vector<8x1xf32>
    %cst_163 = arith.constant 9.99999997E-7 : f32
    %909 = vector.broadcast %cst_163 : f32 to vector<8x1xf32>
    %910 = arith.addf %908, %909 : vector<8x1xf32>
    %911 = arith.divf %905, %910 : vector<8x1xf32>
    %912 = arith.mulf %911, %880 : vector<8x1xf32>
    %913 = arith.addf %876, %912 : vector<8x1xf32>
    %914 = arith.mulf %911, %882 : vector<8x1xf32>
    %915 = arith.addf %878, %914 : vector<8x1xf32>
    %916 = arith.mulf %913, %913 : vector<8x1xf32>
    %917 = arith.mulf %915, %915 : vector<8x1xf32>
    %918 = arith.addf %916, %917 : vector<8x1xf32>
    %919 = math.sqrt %918 : vector<8x1xf32>
    %920 = vector.extract_strided_slice %7 {offsets = [0, 0], sizes = [1, 32], strides = [1, 1]} : vector<3x32xf32> to vector<1x32xf32>
    %921 = vector.broadcast %886 : vector<8x1xf32> to vector<8x32xf32>
    %922 = vector.broadcast %920 : vector<1x32xf32> to vector<8x32xf32>
    %923 = arith.mulf %921, %922 : vector<8x32xf32>
    %924 = vector.extract_strided_slice %7 {offsets = [1, 0], sizes = [1, 32], strides = [1, 1]} : vector<3x32xf32> to vector<1x32xf32>
    %925 = vector.broadcast %900 : vector<8x1xf32> to vector<8x32xf32>
    %926 = vector.broadcast %924 : vector<1x32xf32> to vector<8x32xf32>
    %927 = arith.mulf %925, %926 : vector<8x32xf32>
    %928 = arith.addf %923, %927 : vector<8x32xf32>
    %929 = vector.extract_strided_slice %7 {offsets = [2, 0], sizes = [1, 32], strides = [1, 1]} : vector<3x32xf32> to vector<1x32xf32>
    %930 = vector.broadcast %919 : vector<8x1xf32> to vector<8x32xf32>
    %931 = vector.broadcast %929 : vector<1x32xf32> to vector<8x32xf32>
    %932 = arith.mulf %930, %931 : vector<8x32xf32>
    %933 = arith.addf %928, %932 : vector<8x32xf32>
    %934 = vector.broadcast %8 : vector<1x32xf32> to vector<8x32xf32>
    %935 = arith.addf %933, %934 : vector<8x32xf32>
    %cst_164 = arith.constant 0.000000e+00 : f32
    %936 = vector.broadcast %cst_164 : f32 to vector<8x32xf32>
    %937 = arith.maximumf %935, %936 : vector<8x32xf32>
    %cst_165 = arith.constant dense<0.000000e+00> : vector<8x64xf32>
    %938 = tpu.matmul %937, %9, %cst_165 {dimension_numbers = #tpu.dot_dimension_numbers<[1], [0], [0], [1], [0, 0, 1, 1], [], []>} : vector<8x32xf32>, vector<32x64xf32>, vector<8x64xf32> -> vector<8x64xf32>
    %939 = vector.broadcast %10 : vector<1x64xf32> to vector<8x64xf32>
    %940 = arith.addf %938, %939 : vector<8x64xf32>
    %cst_166 = arith.constant 0.000000e+00 : f32
    %941 = vector.broadcast %cst_166 : f32 to vector<8x64xf32>
    %942 = arith.maximumf %940, %941 : vector<8x64xf32>
    %cst_167 = arith.constant dense<0.000000e+00> : vector<8x16xf32>
    %943 = tpu.matmul %942, %11, %cst_167 {dimension_numbers = #tpu.dot_dimension_numbers<[1], [0], [0], [1], [0, 0, 1, 1], [], []>} : vector<8x64xf32>, vector<64x16xf32>, vector<8x16xf32> -> vector<8x16xf32>
    %944 = vector.broadcast %12 : vector<1x16xf32> to vector<8x16xf32>
    %945 = arith.addf %943, %944 : vector<8x16xf32>
    %946 = arith.mulf %945, %17 : vector<8x16xf32>
    %cst_168 = arith.constant dense<0.000000e+00> : vector<8xf32>
    %947 = vector.multi_reduction <add>, %946, %cst_168 [1] : vector<8x16xf32> to vector<8xf32>
    %948 = vector.shape_cast %947 : vector<8xf32> to vector<8x1xf32>
    %949 = vector.broadcast %872 : f32 to vector<8x1xf32>
    %950 = arith.cmpf oeq, %5, %949 : vector<8x1xf32>
    %951 = vector.broadcast %862 : i32 to vector<8x1xi32>
    %952 = arith.cmpi eq, %18, %951 : vector<8x1xi32>
    %cst_169 = arith.constant -1.000000e+03 : f32
    %953 = vector.broadcast %cst_169 : f32 to vector<8x1xf32>
    %954 = arith.select %952, %953, %948 : vector<8x1xi1>, vector<8x1xf32>
    %cst_170 = arith.constant -1.000000e+30 : f32
    %955 = vector.broadcast %cst_170 : f32 to vector<8x1xf32>
    %956 = arith.select %950, %954, %955 : vector<8x1xi1>, vector<8x1xf32>
    %cst_171 = arith.constant dense<0xFF800000> : vector<1xf32>
    %957 = vector.multi_reduction <maximumf>, %956, %cst_171 [0] : vector<8x1xf32> to vector<1xf32>
    %958 = vector.shape_cast %957 : vector<1xf32> to vector<1x1xf32>
    %959 = vector.broadcast %958 : vector<1x1xf32> to vector<8x1xf32>
    %960 = arith.subf %956, %959 : vector<8x1xf32>
    %961 = math.exp %960 : vector<8x1xf32>
    %cst_172 = arith.constant dense<0.000000e+00> : vector<1xf32>
    %962 = vector.multi_reduction <add>, %961, %cst_172 [0] : vector<8x1xf32> to vector<1xf32>
    %963 = vector.shape_cast %962 : vector<1xf32> to vector<1x1xf32>
    %964 = tpu.reciprocal %963 : vector<1x1xf32> -> vector<1x1xf32>
    %965 = vector.broadcast %964 : vector<1x1xf32> to vector<8x1xf32>
    %966 = arith.mulf %961, %965 : vector<8x1xf32>
    %967 = vector.broadcast %966 : vector<8x1xf32> to vector<8x32xf32>
    %968 = arith.mulf %967, %6 : vector<8x32xf32>
    %cst_173 = arith.constant dense<0.000000e+00> : vector<32xf32>
    %969 = vector.multi_reduction <add>, %968, %cst_173 [0] : vector<8x32xf32> to vector<32xf32>
    %970 = vector.shape_cast %969 : vector<32xf32> to vector<1x32xf32>
    %971 = vector.broadcast %874 : f32 to vector<1x32xf32>
    %972 = arith.mulf %970, %971 : vector<1x32xf32>
    %973 = vector.broadcast %c7_i32 : i32 to vector<8x1xi32>
    %974 = arith.cmpi eq, %19, %973 : vector<8x1xi32>
    %975 = arith.extui %974 : vector<8x1xi1> to vector<8x1xi32>
    %976 = arith.sitofp %975 : vector<8x1xi32> to vector<8x1xf32>
    %977 = vector.broadcast %976 : vector<8x1xf32> to vector<8x32xf32>
    %978 = vector.broadcast %972 : vector<1x32xf32> to vector<8x32xf32>
    %979 = arith.mulf %977, %978 : vector<8x32xf32>
    %980 = arith.addf %860, %979 : vector<8x32xf32>
    %c8_i32_174 = arith.constant 8 : i32
    %c0_175 = arith.constant 0 : index
    %c0_176 = arith.constant 0 : index
    %981 = vector.load %arg12[%c0_175, %c0_176] : memref<8x32xf32, #tpu.memory_space<vmem>>, vector<8x32xf32>
    tpu.vector_store %arg12[%c0_175, %c0_176], %980 {strides = array<i32>} : memref<8x32xf32, #tpu.memory_space<vmem>>, vector<8x32xf32>,
    return
  }
  func.func @transform_0(%arg0: i32) -> (i32, i32) {
    %c0_i32 = arith.constant 0 : i32
    %c0_i32_0 = arith.constant 0 : i32
    %c0_i32_1 = arith.constant 0 : i32
    return %c0_i32, %c0_i32_0 : i32, i32
  }
  func.func @transform_1(%arg0: i32) -> (i32, i32) {
    %c0_i32 = arith.constant 0 : i32
    %c0_i32_0 = arith.constant 0 : i32
    %c0_i32_1 = arith.constant 0 : i32
    return %c0_i32, %c0_i32_0 : i32, i32
  }
  func.func @transform_2(%arg0: i32) -> (i32, i32) {
    %c0_i32 = arith.constant 0 : i32
    %c0_i32_0 = arith.constant 0 : i32
    %c0_i32_1 = arith.constant 0 : i32
    return %c0_i32, %c0_i32_0 : i32, i32
  }
  func.func @transform_3(%arg0: i32) -> (i32, i32) {
    %c0_i32 = arith.constant 0 : i32
    %c0_i32_0 = arith.constant 0 : i32
    %c0_i32_1 = arith.constant 0 : i32
    return %c0_i32, %c0_i32_0 : i32, i32
  }
  func.func @transform_4(%arg0: i32) -> (i32, i32) {
    %c0_i32 = arith.constant 0 : i32
    %c0_i32_0 = arith.constant 0 : i32
    %c0_i32_1 = arith.constant 0 : i32
    return %c0_i32, %c0_i32_0 : i32, i32
  }
  func.func @transform_5(%arg0: i32) -> (i32, i32) {
    %c0_i32 = arith.constant 0 : i32
    %c0_i32_0 = arith.constant 0 : i32
    %c0_i32_1 = arith.constant 0 : i32
    return %c0_i32, %c0_i32_0 : i32, i32
  }
  func.func @transform_6(%arg0: i32) -> (i32, i32) {
    %c0_i32 = arith.constant 0 : i32
    %c0_i32_0 = arith.constant 0 : i32
    %c0_i32_1 = arith.constant 0 : i32
    return %c0_i32, %c0_i32_0 : i32, i32
  }
  func.func @transform_7(%arg0: i32) -> (i32, i32) {
    %c0_i32 = arith.constant 0 : i32
    %c0_i32_0 = arith.constant 0 : i32
    %c0_i32_1 = arith.constant 0 : i32
    return %c0_i32, %c0_i32_0 : i32, i32
  }
  func.func @transform_8(%arg0: i32) -> (i32, i32) {
    %c0_i32 = arith.constant 0 : i32
    %c0_i32_0 = arith.constant 0 : i32
    %c0_i32_1 = arith.constant 0 : i32
    return %c0_i32, %c0_i32_0 : i32, i32
  }
  func.func @transform_9(%arg0: i32) -> (i32, i32) {
    %c0_i32 = arith.constant 0 : i32
    %c0_i32_0 = arith.constant 0 : i32
    %c0_i32_1 = arith.constant 0 : i32
    return %c0_i32, %c0_i32_0 : i32, i32
  }
  func.func @transform_10(%arg0: i32) -> (i32, i32) {
    %c0_i32 = arith.constant 0 : i32
    %c0_i32_0 = arith.constant 0 : i32
    %c0_i32_1 = arith.constant 0 : i32
    return %c0_i32, %c0_i32_0 : i32, i32
  }
  func.func @transform_11(%arg0: i32) -> (i32, i32) {
    %c0_i32 = arith.constant 0 : i32
    %c0_i32_0 = arith.constant 0 : i32
    return %arg0, %c0_i32 : i32, i32
  }
}

</mosaic_0001>

<llo_original>
// kernel: tpu_custom_call.1
$region0: #{tpu_custom_call.1}
  #allocation0 [shape = 'u32[]', space=smem, size = 0x4, offset = 0x4, fixed_abs, tag = 'smem constant byte address 0x4 - core index']
  #allocation1 [shape = 'u32[144,128]{1,0:T(1,128)}', space=vmem, size = 0x12000, scoped, tag = 'internal scratch']
  %s0 = inlined_call_operand.vmem [shape: f32[8,8], index: 0, kind: input, shape index: {}]
  %s1 = inlined_call_operand.vmem [shape: f32[8,8], index: 1, kind: input, shape index: {}]
  %s2 = inlined_call_operand.vmem [shape: f32[8,32], index: 2, kind: input, shape index: {}]
  %s3 = inlined_call_operand.vmem [shape: f32[3,32], index: 3, kind: input, shape index: {}]
  %s4 = inlined_call_operand.vmem [shape: f32[1,32], index: 4, kind: input, shape index: {}]
  %s5 = inlined_call_operand.vmem [shape: f32[32,64], index: 5, kind: input, shape index: {}]
  %s6 = inlined_call_operand.vmem [shape: f32[1,64], index: 6, kind: input, shape index: {}]
  %s7 = inlined_call_operand.vmem [shape: f32[64,16], index: 7, kind: input, shape index: {}]
  %s8 = inlined_call_operand.vmem [shape: f32[1,16], index: 8, kind: input, shape index: {}]
  %s9 = inlined_call_operand.vmem [shape: f32[32,16], index: 9, kind: input, shape index: {}]
  %s10 = inlined_call_operand.vmem [shape: f32[1,16], index: 10, kind: input, shape index: {}]
  %s11 = inlined_call_operand.hbm [shape: f32[8,32], index: 11, kind: output, shape index: {}]
  %s12 = sld [smem:[#allocation0]]
  $region58: #{tpu_custom_call.1} parent=0
    _
  %s14 = ssub.s32 1, %s12
  %s15 = scalar_select 0, %s14, %s12
  $region1: #{tpu_custom_call.1} parent=0
    #allocation2 [shape = 'u8[4096]{0}', space=smem, size = 0x1000, scoped, tag = 'input window, operand 0, single buffered']
    #allocation3 [shape = 's32[1]{0}', space=sflag, size = 0x4, scoped, tag = 'scoped memory for tpu_custom_call.1']
    #allocation4 [shape = 's32[1]{0}', space=sflag, size = 0x4, scoped, tag = 'scoped memory for tpu_custom_call.1']
    #allocation5 [shape = 'u8[4096]{0}', space=vmem, size = 0x1000, scoped, tag = 'output window, operand 0, single buffered']
    %16 = vsyncpa [#allocation4], 0
    %17 = vsyncpa [#allocation3], 0
    // Predicated region
    $region2: #{tpu_custom_call.1} parent=1 // pred_check
      _
    $region3: #{tpu_custom_call.1} parent=1 // pred_check_branch
      %19 = sbr.rel (0) target = $region5
    $region4: #{tpu_custom_call.1} parent=1 // pred_region
      %s21 = ssub.s32 128, 128
      %22 = vsyncadd [#allocation4], %s21
      %s24 = sshll.u32 %s0, 4
      %s25 = int_to_ptr.vmem [resolvable:$true] %s24
      %27 = dma.vmem_to_smem %s25, 128, [#allocation2], [#allocation4]
    $region5: #{tpu_custom_call.1} parent=1 // pred_fallthru
      _
    // Predicated region
    $region6: #{tpu_custom_call.1} parent=1 // pred_check
      _
    $region7: #{tpu_custom_call.1} parent=1 // pred_check_branch
      %29 = sbr.rel (0) target = $region9
    $region8: #{tpu_custom_call.1} parent=1 // pred_region
      _
    $region9: #{tpu_custom_call.1} parent=1 // pred_fallthru
      _
    // Predicated region
    $region10: #{tpu_custom_call.1} parent=1 // pred_check
      _
    $region11: #{tpu_custom_call.1} parent=1 // pred_check_branch
      %31 = sbr.rel (0) target = $region13
    $region12: #{tpu_custom_call.1} parent=1 // pred_region
      _
    $region13: #{tpu_custom_call.1} parent=1 // pred_fallthru
      _
    // Predicated region
    $region14: #{tpu_custom_call.1} parent=1 // pred_check
      _
    $region15: #{tpu_custom_call.1} parent=1 // pred_check_branch
      %33 = sbr.rel (0) target = $region17
    $region16: #{tpu_custom_call.1} parent=1 // pred_region
      _
    $region17: #{tpu_custom_call.1} parent=1 // pred_fallthru
      _
    // Predicated region
    $region18: #{tpu_custom_call.1} parent=1 // pred_check
      _
    $region19: #{tpu_custom_call.1} parent=1 // pred_check_branch
      %35 = sbr.rel (0) target = $region21
    $region20: #{tpu_custom_call.1} parent=1 // pred_region
      _
    $region21: #{tpu_custom_call.1} parent=1 // pred_fallthru
      _
    // Predicated region
    $region22: #{tpu_custom_call.1} parent=1 // pred_check
      _
    $region23: #{tpu_custom_call.1} parent=1 // pred_check_branch
      %37 = sbr.rel (0) target = $region25
    $region24: #{tpu_custom_call.1} parent=1 // pred_region
      _
    $region25: #{tpu_custom_call.1} parent=1 // pred_fallthru
      _
    // Predicated region
    $region26: #{tpu_custom_call.1} parent=1 // pred_check
      _
    $region27: #{tpu_custom_call.1} parent=1 // pred_check_branch
      %39 = sbr.rel (0) target = $region29
    $region28: #{tpu_custom_call.1} parent=1 // pred_region
      _
    $region29: #{tpu_custom_call.1} parent=1 // pred_fallthru
      _
    // Predicated region
    $region30: #{tpu_custom_call.1} parent=1 // pred_check
      _
    $region31: #{tpu_custom_call.1} parent=1 // pred_check_branch
      %41 = sbr.rel (0) target = $region33
    $region32: #{tpu_custom_call.1} parent=1 // pred_region
      _
    $region33: #{tpu_custom_call.1} parent=1 // pred_fallthru
      _
    // Predicated region
    $region34: #{tpu_custom_call.1} parent=1 // pred_check
      _
    $region35: #{tpu_custom_call.1} parent=1 // pred_check_branch
      %43 = sbr.rel (0) target = $region37
    $region36: #{tpu_custom_call.1} parent=1 // pred_region
      _
    $region37: #{tpu_custom_call.1} parent=1 // pred_fallthru
      _
    // Predicated region
    $region38: #{tpu_custom_call.1} parent=1 // pred_check
      _
    $region39: #{tpu_custom_call.1} parent=1 // pred_check_branch
      %45 = sbr.rel (0) target = $region41
    $region40: #{tpu_custom_call.1} parent=1 // pred_region
      _
    $region41: #{tpu_custom_call.1} parent=1 // pred_fallthru
      _
    // Predicated region
    $region42: #{tpu_custom_call.1} parent=1 // pred_check
      _
    $region43: #{tpu_custom_call.1} parent=1 // pred_check_branch
      %47 = sbr.rel (0) target = $region45
    $region44: #{tpu_custom_call.1} parent=1 // pred_region
      _
    $region45: #{tpu_custom_call.1} parent=1 // pred_fallthru
      _
    // Predicated region
    $region46: #{tpu_custom_call.1} parent=1 // pred_check
      _
    $region47: #{tpu_custom_call.1} parent=1 // pred_check_branch
      %49 = sbr.rel (0) target = $region49
    $region48: #{tpu_custom_call.1} parent=1 // pred_region
      %50 = dma.done [#allocation4], 128
    $region49: #{tpu_custom_call.1} parent=1 // pred_fallthru
      _
    %51 = sfence
    %v52 = vld [vmem:[%s1] sm:$0xff]
    %v53 = vld [vmem:[%s2] sm:$0xff]
    %v54 = vld [vmem:[%s3] sm:$0x7]
    %v55 = vld [vmem:[%s4] sm:$0x1]
    %v56 = vld [vmem:[%s5] sm:$0xff]
    %v57 = vld [vmem:[%s5 + $0x8] sm:$0xff]
    %v58 = vld [vmem:[%s5 + $0x10] sm:$0xff]
    %v59 = vld [vmem:[%s5 + $0x18] sm:$0xff]
    %v60 = vld [vmem:[%s6] sm:$0x1]
    %v61 = vld [vmem:[%s7] sm:$0xff]
    %v62 = vld [vmem:[%s7 + $0x8] sm:$0xff]
    %v63 = vld [vmem:[%s7 + $0x10] sm:$0xff]
    %v64 = vld [vmem:[%s7 + $0x18] sm:$0xff]
    %v65 = vld [vmem:[%s7 + $0x20] sm:$0xff]
    %v66 = vld [vmem:[%s7 + $0x28] sm:$0xff]
    %v67 = vld [vmem:[%s7 + $0x30] sm:$0xff]
    %v68 = vld [vmem:[%s7 + $0x38] sm:$0xff]
    %v69 = vld [vmem:[%s8] sm:$0x1]
    %v70 = vld [vmem:[%s9] sm:$0xff]
    %v71 = vld [vmem:[%s9 + $0x8] sm:$0xff]
    %v72 = vld [vmem:[%s9 + $0x10] sm:$0xff]
    %v73 = vld [vmem:[%s9 + $0x18] sm:$0xff]
    %v74 = vld [vmem:[%s10] sm:$0x1]
    %v76 = vlaneseq
    %v77 = vshrl.u32 %v76, 7
    %v78 = vsub.s32 0, %v77
    %v79 = vrot.slane %v74, %v78
    %vm81 = vcmask 261120
    %v83 = vsel %vm81, %v53, 0
    %85 = vmatprep.subr.mxu0 0.0
    %86 = vmatpush1.msra.mxu0 0.0
    %87 = vmatprep.subr.mxu0 0.0
    %88 = vmatpush1.msra.mxu0 0.0
    %89 = vmatprep.subr.mxu0 0.0
    %90 = vmatpush1.msra.mxu0 0.0
    %91 = vmatprep.subr.mxu0 0.0
    %92 = vmatpush1.msra.mxu0 0.0
    %93 = vmatprep.subr.mxu0 0.0
    %94 = vmatpush1.msra.mxu0 0.0
    %95 = vmatprep.subr.mxu0 0.0
    %96 = vmatpush1.msra.mxu0 0.0
    %97 = vmatprep.subr.mxu0 0.0
    %98 = vmatpush1.msra.mxu0 0.0
    %99 = vmatprep.subr.mxu0 0.0
    %100 = vmatpush1.msra.mxu0 0.0
    %101 = vmatprep.subr.mxu0 0.0
    %102 = vmatpush1.msra.mxu0 0.0
    %103 = vmatprep.subr.mxu0 0.0
    %104 = vmatpush1.msra.mxu0 0.0
    %105 = vmatprep.subr.mxu0 0.0
    %106 = vmatpush1.msra.mxu0 0.0
    %107 = vmatprep.subr.mxu0 0.0
    %108 = vmatpush1.msra.mxu0 0.0
    %109 = vmatprep.subr.mxu0 0.0
    %110 = vmatpush1.msra.mxu0 %v73
    %111 = vmatprep.subr.mxu0 0.0
    %112 = vmatpush1.msra.mxu0 %v72
    %113 = vmatprep.subr.mxu0 0.0
    %114 = vmatpush1.msra.mxu0 %v71
    %115 = vmatprep.subr.mxu0 0.0
    %116 = vmatpush1.msra.mxu0 %v70
    %117 = vmatprep.subr.mxu0 0.0
    %118 = vmatpush2.msra.mxu0 0.0
    %119 = vmatprep.subr.mxu0 0.0
    %120 = vmatpush2.msra.mxu0 0.0
    %121 = vmatprep.subr.mxu0 0.0
    %122 = vmatpush2.msra.mxu0 0.0
    %123 = vmatprep.subr.mxu0 0.0
    %124 = vmatpush2.msra.mxu0 0.0
    %125 = vmatprep.subr.mxu0 0.0
    %126 = vmatpush2.msra.mxu0 0.0
    %127 = vmatprep.subr.mxu0 0.0
    %128 = vmatpush2.msra.mxu0 0.0
    %129 = vmatprep.subr.mxu0 0.0
    %130 = vmatpush2.msra.mxu0 0.0
    %131 = vmatprep.subr.mxu0 0.0
    %132 = vmatpush2.msra.mxu0 0.0
    %133 = vmatprep.subr.mxu0 0.0
    %134 = vmatpush2.msra.mxu0 0.0
    %135 = vmatprep.subr.mxu0 0.0
    %136 = vmatpush2.msra.mxu0 0.0
    %137 = vmatprep.subr.mxu0 0.0
    %138 = vmatpush2.msra.mxu0 0.0
    %139 = vmatprep.subr.mxu0 0.0
    %140 = vmatpush2.msra.mxu0 0.0
    %141 = vmatprep.subr.mxu0 0.0
    %142 = vmatpush2.msra.mxu0 0.0
    %143 = vmatprep.subr.mxu0 0.0
    %144 = vmatpush2.msra.mxu0 0.0
    %145 = vmatprep.subr.mxu0 0.0
    %146 = vmatpush2.msra.mxu0 0.0
    %147 = vmatprep.subr.mxu0 0.0
    %148 = vmatpush2.msra.mxu0 0.0
    %149 = vmatprep.mubr.f32.mxu0 0.0
    %150 = vmatmul.mubr.f32.gmra.mxu0 %v83
    %v151 = vpop.f32.mrf.mxu0
    %v152 = vadd.f32 %v79, %v151
    %v153 = vpop.f32.mrf.mxu0
    %154 = vdwg.mxu0
    %v155 = vlaneseq
    %v156 = vshrl.u32 %v155, 7
    %s157 = smul.u32 0, 8
    %s158 = smul.u32 %s157, 128
    %s159 = sld [smem:[#allocation2 + %s158]]
    %s160 = sadd.s32 %s158, 1
    %s161 = sld [smem:[#allocation2 + %s160]]
    %s162 = sadd.s32 %s158, 2
    %s163 = sld [smem:[#allocation2 + %s162]]
    %s164 = sadd.s32 %s158, 3
    %s165 = sld [smem:[#allocation2 + %s164]]
    %s166 = sadd.s32 %s158, 4
    %s167 = sld [smem:[#allocation2 + %s166]]
    %s168 = sadd.s32 %s158, 5
    %s169 = sld [smem:[#allocation2 + %s168]]
    %v170 = vstv %s159
    %v171 = vsub.f32 %v170, %v52
    %v172 = vstv %s161
    %v173 = vsub.f32 %v172, %v52
    %v174 = vstv %s163
    %v175 = vsub.f32 %v174, %v52
    %v176 = vstv %s165
    %v177 = vsub.f32 %v176, %v52
    %v178 = vmul.f32 %v171, %v171
    %v179 = vmul.f32 %v173, %v173
    %181 = vrot.lane.b32.xlu0 %v179, 127
    %v182 = vpop.permute.xlu0 %181
    %v184 = vadd.f32 %v178, %v182
    %v185 = vrsqrt.pop %v184
    %v186 = vmul.f32 %v184, %v185
    %vm187 = vcmp.eq.f32.partialorder %v184, inf
    %v188 = vsel %vm187, %v184, %v186
    %vm189 = vcmp.eq.f32.partialorder %v184, 0.0
    %v190 = vand.u32 %v184, 2147483648
    %v191 = vsel %vm189, %v190, %v188
    %s192 = smul.f32 %s163, %s163
    %s193 = smul.f32 %s165, %s165
    %s194 = sadd.f32 %s192, %s193
    %v195 = vstv %s194
    %v196 = vrsqrt.pop %v195
    %v197 = vmul.f32 %v195, %v196
    %vm198 = vcmp.eq.f32.partialorder %v195, inf
    %v199 = vsel %vm198, %v195, %v197
    %vm200 = vcmp.eq.f32.partialorder %v195, 0.0
    %v201 = vand.u32 %v195, 2147483648
    %v202 = vsel %vm200, %v201, %v199
    %s203 = vtos %v202
    %v204 = vmul.f32 %v171, %v174
    %v205 = vmul.f32 %v173, %v176
    %207 = vrot.lane.b32.xlu0 %v205, 127
    %v208 = vpop.permute.xlu0 %207
    %v210 = vadd.f32 %v204, %v208
    %v211 = vstv %s203
    %v212 = vmul.f32 %v191, %v211
    %v213 = vadd.f32 %v212, 1e-06
    %v214 = vrcp.pop %v213
    %v215 = vmul.f32 %v210, %v214
    %217 = vrot.lane.b32.xlu0 %v175, 126
    %v218 = vpop.permute.xlu0 %217
    %v220 = vmul.f32 %v171, %v218
    %222 = vrot.lane.b32.xlu0 %v177, 126
    %v223 = vpop.permute.xlu0 %222
    %v225 = vmul.f32 %v173, %v223
    %227 = vrot.lane.b32.xlu0 %v225, 127
    %v228 = vpop.permute.xlu0 %227
    %v230 = vadd.f32 %v220, %v228
    %v231 = vsub.f32 0.0, %v230
    %v232 = vmul.f32 %v175, %v175
    %v233 = vmul.f32 %v177, %v177
    %235 = vrot.lane.b32.xlu0 %v233, 127
    %v236 = vpop.permute.xlu0 %235
    %v238 = vadd.f32 %v232, %v236
    %v239 = vadd.f32 %v238, 1e-06
    %241 = vrot.lane.b32.xlu0 %v239, 126
    %v242 = vpop.permute.xlu0 %241
    %v244 = vrcp.pop %v242
    %v245 = vmul.f32 %v231, %v244
    %v246 = vmul.f32 %v245, %v218
    %v247 = vadd.f32 %v171, %v246
    %248 = vrot.lane.b32.xlu0 %v177, 125
    %v249 = vpop.permute.xlu0 %248
    %v251 = vmul.f32 %v245, %v249
    %253 = vrot.lane.b32.xlu0 %v251, 1
    %v254 = vpop.permute.xlu0 %253
    %v256 = vadd.f32 %v173, %v254
    %v257 = vmul.f32 %v247, %v247
    %v258 = vmul.f32 %v256, %v256
    %260 = vrot.lane.b32.xlu0 %v258, 127
    %v261 = vpop.permute.xlu0 %260
    %v263 = vadd.f32 %v257, %v261
    %v264 = vrsqrt.pop %v263
    %v265 = vmul.f32 %v263, %v264
    %vm266 = vcmp.eq.f32.partialorder %v263, inf
    %v267 = vsel %vm266, %v263, %v265
    %vm268 = vcmp.eq.f32.partialorder %v263, 0.0
    %v269 = vand.u32 %v263, 2147483648
    %v270 = vsel %vm268, %v269, %v267
    %272 = vset.pattern.permute.xlu0 0
    %273 = vperm.xlu0 %272, %v191
    %v274 = vpop.permute.xlu0 %273
    %v276 = vlaneseq
    %v277 = vshrl.u32 %v276, 7
    %v278 = vsub.s32 0, %v277
    %v279 = vrot.slane %v54, %v278
    %v280 = vmul.f32 %v274, %v279
    %282 = vset.pattern.permute.xlu0 0
    %283 = vperm.xlu0 %282, %v215
    %v284 = vpop.permute.xlu0 %283
    %v286 = vlaneseq
    %v287 = vshrl.u32 %v286, 7
    %v288 = vsub.s32 1, %v287
    %v289 = vrot.slane %v54, %v288
    %v290 = vmul.f32 %v284, %v289
    %v291 = vadd.f32 %v280, %v290
    %293 = vset.pattern.permute.xlu0 0
    %294 = vperm.xlu0 %293, %v270
    %v295 = vpop.permute.xlu0 %294
    %v297 = vlaneseq
    %v298 = vshrl.u32 %v297, 7
    %v299 = vsub.s32 2, %v298
    %v300 = vrot.slane %v54, %v299
    %v301 = vmul.f32 %v295, %v300
    %v302 = vadd.f32 %v291, %v301
    %v304 = vlaneseq
    %v305 = vshrl.u32 %v304, 7
    %v306 = vsub.s32 0, %v305
    %v307 = vrot.slane %v55, %v306
    %v309 = vadd.f32 %v302, %v307
    %v310 = vmax.f32 %v309, 0.0
    %v312 = vlaneseq
    %v313 = vshrl.u32 %v312, 7
    %v314 = vsub.s32 0, %v313
    %v315 = vrot.slane %v60, %v314
    %v318 = vsel %vm81, %v310, 0
    %320 = vmatprep.subr.mxu0 0.0
    %321 = vmatpush1.msra.mxu0 0.0
    %322 = vmatprep.subr.mxu0 0.0
    %323 = vmatpush1.msra.mxu0 0.0
    %324 = vmatprep.subr.mxu0 0.0
    %325 = vmatpush1.msra.mxu0 0.0
    %326 = vmatprep.subr.mxu0 0.0
    %327 = vmatpush1.msra.mxu0 0.0
    %328 = vmatprep.subr.mxu0 0.0
    %329 = vmatpush1.msra.mxu0 0.0
    %330 = vmatprep.subr.mxu0 0.0
    %331 = vmatpush1.msra.mxu0 0.0
    %332 = vmatprep.subr.mxu0 0.0
    %333 = vmatpush1.msra.mxu0 0.0
    %334 = vmatprep.subr.mxu0 0.0
    %335 = vmatpush1.msra.mxu0 0.0
    %336 = vmatprep.subr.mxu0 0.0
    %337 = vmatpush1.msra.mxu0 0.0
    %338 = vmatprep.subr.mxu0 0.0
    %339 = vmatpush1.msra.mxu0 0.0
    %340 = vmatprep.subr.mxu0 0.0
    %341 = vmatpush1.msra.mxu0 0.0
    %342 = vmatprep.subr.mxu0 0.0
    %343 = vmatpush1.msra.mxu0 0.0
    %344 = vmatprep.subr.mxu0 0.0
    %345 = vmatpush1.msra.mxu0 %v59
    %346 = vmatprep.subr.mxu0 0.0
    %347 = vmatpush1.msra.mxu0 %v58
    %348 = vmatprep.subr.mxu0 0.0
    %349 = vmatpush1.msra.mxu0 %v57
    %350 = vmatprep.subr.mxu0 0.0
    %351 = vmatpush1.msra.mxu0 %v56
    %352 = vmatprep.subr.mxu0 0.0
    %353 = vmatpush2.msra.mxu0 0.0
    %354 = vmatprep.subr.mxu0 0.0
    %355 = vmatpush2.msra.mxu0 0.0
    %356 = vmatprep.subr.mxu0 0.0
    %357 = vmatpush2.msra.mxu0 0.0
    %358 = vmatprep.subr.mxu0 0.0
    %359 = vmatpush2.msra.mxu0 0.0
    %360 = vmatprep.subr.mxu0 0.0
    %361 = vmatpush2.msra.mxu0 0.0
    %362 = vmatprep.subr.mxu0 0.0
    %363 = vmatpush2.msra.mxu0 0.0
    %364 = vmatprep.subr.mxu0 0.0
    %365 = vmatpush2.msra.mxu0 0.0
    %366 = vmatprep.subr.mxu0 0.0
    %367 = vmatpush2.msra.mxu0 0.0
    %368 = vmatprep.subr.mxu0 0.0
    %369 = vmatpush2.msra.mxu0 0.0
    %370 = vmatprep.subr.mxu0 0.0
    %371 = vmatpush2.msra.mxu0 0.0
    %372 = vmatprep.subr.mxu0 0.0
    %373 = vmatpush2.msra.mxu0 0.0
    %374 = vmatprep.subr.mxu0 0.0
    %375 = vmatpush2.msra.mxu0 0.0
    %376 = vmatprep.subr.mxu0 0.0
    %377 = vmatpush2.msra.mxu0 0.0
    %378 = vmatprep.subr.mxu0 0.0
    %379 = vmatpush2.msra.mxu0 0.0
    %380 = vmatprep.subr.mxu0 0.0
    %381 = vmatpush2.msra.mxu0 0.0
    %382 = vmatprep.subr.mxu0 0.0
    %383 = vmatpush2.msra.mxu0 0.0
    %384 = vmatprep.mubr.f32.mxu0 0.0
    %385 = vmatmul.mubr.f32.gmra.mxu0 %v318
    %v386 = vpop.f32.mrf.mxu0
    %v387 = vadd.f32 %v315, %v386
    %v388 = vpop.f32.mrf.mxu0
    %389 = vdwg.mxu0
    %v390 = vmax.f32 %v387, 0.0
    %v392 = vlaneseq
    %v393 = vshrl.u32 %v392, 7
    %v394 = vsub.s32 0, %v393
    %v395 = vrot.slane %v69, %v394
    %vm397 = vcmask 523264
    %v399 = vsel %vm397, %v390, 0
    %401 = vmatprep.subr.mxu0 0.0
    %402 = vmatpush1.msra.mxu0 0.0
    %403 = vmatprep.subr.mxu0 0.0
    %404 = vmatpush1.msra.mxu0 0.0
    %405 = vmatprep.subr.mxu0 0.0
    %406 = vmatpush1.msra.mxu0 0.0
    %407 = vmatprep.subr.mxu0 0.0
    %408 = vmatpush1.msra.mxu0 0.0
    %409 = vmatprep.subr.mxu0 0.0
    %410 = vmatpush1.msra.mxu0 0.0
    %411 = vmatprep.subr.mxu0 0.0
    %412 = vmatpush1.msra.mxu0 0.0
    %413 = vmatprep.subr.mxu0 0.0
    %414 = vmatpush1.msra.mxu0 0.0
    %415 = vmatprep.subr.mxu0 0.0
    %416 = vmatpush1.msra.mxu0 0.0
    %417 = vmatprep.subr.mxu0 0.0
    %418 = vmatpush1.msra.mxu0 %v68
    %419 = vmatprep.subr.mxu0 0.0
    %420 = vmatpush1.msra.mxu0 %v67
    %421 = vmatprep.subr.mxu0 0.0
    %422 = vmatpush1.msra.mxu0 %v66
    %423 = vmatprep.subr.mxu0 0.0
    %424 = vmatpush1.msra.mxu0 %v65
    %425 = vmatprep.subr.mxu0 0.0
    %426 = vmatpush1.msra.mxu0 %v64
    %427 = vmatprep.subr.mxu0 0.0
    %428 = vmatpush1.msra.mxu0 %v63
    %429 = vmatprep.subr.mxu0 0.0
    %430 = vmatpush1.msra.mxu0 %v62
    %431 = vmatprep.subr.mxu0 0.0
    %432 = vmatpush1.msra.mxu0 %v61
    %433 = vmatprep.subr.mxu0 0.0
    %434 = vmatpush2.msra.mxu0 0.0
    %435 = vmatprep.subr.mxu0 0.0
    %436 = vmatpush2.msra.mxu0 0.0
    %437 = vmatprep.subr.mxu0 0.0
    %438 = vmatpush2.msra.mxu0 0.0
    %439 = vmatprep.subr.mxu0 0.0
    %440 = vmatpush2.msra.mxu0 0.0
    %441 = vmatprep.subr.mxu0 0.0
    %442 = vmatpush2.msra.mxu0 0.0
    %443 = vmatprep.subr.mxu0 0.0
    %444 = vmatpush2.msra.mxu0 0.0
    %445 = vmatprep.subr.mxu0 0.0
    %446 = vmatpush2.msra.mxu0 0.0
    %447 = vmatprep.subr.mxu0 0.0
    %448 = vmatpush2.msra.mxu0 0.0
    %449 = vmatprep.subr.mxu0 0.0
    %450 = vmatpush2.msra.mxu0 0.0
    %451 = vmatprep.subr.mxu0 0.0
    %452 = vmatpush2.msra.mxu0 0.0
    %453 = vmatprep.subr.mxu0 0.0
    %454 = vmatpush2.msra.mxu0 0.0
    %455 = vmatprep.subr.mxu0 0.0
    %456 = vmatpush2.msra.mxu0 0.0
    %457 = vmatprep.subr.mxu0 0.0
    %458 = vmatpush2.msra.mxu0 0.0
    %459 = vmatprep.subr.mxu0 0.0
    %460 = vmatpush2.msra.mxu0 0.0
    %461 = vmatprep.subr.mxu0 0.0
    %462 = vmatpush2.msra.mxu0 0.0
    %463 = vmatprep.subr.mxu0 0.0
    %464 = vmatpush2.msra.mxu0 0.0
    %465 = vmatprep.mubr.f32.mxu0 0.0
    %466 = vmatmul.mubr.f32.gmra.mxu0 %v399
    %v467 = vpop.f32.mrf.mxu0
    %v468 = vadd.f32 %v395, %v467
    %v469 = vpop.f32.mrf.mxu0
    %470 = vdwg.mxu0
    %v471 = vmul.f32 %v468, %v152
    %vm472 = vcmask 130048
    %v473 = vsel %vm472, %v471, 0.0
    %474 = vadd.xlane.f32.xlu0 %v473
    %v475 = vpop.xlane.xlu0 %474
    %v476 = vstv %s167
    %vm477 = vcmp.eq.f32.partialorder %v52, %v476
    %v478 = vstv %s157
    %vm479 = vcmp.eq.s32.totalorder %v156, %v478
    %v480 = vsel %vm479, -1000.0, %v475
    %v481 = vsel %vm477, %v480, -1e+30
    %vm482 = vcmask 39968
    %v483 = vsel %vm482, %v481, -inf
    %v484 = vrot.slane %v483, 4
    %v485 = vmax.f32 %v483, %v484
    %v486 = vrot.slane %v485, 2
    %v487 = vmax.f32 %v485, %v486
    %v488 = vrot.slane %v487, 1
    %v489 = vmax.f32 %v487, %v488
    %v490 = vsub.f32 %v481, %v489
    %v491 = vmul.f32 %v490, 1.442695
    %v492 = vpow.pop %v491
    %v493 = vsel %vm482, %v492, 0.0
    %v494 = vrot.slane %v493, 4
    %v495 = vadd.f32 %v493, %v494
    %v496 = vrot.slane %v495, 2
    %v497 = vadd.f32 %v495, %v496
    %v498 = vrot.slane %v497, 1
    %v499 = vadd.f32 %v497, %v498
    %v500 = vrcp.pop %v499
    %v501 = vmul.f32 %v492, %v500
    %503 = vset.pattern.permute.xlu0 4
    %504 = vperm.xlu0 %503, %v501
    %v505 = vpop.permute.xlu0 %504
    %v507 = vmul.f32 %v505, %v53
    %v508 = vsel %vm81, %v507, 0.0
    %v509 = vrot.slane %v508, 4
    %v510 = vadd.f32 %v508, %v509
    %v511 = vrot.slane %v510, 2
    %v512 = vadd.f32 %v510, %v511
    %v513 = vrot.slane %v512, 1
    %v514 = vadd.f32 %v512, %v513
    %v515 = vstv %s169
    %v516 = vmul.f32 %v514, %v515
    %vm517 = vcmp.eq.s32.totalorder %v156, 0
    %v518 = vsel %vm517, 1, 0
    %v519 = vcvt.s32.f32 %v518
    %v520 = vmul.f32 %v519, %v516
    %v521 = vadd.f32 %v520, 0.0
    %s522 = sadd.s32 %s157, 1
    %s523 = smul.u32 %s522, 128
    %s524 = sld [smem:[#allocation2 + %s523]]
    %s525 = sadd.s32 %s523, 1
    %s526 = sld [smem:[#allocation2 + %s525]]
    %s527 = sadd.s32 %s523, 2
    %s528 = sld [smem:[#allocation2 + %s527]]
    %s529 = sadd.s32 %s523, 3
    %s530 = sld [smem:[#allocation2 + %s529]]
    %s531 = sadd.s32 %s523, 4
    %s532 = sld [smem:[#allocation2 + %s531]]
    %s533 = sadd.s32 %s523, 5
    %s534 = sld [smem:[#allocation2 + %s533]]
    %v535 = vstv %s524
    %v536 = vsub.f32 %v535, %v52
    %v537 = vstv %s526
    %v538 = vsub.f32 %v537, %v52
    %v539 = vstv %s528
    %v540 = vsub.f32 %v539, %v52
    %v541 = vstv %s530
    %v542 = vsub.f32 %v541, %v52
    %v543 = vmul.f32 %v536, %v536
    %v544 = vmul.f32 %v538, %v538
    %546 = vrot.lane.b32.xlu0 %v544, 127
    %v547 = vpop.permute.xlu0 %546
    %v549 = vadd.f32 %v543, %v547
    %v550 = vrsqrt.pop %v549
    %v551 = vmul.f32 %v549, %v550
    %vm552 = vcmp.eq.f32.partialorder %v549, inf
    %v553 = vsel %vm552, %v549, %v551
    %vm554 = vcmp.eq.f32.partialorder %v549, 0.0
    %v555 = vand.u32 %v549, 2147483648
    %v556 = vsel %vm554, %v555, %v553
    %s557 = smul.f32 %s528, %s528
    %s558 = smul.f32 %s530, %s530
    %s559 = sadd.f32 %s557, %s558
    %v560 = vstv %s559
    %v561 = vrsqrt.pop %v560
    %v562 = vmul.f32 %v560, %v561
    %vm563 = vcmp.eq.f32.partialorder %v560, inf
    %v564 = vsel %vm563, %v560, %v562
    %vm565 = vcmp.eq.f32.partialorder %v560, 0.0
    %v566 = vand.u32 %v560, 2147483648
    %v567 = vsel %vm565, %v566, %v564
    %s568 = vtos %v567
    %v569 = vmul.f32 %v536, %v539
    %v570 = vmul.f32 %v538, %v541
    %572 = vrot.lane.b32.xlu0 %v570, 127
    %v573 = vpop.permute.xlu0 %572
    %v575 = vadd.f32 %v569, %v573
    %v576 = vstv %s568
    %v577 = vmul.f32 %v556, %v576
    %v578 = vadd.f32 %v577, 1e-06
    %v579 = vrcp.pop %v578
    %v580 = vmul.f32 %v575, %v579
    %582 = vrot.lane.b32.xlu0 %v540, 126
    %v583 = vpop.permute.xlu0 %582
    %v585 = vmul.f32 %v536, %v583
    %587 = vrot.lane.b32.xlu0 %v542, 126
    %v588 = vpop.permute.xlu0 %587
    %v590 = vmul.f32 %v538, %v588
    %592 = vrot.lane.b32.xlu0 %v590, 127
    %v593 = vpop.permute.xlu0 %592
    %v595 = vadd.f32 %v585, %v593
    %v596 = vsub.f32 0.0, %v595
    %v597 = vmul.f32 %v540, %v540
    %v598 = vmul.f32 %v542, %v542
    %600 = vrot.lane.b32.xlu0 %v598, 127
    %v601 = vpop.permute.xlu0 %600
    %v603 = vadd.f32 %v597, %v601
    %v604 = vadd.f32 %v603, 1e-06
    %606 = vrot.lane.b32.xlu0 %v604, 126
    %v607 = vpop.permute.xlu0 %606
    %v609 = vrcp.pop %v607
    %v610 = vmul.f32 %v596, %v609
    %v611 = vmul.f32 %v610, %v583
    %v612 = vadd.f32 %v536, %v611
    %613 = vrot.lane.b32.xlu0 %v542, 125
    %v614 = vpop.permute.xlu0 %613
    %v616 = vmul.f32 %v610, %v614
    %618 = vrot.lane.b32.xlu0 %v616, 1
    %v619 = vpop.permute.xlu0 %618
    %v621 = vadd.f32 %v538, %v619
    %v622 = vmul.f32 %v612, %v612
    %v623 = vmul.f32 %v621, %v621
    %625 = vrot.lane.b32.xlu0 %v623, 127
    %v626 = vpop.permute.xlu0 %625
    %v628 = vadd.f32 %v622, %v626
    %v629 = vrsqrt.pop %v628
    %v630 = vmul.f32 %v628, %v629
    %vm631 = vcmp.eq.f32.partialorder %v628, inf
    %v632 = vsel %vm631, %v628, %v630
    %vm633 = vcmp.eq.f32.partialorder %v628, 0.0
    %v634 = vand.u32 %v628, 2147483648
    %v635 = vsel %vm633, %v634, %v632
    %637 = vset.pattern.permute.xlu0 0
    %638 = vperm.xlu0 %637, %v556
    %v639 = vpop.permute.xlu0 %638
    %v641 = vmul.f32 %v639, %v279
    %643 = vset.pattern.permute.xlu0 0
    %644 = vperm.xlu0 %643, %v580
    %v645 = vpop.permute.xlu0 %644
    %v647 = vmul.f32 %v645, %v289
    %v648 = vadd.f32 %v641, %v647
    %650 = vset.pattern.permute.xlu0 0
    %651 = vperm.xlu0 %650, %v635
    %v652 = vpop.permute.xlu0 %651
    %v654 = vmul.f32 %v652, %v300
    %v655 = vadd.f32 %v648, %v654
    %v656 = vadd.f32 %v655, %v307
    %v657 = vmax.f32 %v656, 0.0
    %v659 = vsel %vm81, %v657, 0
    %661 = vmatprep.subr.mxu0 0.0
    %662 = vmatpush1.msra.mxu0 0.0
    %663 = vmatprep.subr.mxu0 0.0
    %664 = vmatpush1.msra.mxu0 0.0
    %665 = vmatprep.subr.mxu0 0.0
    %666 = vmatpush1.msra.mxu0 0.0
    %667 = vmatprep.subr.mxu0 0.0
    %668 = vmatpush1.msra.mxu0 0.0
    %669 = vmatprep.subr.mxu0 0.0
    %670 = vmatpush1.msra.mxu0 0.0
    %671 = vmatprep.subr.mxu0 0.0
    %672 = vmatpush1.msra.mxu0 0.0
    %673 = vmatprep.subr.mxu0 0.0
    %674 = vmatpush1.msra.mxu0 0.0
    %675 = vmatprep.subr.mxu0 0.0
    %676 = vmatpush1.msra.mxu0 0.0
    %677 = vmatprep.subr.mxu0 0.0
    %678 = vmatpush1.msra.mxu0 0.0
    %679 = vmatprep.subr.mxu0 0.0
    %680 = vmatpush1.msra.mxu0 0.0
    %681 = vmatprep.subr.mxu0 0.0
    %682 = vmatpush1.msra.mxu0 0.0
    %683 = vmatprep.subr.mxu0 0.0
    %684 = vmatpush1.msra.mxu0 0.0
    %685 = vmatprep.subr.mxu0 0.0
    %686 = vmatpush1.msra.mxu0 %v59
    %687 = vmatprep.subr.mxu0 0.0
    %688 = vmatpush1.msra.mxu0 %v58
    %689 = vmatprep.subr.mxu0 0.0
    %690 = vmatpush1.msra.mxu0 %v57
    %691 = vmatprep.subr.mxu0 0.0
    %692 = vmatpush1.msra.mxu0 %v56
    %693 = vmatprep.subr.mxu0 0.0
    %694 = vmatpush2.msra.mxu0 0.0
    %695 = vmatprep.subr.mxu0 0.0
    %696 = vmatpush2.msra.mxu0 0.0
    %697 = vmatprep.subr.mxu0 0.0
    %698 = vmatpush2.msra.mxu0 0.0
    %699 = vmatprep.subr.mxu0 0.0
    %700 = vmatpush2.msra.mxu0 0.0
    %701 = vmatprep.subr.mxu0 0.0
    %702 = vmatpush2.msra.mxu0 0.0
    %703 = vmatprep.subr.mxu0 0.0
    %704 = vmatpush2.msra.mxu0 0.0
    %705 = vmatprep.subr.mxu0 0.0
    %706 = vmatpush2.msra.mxu0 0.0
    %707 = vmatprep.subr.mxu0 0.0
    %708 = vmatpush2.msra.mxu0 0.0
    %709 = vmatprep.subr.mxu0 0.0
    %710 = vmatpush2.msra.mxu0 0.0
    %711 = vmatprep.subr.mxu0 0.0
    %712 = vmatpush2.msra.mxu0 0.0
    %713 = vmatprep.subr.mxu0 0.0
    %714 = vmatpush2.msra.mxu0 0.0
    %715 = vmatprep.subr.mxu0 0.0
    %716 = vmatpush2.msra.mxu0 0.0
    %717 = vmatprep.subr.mxu0 0.0
    %718 = vmatpush2.msra.mxu0 0.0
    %719 = vmatprep.subr.mxu0 0.0
    %720 = vmatpush2.msra.mxu0 0.0
    %721 = vmatprep.subr.mxu0 0.0
    %722 = vmatpush2.msra.mxu0 0.0
    %723 = vmatprep.subr.mxu0 0.0
    %724 = vmatpush2.msra.mxu0 0.0
    %725 = vmatprep.mubr.f32.mxu0 0.0
    %726 = vmatmul.mubr.f32.gmra.mxu0 %v659
    %v727 = vpop.f32.mrf.mxu0
    %v728 = vadd.f32 %v315, %v727
    %v729 = vpop.f32.mrf.mxu0
    %730 = vdwg.mxu0
    %v731 = vmax.f32 %v728, 0.0
    %v733 = vsel %vm397, %v731, 0
    %735 = vmatprep.subr.mxu0 0.0
    %736 = vmatpush1.msra.mxu0 0.0
    %737 = vmatprep.subr.mxu0 0.0
    %738 = vmatpush1.msra.mxu0 0.0
    %739 = vmatprep.subr.mxu0 0.0
    %740 = vmatpush1.msra.mxu0 0.0
    %741 = vmatprep.subr.mxu0 0.0
    %742 = vmatpush1.msra.mxu0 0.0
    %743 = vmatprep.subr.mxu0 0.0
    %744 = vmatpush1.msra.mxu0 0.0
    %745 = vmatprep.subr.mxu0 0.0
    %746 = vmatpush1.msra.mxu0 0.0
    %747 = vmatprep.subr.mxu0 0.0
    %748 = vmatpush1.msra.mxu0 0.0
    %749 = vmatprep.subr.mxu0 0.0
    %750 = vmatpush1.msra.mxu0 0.0
    %751 = vmatprep.subr.mxu0 0.0
    %752 = vmatpush1.msra.mxu0 %v68
    %753 = vmatprep.subr.mxu0 0.0
    %754 = vmatpush1.msra.mxu0 %v67
    %755 = vmatprep.subr.mxu0 0.0
    %756 = vmatpush1.msra.mxu0 %v66
    %757 = vmatprep.subr.mxu0 0.0
    %758 = vmatpush1.msra.mxu0 %v65
    %759 = vmatprep.subr.mxu0 0.0
    %760 = vmatpush1.msra.mxu0 %v64
    %761 = vmatprep.subr.mxu0 0.0
    %762 = vmatpush1.msra.mxu0 %v63
    %763 = vmatprep.subr.mxu0 0.0
    %764 = vmatpush1.msra.mxu0 %v62
    %765 = vmatprep.subr.mxu0 0.0
    %766 = vmatpush1.msra.mxu0 %v61
    %767 = vmatprep.subr.mxu0 0.0
    %768 = vmatpush2.msra.mxu0 0.0
    %769 = vmatprep.subr.mxu0 0.0
    %770 = vmatpush2.msra.mxu0 0.0
    %771 = vmatprep.subr.mxu0 0.0
    %772 = vmatpush2.msra.mxu0 0.0
    %773 = vmatprep.subr.mxu0 0.0
    %774 = vmatpush2.msra.mxu0 0.0
    %775 = vmatprep.subr.mxu0 0.0
    %776 = vmatpush2.msra.mxu0 0.0
    %777 = vmatprep.subr.mxu0 0.0
    %778 = vmatpush2.msra.mxu0 0.0
    %779 = vmatprep.subr.mxu0 0.0
    %780 = vmatpush2.msra.mxu0 0.0
    %781 = vmatprep.subr.mxu0 0.0
    %782 = vmatpush2.msra.mxu0 0.0
    %783 = vmatprep.subr.mxu0 0.0
    %784 = vmatpush2.msra.mxu0 0.0
    %785 = vmatprep.subr.mxu0 0.0
    %786 = vmatpush2.msra.mxu0 0.0
    %787 = vmatprep.subr.mxu0 0.0
    %788 = vmatpush2.msra.mxu0 0.0
    %789 = vmatprep.subr.mxu0 0.0
    %790 = vmatpush2.msra.mxu0 0.0
    %791 = vmatprep.subr.mxu0 0.0
    %792 = vmatpush2.msra.mxu0 0.0
    %793 = vmatprep.subr.mxu0 0.0
    %794 = vmatpush2.msra.mxu0 0.0
    %795 = vmatprep.subr.mxu0 0.0
    %796 = vmatpush2.msra.mxu0 0.0
    %797 = vmatprep.subr.mxu0 0.0
    %798 = vmatpush2.msra.mxu0 0.0
    %799 = vmatprep.mubr.f32.mxu0 0.0
    %800 = vmatmul.mubr.f32.gmra.mxu0 %v733
    %v801 = vpop.f32.mrf.mxu0
    %v802 = vadd.f32 %v395, %v801
    %v803 = vpop.f32.mrf.mxu0
    %804 = vdwg.mxu0
    %v805 = vmul.f32 %v802, %v152
    %v806 = vsel %vm472, %v805, 0.0
    %807 = vadd.xlane.f32.xlu0 %v806
    %v808 = vpop.xlane.xlu0 %807
    %v809 = vstv %s532
    %vm810 = vcmp.eq.f32.partialorder %v52, %v809
    %v811 = vstv %s522
    %vm812 = vcmp.eq.s32.totalorder %v156, %v811
    %v813 = vsel %vm812, -1000.0, %v808
    %v814 = vsel %vm810, %v813, -1e+30
    %v815 = vsel %vm482, %v814, -inf
    %v816 = vrot.slane %v815, 4
    %v817 = vmax.f32 %v815, %v816
    %v818 = vrot.slane %v817, 2
    %v819 = vmax.f32 %v817, %v818
    %v820 = vrot.slane %v819, 1
    %v821 = vmax.f32 %v819, %v820
    %v822 = vsub.f32 %v814, %v821
    %v823 = vmul.f32 %v822, 1.442695
    %v824 = vpow.pop %v823
    %v825 = vsel %vm482, %v824, 0.0
    %v826 = vrot.slane %v825, 4
    %v827 = vadd.f32 %v825, %v826
    %v828 = vrot.slane %v827, 2
    %v829 = vadd.f32 %v827, %v828
    %v830 = vrot.slane %v829, 1
    %v831 = vadd.f32 %v829, %v830
    %v832 = vrcp.pop %v831
    %v833 = vmul.f32 %v824, %v832
    %835 = vset.pattern.permute.xlu0 4
    %836 = vperm.xlu0 %835, %v833
    %v837 = vpop.permute.xlu0 %836
    %v839 = vmul.f32 %v837, %v53
    %v840 = vsel %vm81, %v839, 0.0
    %v841 = vrot.slane %v840, 4
    %v842 = vadd.f32 %v840, %v841
    %v843 = vrot.slane %v842, 2
    %v844 = vadd.f32 %v842, %v843
    %v845 = vrot.slane %v844, 1
    %v846 = vadd.f32 %v844, %v845
    %v847 = vstv %s534
    %v848 = vmul.f32 %v846, %v847
    %vm849 = vcmp.eq.s32.totalorder %v156, 1
    %v850 = vsel %vm849, 1, 0
    %v851 = vcvt.s32.f32 %v850
    %v852 = vmul.f32 %v851, %v848
    %v853 = vadd.f32 %v521, %v852
    %s854 = sadd.s32 %s157, 2
    %s855 = smul.u32 %s854, 128
    %s856 = sld [smem:[#allocation2 + %s855]]
    %s857 = sadd.s32 %s855, 1
    %s858 = sld [smem:[#allocation2 + %s857]]
    %s859 = sadd.s32 %s855, 2
    %s860 = sld [smem:[#allocation2 + %s859]]
    %s861 = sadd.s32 %s855, 3
    %s862 = sld [smem:[#allocation2 + %s861]]
    %s863 = sadd.s32 %s855, 4
    %s864 = sld [smem:[#allocation2 + %s863]]
    %s865 = sadd.s32 %s855, 5
    %s866 = sld [smem:[#allocation2 + %s865]]
    %v867 = vstv %s856
    %v868 = vsub.f32 %v867, %v52
    %v869 = vstv %s858
    %v870 = vsub.f32 %v869, %v52
    %v871 = vstv %s860
    %v872 = vsub.f32 %v871, %v52
    %v873 = vstv %s862
    %v874 = vsub.f32 %v873, %v52
    %v875 = vmul.f32 %v868, %v868
    %v876 = vmul.f32 %v870, %v870
    %878 = vrot.lane.b32.xlu0 %v876, 127
    %v879 = vpop.permute.xlu0 %878
    %v881 = vadd.f32 %v875, %v879
    %v882 = vrsqrt.pop %v881
    %v883 = vmul.f32 %v881, %v882
    %vm884 = vcmp.eq.f32.partialorder %v881, inf
    %v885 = vsel %vm884, %v881, %v883
    %vm886 = vcmp.eq.f32.partialorder %v881, 0.0
    %v887 = vand.u32 %v881, 2147483648
    %v888 = vsel %vm886, %v887, %v885
    %s889 = smul.f32 %s860, %s860
    %s890 = smul.f32 %s862, %s862
    %s891 = sadd.f32 %s889, %s890
    %v892 = vstv %s891
    %v893 = vrsqrt.pop %v892
    %v894 = vmul.f32 %v892, %v893
    %vm895 = vcmp.eq.f32.partialorder %v892, inf
    %v896 = vsel %vm895, %v892, %v894
    %vm897 = vcmp.eq.f32.partialorder %v892, 0.0
    %v898 = vand.u32 %v892, 2147483648
    %v899 = vsel %vm897, %v898, %v896
    %s900 = vtos %v899
    %v901 = vmul.f32 %v868, %v871
    %v902 = vmul.f32 %v870, %v873
    %904 = vrot.lane.b32.xlu0 %v902, 127
    %v905 = vpop.permute.xlu0 %904
    %v907 = vadd.f32 %v901, %v905
    %v908 = vstv %s900
    %v909 = vmul.f32 %v888, %v908
    %v910 = vadd.f32 %v909, 1e-06
    %v911 = vrcp.pop %v910
    %v912 = vmul.f32 %v907, %v911
    %914 = vrot.lane.b32.xlu0 %v872, 126
    %v915 = vpop.permute.xlu0 %914
    %v917 = vmul.f32 %v868, %v915
    %919 = vrot.lane.b32.xlu0 %v874, 126
    %v920 = vpop.permute.xlu0 %919
    %v922 = vmul.f32 %v870, %v920
    %924 = vrot.lane.b32.xlu0 %v922, 127
    %v925 = vpop.permute.xlu0 %924
    %v927 = vadd.f32 %v917, %v925
    %v928 = vsub.f32 0.0, %v927
    %v929 = vmul.f32 %v872, %v872
    %v930 = vmul.f32 %v874, %v874
    %932 = vrot.lane.b32.xlu0 %v930, 127
    %v933 = vpop.permute.xlu0 %932
    %v935 = vadd.f32 %v929, %v933
    %v936 = vadd.f32 %v935, 1e-06
    %938 = vrot.lane.b32.xlu0 %v936, 126
    %v939 = vpop.permute.xlu0 %938
    %v941 = vrcp.pop %v939
    %v942 = vmul.f32 %v928, %v941
    %v943 = vmul.f32 %v942, %v915
    %v944 = vadd.f32 %v868, %v943
    %945 = vrot.lane.b32.xlu0 %v874, 125
    %v946 = vpop.permute.xlu0 %945
    %v948 = vmul.f32 %v942, %v946
    %950 = vrot.lane.b32.xlu0 %v948, 1
    %v951 = vpop.permute.xlu0 %950
    %v953 = vadd.f32 %v870, %v951
    %v954 = vmul.f32 %v944, %v944
    %v955 = vmul.f32 %v953, %v953
    %957 = vrot.lane.b32.xlu0 %v955, 127
    %v958 = vpop.permute.xlu0 %957
    %v960 = vadd.f32 %v954, %v958
    %v961 = vrsqrt.pop %v960
    %v962 = vmul.f32 %v960, %v961
    %vm963 = vcmp.eq.f32.partialorder %v960, inf
    %v964 = vsel %vm963, %v960, %v962
    %vm965 = vcmp.eq.f32.partialorder %v960, 0.0
    %v966 = vand.u32 %v960, 2147483648
    %v967 = vsel %vm965, %v966, %v964
    %969 = vset.pattern.permute.xlu0 0
    %970 = vperm.xlu0 %969, %v888
    %v971 = vpop.permute.xlu0 %970
    %v973 = vmul.f32 %v971, %v279
    %975 = vset.pattern.permute.xlu0 0
    %976 = vperm.xlu0 %975, %v912
    %v977 = vpop.permute.xlu0 %976
    %v979 = vmul.f32 %v977, %v289
    %v980 = vadd.f32 %v973, %v979
    %982 = vset.pattern.permute.xlu0 0
    %983 = vperm.xlu0 %982, %v967
    %v984 = vpop.permute.xlu0 %983
    %v986 = vmul.f32 %v984, %v300
    %v987 = vadd.f32 %v980, %v986
    %v988 = vadd.f32 %v987, %v307
    %v989 = vmax.f32 %v988, 0.0
    %v991 = vsel %vm81, %v989, 0
    %993 = vmatprep.subr.mxu0 0.0
    %994 = vmatpush1.msra.mxu0 0.0
    %995 = vmatprep.subr.mxu0 0.0
    %996 = vmatpush1.msra.mxu0 0.0
    %997 = vmatprep.subr.mxu0 0.0
    %998 = vmatpush1.msra.mxu0 0.0
    %999 = vmatprep.subr.mxu0 0.0
    %1000 = vmatpush1.msra.mxu0 0.0
    %1001 = vmatprep.subr.mxu0 0.0
    %1002 = vmatpush1.msra.mxu0 0.0
    %1003 = vmatprep.subr.mxu0 0.0
    %1004 = vmatpush1.msra.mxu0 0.0
    %1005 = vmatprep.subr.mxu0 0.0
    %1006 = vmatpush1.msra.mxu0 0.0
    %1007 = vmatprep.subr.mxu0 0.0
    %1008 = vmatpush1.msra.mxu0 0.0
    %1009 = vmatprep.subr.mxu0 0.0
    %1010 = vmatpush1.msra.mxu0 0.0
    %1011 = vmatprep.subr.mxu0 0.0
    %1012 = vmatpush1.msra.mxu0 0.0
    %1013 = vmatprep.subr.mxu0 0.0
    %1014 = vmatpush1.msra.mxu0 0.0
    %1015 = vmatprep.subr.mxu0 0.0
    %1016 = vmatpush1.msra.mxu0 0.0
    %1017 = vmatprep.subr.mxu0 0.0
    %1018 = vmatpush1.msra.mxu0 %v59
    %1019 = vmatprep.subr.mxu0 0.0
    %1020 = vmatpush1.msra.mxu0 %v58
    %1021 = vmatprep.subr.mxu0 0.0
    %1022 = vmatpush1.msra.mxu0 %v57
    %1023 = vmatprep.subr.mxu0 0.0
    %1024 = vmatpush1.msra.mxu0 %v56
    %1025 = vmatprep.subr.mxu0 0.0
    %1026 = vmatpush2.msra.mxu0 0.0
    %1027 = vmatprep.subr.mxu0 0.0
    %1028 = vmatpush2.msra.mxu0 0.0
    %1029 = vmatprep.subr.mxu0 0.0
    %1030 = vmatpush2.msra.mxu0 0.0
    %1031 = vmatprep.subr.mxu0 0.0
    %1032 = vmatpush2.msra.mxu0 0.0
    %1033 = vmatprep.subr.mxu0 0.0
    %1034 = vmatpush2.msra.mxu0 0.0
    %1035 = vmatprep.subr.mxu0 0.0
    %1036 = vmatpush2.msra.mxu0 0.0
    %1037 = vmatprep.subr.mxu0 0.0
    %1038 = vmatpush2.msra.mxu0 0.0
    %1039 = vmatprep.subr.mxu0 0.0
    %1040 = vmatpush2.msra.mxu0 0.0
    %1041 = vmatprep.subr.mxu0 0.0
    %1042 = vmatpush2.msra.mxu0 0.0
    %1043 = vmatprep.subr.mxu0 0.0
    %1044 = vmatpush2.msra.mxu0 0.0
    %1045 = vmatprep.subr.mxu0 0.0
    %1046 = vmatpush2.msra.mxu0 0.0
    %1047 = vmatprep.subr.mxu0 0.0
    %1048 = vmatpush2.msra.mxu0 0.0
    %1049 = vmatprep.subr.mxu0 0.0
    %1050 = vmatpush2.msra.mxu0 0.0
    %1051 = vmatprep.subr.mxu0 0.0
    %1052 = vmatpush2.msra.mxu0 0.0
    %1053 = vmatprep.subr.mxu0 0.0
    %1054 = vmatpush2.msra.mxu0 0.0
    %1055 = vmatprep.subr.mxu0 0.0
    %1056 = vmatpush2.msra.mxu0 0.0
    %1057 = vmatprep.mubr.f32.mxu0 0.0
    %1058 = vmatmul.mubr.f32.gmra.mxu0 %v991
    %v1059 = vpop.f32.mrf.mxu0
    %v1060 = vadd.f32 %v315, %v1059
    %v1061 = vpop.f32.mrf.mxu0
    %1062 = vdwg.mxu0
    %v1063 = vmax.f32 %v1060, 0.0
    %v1065 = vsel %vm397, %v1063, 0
    %1067 = vmatprep.subr.mxu0 0.0
    %1068 = vmatpush1.msra.mxu0 0.0
    %1069 = vmatprep.subr.mxu0 0.0
    %1070 = vmatpush1.msra.mxu0 0.0
    %1071 = vmatprep.subr.mxu0 0.0
    %1072 = vmatpush1.msra.mxu0 0.0
    %1073 = vmatprep.subr.mxu0 0.0
    %1074 = vmatpush1.msra.mxu0 0.0
    %1075 = vmatprep.subr.mxu0 0.0
    %1076 = vmatpush1.msra.mxu0 0.0
    %1077 = vmatprep.subr.mxu0 0.0
    %1078 = vmatpush1.msra.mxu0 0.0
    %1079 = vmatprep.subr.mxu0 0.0
    %1080 = vmatpush1.msra.mxu0 0.0
    %1081 = vmatprep.subr.mxu0 0.0
    %1082 = vmatpush1.msra.mxu0 0.0
    %1083 = vmatprep.subr.mxu0 0.0
    %1084 = vmatpush1.msra.mxu0 %v68
    %1085 = vmatprep.subr.mxu0 0.0
    %1086 = vmatpush1.msra.mxu0 %v67
    %1087 = vmatprep.subr.mxu0 0.0
    %1088 = vmatpush1.msra.mxu0 %v66
    %1089 = vmatprep.subr.mxu0 0.0
    %1090 = vmatpush1.msra.mxu0 %v65
    %1091 = vmatprep.subr.mxu0 0.0
    %1092 = vmatpush1.msra.mxu0 %v64
    %1093 = vmatprep.subr.mxu0 0.0
    %1094 = vmatpush1.msra.mxu0 %v63
    %1095 = vmatprep.subr.mxu0 0.0
    %1096 = vmatpush1.msra.mxu0 %v62
    %1097 = vmatprep.subr.mxu0 0.0
    %1098 = vmatpush1.msra.mxu0 %v61
    %1099 = vmatprep.subr.mxu0 0.0
    %1100 = vmatpush2.msra.mxu0 0.0
    %1101 = vmatprep.subr.mxu0 0.0
    %1102 = vmatpush2.msra.mxu0 0.0
    %1103 = vmatprep.subr.mxu0 0.0
    %1104 = vmatpush2.msra.mxu0 0.0
    %1105 = vmatprep.subr.mxu0 0.0
    %1106 = vmatpush2.msra.mxu0 0.0
    %1107 = vmatprep.subr.mxu0 0.0
    %1108 = vmatpush2.msra.mxu0 0.0
    %1109 = vmatprep.subr.mxu0 0.0
    %1110 = vmatpush2.msra.mxu0 0.0
    %1111 = vmatprep.subr.mxu0 0.0
    %1112 = vmatpush2.msra.mxu0 0.0
    %1113 = vmatprep.subr.mxu0 0.0
    %1114 = vmatpush2.msra.mxu0 0.0
    %1115 = vmatprep.subr.mxu0 0.0
    %1116 = vmatpush2.msra.mxu0 0.0
    %1117 = vmatprep.subr.mxu0 0.0
    %1118 = vmatpush2.msra.mxu0 0.0
    %1119 = vmatprep.subr.mxu0 0.0
    %1120 = vmatpush2.msra.mxu0 0.0
    %1121 = vmatprep.subr.mxu0 0.0
    %1122 = vmatpush2.msra.mxu0 0.0
    %1123 = vmatprep.subr.mxu0 0.0
    %1124 = vmatpush2.msra.mxu0 0.0
    %1125 = vmatprep.subr.mxu0 0.0
    %1126 = vmatpush2.msra.mxu0 0.0
    %1127 = vmatprep.subr.mxu0 0.0
    %1128 = vmatpush2.msra.mxu0 0.0
    %1129 = vmatprep.subr.mxu0 0.0
    %1130 = vmatpush2.msra.mxu0 0.0
    %1131 = vmatprep.mubr.f32.mxu0 0.0
    %1132 = vmatmul.mubr.f32.gmra.mxu0 %v1065
    %v1133 = vpop.f32.mrf.mxu0
    %v1134 = vadd.f32 %v395, %v1133
    %v1135 = vpop.f32.mrf.mxu0
    %1136 = vdwg.mxu0
    %v1137 = vmul.f32 %v1134, %v152
    %v1138 = vsel %vm472, %v1137, 0.0
    %1139 = vadd.xlane.f32.xlu0 %v1138
    %v1140 = vpop.xlane.xlu0 %1139
    %v1141 = vstv %s864
    %vm1142 = vcmp.eq.f32.partialorder %v52, %v1141
    %v1143 = vstv %s854
    %vm1144 = vcmp.eq.s32.totalorder %v156, %v1143
    %v1145 = vsel %vm1144, -1000.0, %v1140
    %v1146 = vsel %vm1142, %v1145, -1e+30
    %v1147 = vsel %vm482, %v1146, -inf
    %v1148 = vrot.slane %v1147, 4
    %v1149 = vmax.f32 %v1147, %v1148
    %v1150 = vrot.slane %v1149, 2
    %v1151 = vmax.f32 %v1149, %v1150
    %v1152 = vrot.slane %v1151, 1
    %v1153 = vmax.f32 %v1151, %v1152
    %v1154 = vsub.f32 %v1146, %v1153
    %v1155 = vmul.f32 %v1154, 1.442695
    %v1156 = vpow.pop %v1155
    %v1157 = vsel %vm482, %v1156, 0.0
    %v1158 = vrot.slane %v1157, 4
    %v1159 = vadd.f32 %v1157, %v1158
    %v1160 = vrot.slane %v1159, 2
    %v1161 = vadd.f32 %v1159, %v1160
    %v1162 = vrot.slane %v1161, 1
    %v1163 = vadd.f32 %v1161, %v1162
    %v1164 = vrcp.pop %v1163
    %v1165 = vmul.f32 %v1156, %v1164
    %1167 = vset.pattern.permute.xlu0 4
    %1168 = vperm.xlu0 %1167, %v1165
    %v1169 = vpop.permute.xlu0 %1168
    %v1171 = vmul.f32 %v1169, %v53
    %v1172 = vsel %vm81, %v1171, 0.0
    %v1173 = vrot.slane %v1172, 4
    %v1174 = vadd.f32 %v1172, %v1173
    %v1175 = vrot.slane %v1174, 2
    %v1176 = vadd.f32 %v1174, %v1175
    %v1177 = vrot.slane %v1176, 1
    %v1178 = vadd.f32 %v1176, %v1177
    %v1179 = vstv %s866
    %v1180 = vmul.f32 %v1178, %v1179
    %vm1181 = vcmp.eq.s32.totalorder %v156, 2
    %v1182 = vsel %vm1181, 1, 0
    %v1183 = vcvt.s32.f32 %v1182
    %v1184 = vmul.f32 %v1183, %v1180
    %v1185 = vadd.f32 %v853, %v1184
    %s1186 = sadd.s32 %s157, 3
    %s1187 = smul.u32 %s1186, 128
    %s1188 = sld [smem:[#allocation2 + %s1187]]
    %s1189 = sadd.s32 %s1187, 1
    %s1190 = sld [smem:[#allocation2 + %s1189]]
    %s1191 = sadd.s32 %s1187, 2
    %s1192 = sld [smem:[#allocation2 + %s1191]]
    %s1193 = sadd.s32 %s1187, 3
    %s1194 = sld [smem:[#allocation2 + %s1193]]
    %s1195 = sadd.s32 %s1187, 4
    %s1196 = sld [smem:[#allocation2 + %s1195]]
    %s1197 = sadd.s32 %s1187, 5
    %s1198 = sld [smem:[#allocation2 + %s1197]]
    %v1199 = vstv %s1188
    %v1200 = vsub.f32 %v1199, %v52
    %v1201 = vstv %s1190
    %v1202 = vsub.f32 %v1201, %v52
    %v1203 = vstv %s1192
    %v1204 = vsub.f32 %v1203, %v52
    %v1205 = vstv %s1194
    %v1206 = vsub.f32 %v1205, %v52
    %v1207 = vmul.f32 %v1200, %v1200
    %v1208 = vmul.f32 %v1202, %v1202
    %1210 = vrot.lane.b32.xlu0 %v1208, 127
    %v1211 = vpop.permute.xlu0 %1210
    %v1213 = vadd.f32 %v1207, %v1211
    %v1214 = vrsqrt.pop %v1213
    %v1215 = vmul.f32 %v1213, %v1214
    %vm1216 = vcmp.eq.f32.partialorder %v1213, inf
    %v1217 = vsel %vm1216, %v1213, %v1215
    %vm1218 = vcmp.eq.f32.partialorder %v1213, 0.0
    %v1219 = vand.u32 %v1213, 2147483648
    %v1220 = vsel %vm1218, %v1219, %v1217
    %s1221 = smul.f32 %s1192, %s1192
    %s1222 = smul.f32 %s1194, %s1194
    %s1223 = sadd.f32 %s1221, %s1222
    %v1224 = vstv %s1223
    %v1225 = vrsqrt.pop %v1224
    %v1226 = vmul.f32 %v1224, %v1225
    %vm1227 = vcmp.eq.f32.partialorder %v1224, inf
    %v1228 = vsel %vm1227, %v1224, %v1226
    %vm1229 = vcmp.eq.f32.partialorder %v1224, 0.0
    %v1230 = vand.u32 %v1224, 2147483648
    %v1231 = vsel %vm1229, %v1230, %v1228
    %s1232 = vtos %v1231
    %v1233 = vmul.f32 %v1200, %v1203
    %v1234 = vmul.f32 %v1202, %v1205
    %1236 = vrot.lane.b32.xlu0 %v1234, 127
    %v1237 = vpop.permute.xlu0 %1236
    %v1239 = vadd.f32 %v1233, %v1237
    %v1240 = vstv %s1232
    %v1241 = vmul.f32 %v1220, %v1240
    %v1242 = vadd.f32 %v1241, 1e-06
    %v1243 = vrcp.pop %v1242
    %v1244 = vmul.f32 %v1239, %v1243
    %1246 = vrot.lane.b32.xlu0 %v1204, 126
    %v1247 = vpop.permute.xlu0 %1246
    %v1249 = vmul.f32 %v1200, %v1247
    %1251 = vrot.lane.b32.xlu0 %v1206, 126
    %v1252 = vpop.permute.xlu0 %1251
    %v1254 = vmul.f32 %v1202, %v1252
    %1256 = vrot.lane.b32.xlu0 %v1254, 127
    %v1257 = vpop.permute.xlu0 %1256
    %v1259 = vadd.f32 %v1249, %v1257
    %v1260 = vsub.f32 0.0, %v1259
    %v1261 = vmul.f32 %v1204, %v1204
    %v1262 = vmul.f32 %v1206, %v1206
    %1264 = vrot.lane.b32.xlu0 %v1262, 127
    %v1265 = vpop.permute.xlu0 %1264
    %v1267 = vadd.f32 %v1261, %v1265
    %v1268 = vadd.f32 %v1267, 1e-06
    %1270 = vrot.lane.b32.xlu0 %v1268, 126
    %v1271 = vpop.permute.xlu0 %1270
    %v1273 = vrcp.pop %v1271
    %v1274 = vmul.f32 %v1260, %v1273
    %v1275 = vmul.f32 %v1274, %v1247
    %v1276 = vadd.f32 %v1200, %v1275
    %1277 = vrot.lane.b32.xlu0 %v1206, 125
    %v1278 = vpop.permute.xlu0 %1277
    %v1280 = vmul.f32 %v1274, %v1278
    %1282 = vrot.lane.b32.xlu0 %v1280, 1
    %v1283 = vpop.permute.xlu0 %1282
    %v1285 = vadd.f32 %v1202, %v1283
    %v1286 = vmul.f32 %v1276, %v1276
    %v1287 = vmul.f32 %v1285, %v1285
    %1289 = vrot.lane.b32.xlu0 %v1287, 127
    %v1290 = vpop.permute.xlu0 %1289
    %v1292 = vadd.f32 %v1286, %v1290
    %v1293 = vrsqrt.pop %v1292
    %v1294 = vmul.f32 %v1292, %v1293
    %vm1295 = vcmp.eq.f32.partialorder %v1292, inf
    %v1296 = vsel %vm1295, %v1292, %v1294
    %vm1297 = vcmp.eq.f32.partialorder %v1292, 0.0
    %v1298 = vand.u32 %v1292, 2147483648
    %v1299 = vsel %vm1297, %v1298, %v1296
    %1301 = vset.pattern.permute.xlu0 0
    %1302 = vperm.xlu0 %1301, %v1220
    %v1303 = vpop.permute.xlu0 %1302
    %v1305 = vmul.f32 %v1303, %v279
    %1307 = vset.pattern.permute.xlu0 0
    %1308 = vperm.xlu0 %1307, %v1244
    %v1309 = vpop.permute.xlu0 %1308
    %v1311 = vmul.f32 %v1309, %v289
    %v1312 = vadd.f32 %v1305, %v1311
    %1314 = vset.pattern.permute.xlu0 0
    %1315 = vperm.xlu0 %1314, %v1299
    %v1316 = vpop.permute.xlu0 %1315
    %v1318 = vmul.f32 %v1316, %v300
    %v1319 = vadd.f32 %v1312, %v1318
    %v1320 = vadd.f32 %v1319, %v307
    %v1321 = vmax.f32 %v1320, 0.0
    %v1323 = vsel %vm81, %v1321, 0
    %1325 = vmatprep.subr.mxu0 0.0
    %1326 = vmatpush1.msra.mxu0 0.0
    %1327 = vmatprep.subr.mxu0 0.0
    %1328 = vmatpush1.msra.mxu0 0.0
    %1329 = vmatprep.subr.mxu0 0.0
    %1330 = vmatpush1.msra.mxu0 0.0
    %1331 = vmatprep.subr.mxu0 0.0
    %1332 = vmatpush1.msra.mxu0 0.0
    %1333 = vmatprep.subr.mxu0 0.0
    %1334 = vmatpush1.msra.mxu0 0.0
    %1335 = vmatprep.subr.mxu0 0.0
    %1336 = vmatpush1.msra.mxu0 0.0
    %1337 = vmatprep.subr.mxu0 0.0
    %1338 = vmatpush1.msra.mxu0 0.0
    %1339 = vmatprep.subr.mxu0 0.0
    %1340 = vmatpush1.msra.mxu0 0.0
    %1341 = vmatprep.subr.mxu0 0.0
    %1342 = vmatpush1.msra.mxu0 0.0
    %1343 = vmatprep.subr.mxu0 0.0
    %1344 = vmatpush1.msra.mxu0 0.0
    %1345 = vmatprep.subr.mxu0 0.0
    %1346 = vmatpush1.msra.mxu0 0.0
    %1347 = vmatprep.subr.mxu0 0.0
    %1348 = vmatpush1.msra.mxu0 0.0
    %1349 = vmatprep.subr.mxu0 0.0
    %1350 = vmatpush1.msra.mxu0 %v59
    %1351 = vmatprep.subr.mxu0 0.0
    %1352 = vmatpush1.msra.mxu0 %v58
    %1353 = vmatprep.subr.mxu0 0.0
    %1354 = vmatpush1.msra.mxu0 %v57
    %1355 = vmatprep.subr.mxu0 0.0
    %1356 = vmatpush1.msra.mxu0 %v56
    %1357 = vmatprep.subr.mxu0 0.0
    %1358 = vmatpush2.msra.mxu0 0.0
    %1359 = vmatprep.subr.mxu0 0.0
    %1360 = vmatpush2.msra.mxu0 0.0
    %1361 = vmatprep.subr.mxu0 0.0
    %1362 = vmatpush2.msra.mxu0 0.0
    %1363 = vmatprep.subr.mxu0 0.0
    %1364 = vmatpush2.msra.mxu0 0.0
    %1365 = vmatprep.subr.mxu0 0.0
    %1366 = vmatpush2.msra.mxu0 0.0
    %1367 = vmatprep.subr.mxu0 0.0
    %1368 = vmatpush2.msra.mxu0 0.0
    %1369 = vmatprep.subr.mxu0 0.0
    %1370 = vmatpush2.msra.mxu0 0.0
    %1371 = vmatprep.subr.mxu0 0.0
    %1372 = vmatpush2.msra.mxu0 0.0
    %1373 = vmatprep.subr.mxu0 0.0
    %1374 = vmatpush2.msra.mxu0 0.0
    %1375 = vmatprep.subr.mxu0 0.0
    %1376 = vmatpush2.msra.mxu0 0.0
    %1377 = vmatprep.subr.mxu0 0.0
    %1378 = vmatpush2.msra.mxu0 0.0
    %1379 = vmatprep.subr.mxu0 0.0
    %1380 = vmatpush2.msra.mxu0 0.0
    %1381 = vmatprep.subr.mxu0 0.0
    %1382 = vmatpush2.msra.mxu0 0.0
    %1383 = vmatprep.subr.mxu0 0.0
    %1384 = vmatpush2.msra.mxu0 0.0
    %1385 = vmatprep.subr.mxu0 0.0
    %1386 = vmatpush2.msra.mxu0 0.0
    %1387 = vmatprep.subr.mxu0 0.0
    %1388 = vmatpush2.msra.mxu0 0.0
    %1389 = vmatprep.mubr.f32.mxu0 0.0
    %1390 = vmatmul.mubr.f32.gmra.mxu0 %v1323
    %v1391 = vpop.f32.mrf.mxu0
    %v1392 = vadd.f32 %v315, %v1391
    %v1393 = vpop.f32.mrf.mxu0
    %1394 = vdwg.mxu0
    %v1395 = vmax.f32 %v1392, 0.0
    %v1397 = vsel %vm397, %v1395, 0
    %1399 = vmatprep.subr.mxu0 0.0
    %1400 = vmatpush1.msra.mxu0 0.0
    %1401 = vmatprep.subr.mxu0 0.0
    %1402 = vmatpush1.msra.mxu0 0.0
    %1403 = vmatprep.subr.mxu0 0.0
    %1404 = vmatpush1.msra.mxu0 0.0
    %1405 = vmatprep.subr.mxu0 0.0
    %1406 = vmatpush1.msra.mxu0 0.0
    %1407 = vmatprep.subr.mxu0 0.0
    %1408 = vmatpush1.msra.mxu0 0.0
    %1409 = vmatprep.subr.mxu0 0.0
    %1410 = vmatpush1.msra.mxu0 0.0
    %1411 = vmatprep.subr.mxu0 0.0
    %1412 = vmatpush1.msra.mxu0 0.0
    %1413 = vmatprep.subr.mxu0 0.0
    %1414 = vmatpush1.msra.mxu0 0.0
    %1415 = vmatprep.subr.mxu0 0.0
    %1416 = vmatpush1.msra.mxu0 %v68
    %1417 = vmatprep.subr.mxu0 0.0
    %1418 = vmatpush1.msra.mxu0 %v67
    %1419 = vmatprep.subr.mxu0 0.0
    %1420 = vmatpush1.msra.mxu0 %v66
    %1421 = vmatprep.subr.mxu0 0.0
    %1422 = vmatpush1.msra.mxu0 %v65
    %1423 = vmatprep.subr.mxu0 0.0
    %1424 = vmatpush1.msra.mxu0 %v64
    %1425 = vmatprep.subr.mxu0 0.0
    %1426 = vmatpush1.msra.mxu0 %v63
    %1427 = vmatprep.subr.mxu0 0.0
    %1428 = vmatpush1.msra.mxu0 %v62
    %1429 = vmatprep.subr.mxu0 0.0
    %1430 = vmatpush1.msra.mxu0 %v61
    %1431 = vmatprep.subr.mxu0 0.0
    %1432 = vmatpush2.msra.mxu0 0.0
    %1433 = vmatprep.subr.mxu0 0.0
    %1434 = vmatpush2.msra.mxu0 0.0
    %1435 = vmatprep.subr.mxu0 0.0
    %1436 = vmatpush2.msra.mxu0 0.0
    %1437 = vmatprep.subr.mxu0 0.0
    %1438 = vmatpush2.msra.mxu0 0.0
    %1439 = vmatprep.subr.mxu0 0.0
    %1440 = vmatpush2.msra.mxu0 0.0
    %1441 = vmatprep.subr.mxu0 0.0
    %1442 = vmatpush2.msra.mxu0 0.0
    %1443 = vmatprep.subr.mxu0 0.0
    %1444 = vmatpush2.msra.mxu0 0.0
    %1445 = vmatprep.subr.mxu0 0.0
    %1446 = vmatpush2.msra.mxu0 0.0
    %1447 = vmatprep.subr.mxu0 0.0
    %1448 = vmatpush2.msra.mxu0 0.0
    %1449 = vmatprep.subr.mxu0 0.0
    %1450 = vmatpush2.msra.mxu0 0.0
    %1451 = vmatprep.subr.mxu0 0.0
    %1452 = vmatpush2.msra.mxu0 0.0
    %1453 = vmatprep.subr.mxu0 0.0
    %1454 = vmatpush2.msra.mxu0 0.0
    %1455 = vmatprep.subr.mxu0 0.0
    %1456 = vmatpush2.msra.mxu0 0.0
    %1457 = vmatprep.subr.mxu0 0.0
    %1458 = vmatpush2.msra.mxu0 0.0
    %1459 = vmatprep.subr.mxu0 0.0
    %1460 = vmatpush2.msra.mxu0 0.0
    %1461 = vmatprep.subr.mxu0 0.0
    %1462 = vmatpush2.msra.mxu0 0.0
    %1463 = vmatprep.mubr.f32.mxu0 0.0
    %1464 = vmatmul.mubr.f32.gmra.mxu0 %v1397
    %v1465 = vpop.f32.mrf.mxu0
    %v1466 = vadd.f32 %v395, %v1465
    %v1467 = vpop.f32.mrf.mxu0
    %1468 = vdwg.mxu0
    %v1469 = vmul.f32 %v1466, %v152
    %v1470 = vsel %vm472, %v1469, 0.0
    %1471 = vadd.xlane.f32.xlu0 %v1470
    %v1472 = vpop.xlane.xlu0 %1471
    %v1473 = vstv %s1196
    %vm1474 = vcmp.eq.f32.partialorder %v52, %v1473
    %v1475 = vstv %s1186
    %vm1476 = vcmp.eq.s32.totalorder %v156, %v1475
    %v1477 = vsel %vm1476, -1000.0, %v1472
    %v1478 = vsel %vm1474, %v1477, -1e+30
    %v1479 = vsel %vm482, %v1478, -inf
    %v1480 = vrot.slane %v1479, 4
    %v1481 = vmax.f32 %v1479, %v1480
    %v1482 = vrot.slane %v1481, 2
    %v1483 = vmax.f32 %v1481, %v1482
    %v1484 = vrot.slane %v1483, 1
    %v1485 = vmax.f32 %v1483, %v1484
    %v1486 = vsub.f32 %v1478, %v1485
    %v1487 = vmul.f32 %v1486, 1.442695
    %v1488 = vpow.pop %v1487
    %v1489 = vsel %vm482, %v1488, 0.0
    %v1490 = vrot.slane %v1489, 4
    %v1491 = vadd.f32 %v1489, %v1490
    %v1492 = vrot.slane %v1491, 2
    %v1493 = vadd.f32 %v1491, %v1492
    %v1494 = vrot.slane %v1493, 1
    %v1495 = vadd.f32 %v1493, %v1494
    %v1496 = vrcp.pop %v1495
    %v1497 = vmul.f32 %v1488, %v1496
    %1499 = vset.pattern.permute.xlu0 4
    %1500 = vperm.xlu0 %1499, %v1497
    %v1501 = vpop.permute.xlu0 %1500
    %v1503 = vmul.f32 %v1501, %v53
    %v1504 = vsel %vm81, %v1503, 0.0
    %v1505 = vrot.slane %v1504, 4
    %v1506 = vadd.f32 %v1504, %v1505
    %v1507 = vrot.slane %v1506, 2
    %v1508 = vadd.f32 %v1506, %v1507
    %v1509 = vrot.slane %v1508, 1
    %v1510 = vadd.f32 %v1508, %v1509
    %v1511 = vstv %s1198
    %v1512 = vmul.f32 %v1510, %v1511
    %vm1513 = vcmp.eq.s32.totalorder %v156, 3
    %v1514 = vsel %vm1513, 1, 0
    %v1515 = vcvt.s32.f32 %v1514
    %v1516 = vmul.f32 %v1515, %v1512
    %v1517 = vadd.f32 %v1185, %v1516
    %s1518 = sadd.s32 %s157, 4
    %s1519 = smul.u32 %s1518, 128
    %s1520 = sld [smem:[#allocation2 + %s1519]]
    %s1521 = sadd.s32 %s1519, 1
    %s1522 = sld [smem:[#allocation2 + %s1521]]
    %s1523 = sadd.s32 %s1519, 2
    %s1524 = sld [smem:[#allocation2 + %s1523]]
    %s1525 = sadd.s32 %s1519, 3
    %s1526 = sld [smem:[#allocation2 + %s1525]]
    %s1527 = sadd.s32 %s1519, 4
    %s1528 = sld [smem:[#allocation2 + %s1527]]
    %s1529 = sadd.s32 %s1519, 5
    %s1530 = sld [smem:[#allocation2 + %s1529]]
    %v1531 = vstv %s1520
    %v1532 = vsub.f32 %v1531, %v52
    %v1533 = vstv %s1522
    %v1534 = vsub.f32 %v1533, %v52
    %v1535 = vstv %s1524
    %v1536 = vsub.f32 %v1535, %v52
    %v1537 = vstv %s1526
    %v1538 = vsub.f32 %v1537, %v52
    %v1539 = vmul.f32 %v1532, %v1532
    %v1540 = vmul.f32 %v1534, %v1534
    %1542 = vrot.lane.b32.xlu0 %v1540, 127
    %v1543 = vpop.permute.xlu0 %1542
    %v1545 = vadd.f32 %v1539, %v1543
    %v1546 = vrsqrt.pop %v1545
    %v1547 = vmul.f32 %v1545, %v1546
    %vm1548 = vcmp.eq.f32.partialorder %v1545, inf
    %v1549 = vsel %vm1548, %v1545, %v1547
    %vm1550 = vcmp.eq.f32.partialorder %v1545, 0.0
    %v1551 = vand.u32 %v1545, 2147483648
    %v1552 = vsel %vm1550, %v1551, %v1549
    %s1553 = smul.f32 %s1524, %s1524
    %s1554 = smul.f32 %s1526, %s1526
    %s1555 = sadd.f32 %s1553, %s1554
    %v1556 = vstv %s1555
    %v1557 = vrsqrt.pop %v1556
    %v1558 = vmul.f32 %v1556, %v1557
    %vm1559 = vcmp.eq.f32.partialorder %v1556, inf
    %v1560 = vsel %vm1559, %v1556, %v1558
    %vm1561 = vcmp.eq.f32.partialorder %v1556, 0.0
    %v1562 = vand.u32 %v1556, 2147483648
    %v1563 = vsel %vm1561, %v1562, %v1560
    %s1564 = vtos %v1563
    %v1565 = vmul.f32 %v1532, %v1535
    %v1566 = vmul.f32 %v1534, %v1537
    %1568 = vrot.lane.b32.xlu0 %v1566, 127
    %v1569 = vpop.permute.xlu0 %1568
    %v1571 = vadd.f32 %v1565, %v1569
    %v1572 = vstv %s1564
    %v1573 = vmul.f32 %v1552, %v1572
    %v1574 = vadd.f32 %v1573, 1e-06
    %v1575 = vrcp.pop %v1574
    %v1576 = vmul.f32 %v1571, %v1575
    %1578 = vrot.lane.b32.xlu0 %v1536, 126
    %v1579 = vpop.permute.xlu0 %1578
    %v1581 = vmul.f32 %v1532, %v1579
    %1583 = vrot.lane.b32.xlu0 %v1538, 126
    %v1584 = vpop.permute.xlu0 %1583
    %v1586 = vmul.f32 %v1534, %v1584
    %1588 = vrot.lane.b32.xlu0 %v1586, 127
    %v1589 = vpop.permute.xlu0 %1588
    %v1591 = vadd.f32 %v1581, %v1589
    %v1592 = vsub.f32 0.0, %v1591
    %v1593 = vmul.f32 %v1536, %v1536
    %v1594 = vmul.f32 %v1538, %v1538
    %1596 = vrot.lane.b32.xlu0 %v1594, 127
    %v1597 = vpop.permute.xlu0 %1596
    %v1599 = vadd.f32 %v1593, %v1597
    %v1600 = vadd.f32 %v1599, 1e-06
    %1602 = vrot.lane.b32.xlu0 %v1600, 126
    %v1603 = vpop.permute.xlu0 %1602
    %v1605 = vrcp.pop %v1603
    %v1606 = vmul.f32 %v1592, %v1605
    %v1607 = vmul.f32 %v1606, %v1579
    %v1608 = vadd.f32 %v1532, %v1607
    %1609 = vrot.lane.b32.xlu0 %v1538, 125
    %v1610 = vpop.permute.xlu0 %1609
    %v1612 = vmul.f32 %v1606, %v1610
    %1614 = vrot.lane.b32.xlu0 %v1612, 1
    %v1615 = vpop.permute.xlu0 %1614
    %v1617 = vadd.f32 %v1534, %v1615
    %v1618 = vmul.f32 %v1608, %v1608
    %v1619 = vmul.f32 %v1617, %v1617
    %1621 = vrot.lane.b32.xlu0 %v1619, 127
    %v1622 = vpop.permute.xlu0 %1621
    %v1624 = vadd.f32 %v1618, %v1622
    %v1625 = vrsqrt.pop %v1624
    %v1626 = vmul.f32 %v1624, %v1625
    %vm1627 = vcmp.eq.f32.partialorder %v1624, inf
    %v1628 = vsel %vm1627, %v1624, %v1626
    %vm1629 = vcmp.eq.f32.partialorder %v1624, 0.0
    %v1630 = vand.u32 %v1624, 2147483648
    %v1631 = vsel %vm1629, %v1630, %v1628
    %1633 = vset.pattern.permute.xlu0 0
    %1634 = vperm.xlu0 %1633, %v1552
    %v1635 = vpop.permute.xlu0 %1634
    %v1637 = vmul.f32 %v1635, %v279
    %1639 = vset.pattern.permute.xlu0 0
    %1640 = vperm.xlu0 %1639, %v1576
    %v1641 = vpop.permute.xlu0 %1640
    %v1643 = vmul.f32 %v1641, %v289
    %v1644 = vadd.f32 %v1637, %v1643
    %1646 = vset.pattern.permute.xlu0 0
    %1647 = vperm.xlu0 %1646, %v1631
    %v1648 = vpop.permute.xlu0 %1647
    %v1650 = vmul.f32 %v1648, %v300
    %v1651 = vadd.f32 %v1644, %v1650
    %v1652 = vadd.f32 %v1651, %v307
    %v1653 = vmax.f32 %v1652, 0.0
    %v1655 = vsel %vm81, %v1653, 0
    %1657 = vmatprep.subr.mxu0 0.0
    %1658 = vmatpush1.msra.mxu0 0.0
    %1659 = vmatprep.subr.mxu0 0.0
    %1660 = vmatpush1.msra.mxu0 0.0
    %1661 = vmatprep.subr.mxu0 0.0
    %1662 = vmatpush1.msra.mxu0 0.0
    %1663 = vmatprep.subr.mxu0 0.0
    %1664 = vmatpush1.msra.mxu0 0.0
    %1665 = vmatprep.subr.mxu0 0.0
    %1666 = vmatpush1.msra.mxu0 0.0
    %1667 = vmatprep.subr.mxu0 0.0
    %1668 = vmatpush1.msra.mxu0 0.0
    %1669 = vmatprep.subr.mxu0 0.0
    %1670 = vmatpush1.msra.mxu0 0.0
    %1671 = vmatprep.subr.mxu0 0.0
    %1672 = vmatpush1.msra.mxu0 0.0
    %1673 = vmatprep.subr.mxu0 0.0
    %1674 = vmatpush1.msra.mxu0 0.0
    %1675 = vmatprep.subr.mxu0 0.0
    %1676 = vmatpush1.msra.mxu0 0.0
    %1677 = vmatprep.subr.mxu0 0.0
    %1678 = vmatpush1.msra.mxu0 0.0
    %1679 = vmatprep.subr.mxu0 0.0
    %1680 = vmatpush1.msra.mxu0 0.0
    %1681 = vmatprep.subr.mxu0 0.0
    %1682 = vmatpush1.msra.mxu0 %v59
    %1683 = vmatprep.subr.mxu0 0.0
    %1684 = vmatpush1.msra.mxu0 %v58
    %1685 = vmatprep.subr.mxu0 0.0
    %1686 = vmatpush1.msra.mxu0 %v57
    %1687 = vmatprep.subr.mxu0 0.0
    %1688 = vmatpush1.msra.mxu0 %v56
    %1689 = vmatprep.subr.mxu0 0.0
    %1690 = vmatpush2.msra.mxu0 0.0
    %1691 = vmatprep.subr.mxu0 0.0
    %1692 = vmatpush2.msra.mxu0 0.0
    %1693 = vmatprep.subr.mxu0 0.0
    %1694 = vmatpush2.msra.mxu0 0.0
    %1695 = vmatprep.subr.mxu0 0.0
    %1696 = vmatpush2.msra.mxu0 0.0
    %1697 = vmatprep.subr.mxu0 0.0
    %1698 = vmatpush2.msra.mxu0 0.0
    %1699 = vmatprep.subr.mxu0 0.0
    %1700 = vmatpush2.msra.mxu0 0.0
    %1701 = vmatprep.subr.mxu0 0.0
    %1702 = vmatpush2.msra.mxu0 0.0
    %1703 = vmatprep.subr.mxu0 0.0
    %1704 = vmatpush2.msra.mxu0 0.0
    %1705 = vmatprep.subr.mxu0 0.0
    %1706 = vmatpush2.msra.mxu0 0.0
    %1707 = vmatprep.subr.mxu0 0.0
    %1708 = vmatpush2.msra.mxu0 0.0
    %1709 = vmatprep.subr.mxu0 0.0
    %1710 = vmatpush2.msra.mxu0 0.0
    %1711 = vmatprep.subr.mxu0 0.0
    %1712 = vmatpush2.msra.mxu0 0.0
    %1713 = vmatprep.subr.mxu0 0.0
    %1714 = vmatpush2.msra.mxu0 0.0
    %1715 = vmatprep.subr.mxu0 0.0
    %1716 = vmatpush2.msra.mxu0 0.0
    %1717 = vmatprep.subr.mxu0 0.0
    %1718 = vmatpush2.msra.mxu0 0.0
    %1719 = vmatprep.subr.mxu0 0.0
    %1720 = vmatpush2.msra.mxu0 0.0
    %1721 = vmatprep.mubr.f32.mxu0 0.0
    %1722 = vmatmul.mubr.f32.gmra.mxu0 %v1655
    %v1723 = vpop.f32.mrf.mxu0
    %v1724 = vadd.f32 %v315, %v1723
    %v1725 = vpop.f32.mrf.mxu0
    %1726 = vdwg.mxu0
    %v1727 = vmax.f32 %v1724, 0.0
    %v1729 = vsel %vm397, %v1727, 0
    %1731 = vmatprep.subr.mxu0 0.0
    %1732 = vmatpush1.msra.mxu0 0.0
    %1733 = vmatprep.subr.mxu0 0.0
    %1734 = vmatpush1.msra.mxu0 0.0
    %1735 = vmatprep.subr.mxu0 0.0
    %1736 = vmatpush1.msra.mxu0 0.0
    %1737 = vmatprep.subr.mxu0 0.0
    %1738 = vmatpush1.msra.mxu0 0.0
    %1739 = vmatprep.subr.mxu0 0.0
    %1740 = vmatpush1.msra.mxu0 0.0
    %1741 = vmatprep.subr.mxu0 0.0
    %1742 = vmatpush1.msra.mxu0 0.0
    %1743 = vmatprep.subr.mxu0 0.0
    %1744 = vmatpush1.msra.mxu0 0.0
    %1745 = vmatprep.subr.mxu0 0.0
    %1746 = vmatpush1.msra.mxu0 0.0
    %1747 = vmatprep.subr.mxu0 0.0
    %1748 = vmatpush1.msra.mxu0 %v68
    %1749 = vmatprep.subr.mxu0 0.0
    %1750 = vmatpush1.msra.mxu0 %v67
    %1751 = vmatprep.subr.mxu0 0.0
    %1752 = vmatpush1.msra.mxu0 %v66
    %1753 = vmatprep.subr.mxu0 0.0
    %1754 = vmatpush1.msra.mxu0 %v65
    %1755 = vmatprep.subr.mxu0 0.0
    %1756 = vmatpush1.msra.mxu0 %v64
    %1757 = vmatprep.subr.mxu0 0.0
    %1758 = vmatpush1.msra.mxu0 %v63
    %1759 = vmatprep.subr.mxu0 0.0
    %1760 = vmatpush1.msra.mxu0 %v62
    %1761 = vmatprep.subr.mxu0 0.0
    %1762 = vmatpush1.msra.mxu0 %v61
    %1763 = vmatprep.subr.mxu0 0.0
    %1764 = vmatpush2.msra.mxu0 0.0
    %1765 = vmatprep.subr.mxu0 0.0
    %1766 = vmatpush2.msra.mxu0 0.0
    %1767 = vmatprep.subr.mxu0 0.0
    %1768 = vmatpush2.msra.mxu0 0.0
    %1769 = vmatprep.subr.mxu0 0.0
    %1770 = vmatpush2.msra.mxu0 0.0
    %1771 = vmatprep.subr.mxu0 0.0
    %1772 = vmatpush2.msra.mxu0 0.0
    %1773 = vmatprep.subr.mxu0 0.0
    %1774 = vmatpush2.msra.mxu0 0.0
    %1775 = vmatprep.subr.mxu0 0.0
    %1776 = vmatpush2.msra.mxu0 0.0
    %1777 = vmatprep.subr.mxu0 0.0
    %1778 = vmatpush2.msra.mxu0 0.0
    %1779 = vmatprep.subr.mxu0 0.0
    %1780 = vmatpush2.msra.mxu0 0.0
    %1781 = vmatprep.subr.mxu0 0.0
    %1782 = vmatpush2.msra.mxu0 0.0
    %1783 = vmatprep.subr.mxu0 0.0
    %1784 = vmatpush2.msra.mxu0 0.0
    %1785 = vmatprep.subr.mxu0 0.0
    %1786 = vmatpush2.msra.mxu0 0.0
    %1787 = vmatprep.subr.mxu0 0.0
    %1788 = vmatpush2.msra.mxu0 0.0
    %1789 = vmatprep.subr.mxu0 0.0
    %1790 = vmatpush2.msra.mxu0 0.0
    %1791 = vmatprep.subr.mxu0 0.0
    %1792 = vmatpush2.msra.mxu0 0.0
    %1793 = vmatprep.subr.mxu0 0.0
    %1794 = vmatpush2.msra.mxu0 0.0
    %1795 = vmatprep.mubr.f32.mxu0 0.0
    %1796 = vmatmul.mubr.f32.gmra.mxu0 %v1729
    %v1797 = vpop.f32.mrf.mxu0
    %v1798 = vadd.f32 %v395, %v1797
    %v1799 = vpop.f32.mrf.mxu0
    %1800 = vdwg.mxu0
    %v1801 = vmul.f32 %v1798, %v152
    %v1802 = vsel %vm472, %v1801, 0.0
    %1803 = vadd.xlane.f32.xlu0 %v1802
    %v1804 = vpop.xlane.xlu0 %1803
    %v1805 = vstv %s1528
    %vm1806 = vcmp.eq.f32.partialorder %v52, %v1805
    %v1807 = vstv %s1518
    %vm1808 = vcmp.eq.s32.totalorder %v156, %v1807
    %v1809 = vsel %vm1808, -1000.0, %v1804
    %v1810 = vsel %vm1806, %v1809, -1e+30
    %v1811 = vsel %vm482, %v1810, -inf
    %v1812 = vrot.slane %v1811, 4
    %v1813 = vmax.f32 %v1811, %v1812
    %v1814 = vrot.slane %v1813, 2
    %v1815 = vmax.f32 %v1813, %v1814
    %v1816 = vrot.slane %v1815, 1
    %v1817 = vmax.f32 %v1815, %v1816
    %v1818 = vsub.f32 %v1810, %v1817
    %v1819 = vmul.f32 %v1818, 1.442695
    %v1820 = vpow.pop %v1819
    %v1821 = vsel %vm482, %v1820, 0.0
    %v1822 = vrot.slane %v1821, 4
    %v1823 = vadd.f32 %v1821, %v1822
    %v1824 = vrot.slane %v1823, 2
    %v1825 = vadd.f32 %v1823, %v1824
    %v1826 = vrot.slane %v1825, 1
    %v1827 = vadd.f32 %v1825, %v1826
    %v1828 = vrcp.pop %v1827
    %v1829 = vmul.f32 %v1820, %v1828
    %1831 = vset.pattern.permute.xlu0 4
    %1832 = vperm.xlu0 %1831, %v1829
    %v1833 = vpop.permute.xlu0 %1832
    %v1835 = vmul.f32 %v1833, %v53
    %v1836 = vsel %vm81, %v1835, 0.0
    %v1837 = vrot.slane %v1836, 4
    %v1838 = vadd.f32 %v1836, %v1837
    %v1839 = vrot.slane %v1838, 2
    %v1840 = vadd.f32 %v1838, %v1839
    %v1841 = vrot.slane %v1840, 1
    %v1842 = vadd.f32 %v1840, %v1841
    %v1843 = vstv %s1530
    %v1844 = vmul.f32 %v1842, %v1843
    %vm1845 = vcmp.eq.s32.totalorder %v156, 4
    %v1846 = vsel %vm1845, 1, 0
    %v1847 = vcvt.s32.f32 %v1846
    %v1848 = vmul.f32 %v1847, %v1844
    %v1849 = vadd.f32 %v1517, %v1848
    %s1850 = sadd.s32 %s157, 5
    %s1851 = smul.u32 %s1850, 128
    %s1852 = sld [smem:[#allocation2 + %s1851]]
    %s1853 = sadd.s32 %s1851, 1
    %s1854 = sld [smem:[#allocation2 + %s1853]]
    %s1855 = sadd.s32 %s1851, 2
    %s1856 = sld [smem:[#allocation2 + %s1855]]
    %s1857 = sadd.s32 %s1851, 3
    %s1858 = sld [smem:[#allocation2 + %s1857]]
    %s1859 = sadd.s32 %s1851, 4
    %s1860 = sld [smem:[#allocation2 + %s1859]]
    %s1861 = sadd.s32 %s1851, 5
    %s1862 = sld [smem:[#allocation2 + %s1861]]
    %v1863 = vstv %s1852
    %v1864 = vsub.f32 %v1863, %v52
    %v1865 = vstv %s1854
    %v1866 = vsub.f32 %v1865, %v52
    %v1867 = vstv %s1856
    %v1868 = vsub.f32 %v1867, %v52
    %v1869 = vstv %s1858
    %v1870 = vsub.f32 %v1869, %v52
    %v1871 = vmul.f32 %v1864, %v1864
    %v1872 = vmul.f32 %v1866, %v1866
    %1874 = vrot.lane.b32.xlu0 %v1872, 127
    %v1875 = vpop.permute.xlu0 %1874
    %v1877 = vadd.f32 %v1871, %v1875
    %v1878 = vrsqrt.pop %v1877
    %v1879 = vmul.f32 %v1877, %v1878
    %vm1880 = vcmp.eq.f32.partialorder %v1877, inf
    %v1881 = vsel %vm1880, %v1877, %v1879
    %vm1882 = vcmp.eq.f32.partialorder %v1877, 0.0
    %v1883 = vand.u32 %v1877, 2147483648
    %v1884 = vsel %vm1882, %v1883, %v1881
    %s1885 = smul.f32 %s1856, %s1856
    %s1886 = smul.f32 %s1858, %s1858
    %s1887 = sadd.f32 %s1885, %s1886
    %v1888 = vstv %s1887
    %v1889 = vrsqrt.pop %v1888
    %v1890 = vmul.f32 %v1888, %v1889
    %vm1891 = vcmp.eq.f32.partialorder %v1888, inf
    %v1892 = vsel %vm1891, %v1888, %v1890
    %vm1893 = vcmp.eq.f32.partialorder %v1888, 0.0
    %v1894 = vand.u32 %v1888, 2147483648
    %v1895 = vsel %vm1893, %v1894, %v1892
    %s1896 = vtos %v1895
    %v1897 = vmul.f32 %v1864, %v1867
    %v1898 = vmul.f32 %v1866, %v1869
    %1900 = vrot.lane.b32.xlu0 %v1898, 127
    %v1901 = vpop.permute.xlu0 %1900
    %v1903 = vadd.f32 %v1897, %v1901
    %v1904 = vstv %s1896
    %v1905 = vmul.f32 %v1884, %v1904
    %v1906 = vadd.f32 %v1905, 1e-06
    %v1907 = vrcp.pop %v1906
    %v1908 = vmul.f32 %v1903, %v1907
    %1910 = vrot.lane.b32.xlu0 %v1868, 126
    %v1911 = vpop.permute.xlu0 %1910
    %v1913 = vmul.f32 %v1864, %v1911
    %1915 = vrot.lane.b32.xlu0 %v1870, 126
    %v1916 = vpop.permute.xlu0 %1915
    %v1918 = vmul.f32 %v1866, %v1916
    %1920 = vrot.lane.b32.xlu0 %v1918, 127
    %v1921 = vpop.permute.xlu0 %1920
    %v1923 = vadd.f32 %v1913, %v1921
    %v1924 = vsub.f32 0.0, %v1923
    %v1925 = vmul.f32 %v1868, %v1868
    %v1926 = vmul.f32 %v1870, %v1870
    %1928 = vrot.lane.b32.xlu0 %v1926, 127
    %v1929 = vpop.permute.xlu0 %1928
    %v1931 = vadd.f32 %v1925, %v1929
    %v1932 = vadd.f32 %v1931, 1e-06
    %1934 = vrot.lane.b32.xlu0 %v1932, 126
    %v1935 = vpop.permute.xlu0 %1934
    %v1937 = vrcp.pop %v1935
    %v1938 = vmul.f32 %v1924, %v1937
    %v1939 = vmul.f32 %v1938, %v1911
    %v1940 = vadd.f32 %v1864, %v1939
    %1941 = vrot.lane.b32.xlu0 %v1870, 125
    %v1942 = vpop.permute.xlu0 %1941
    %v1944 = vmul.f32 %v1938, %v1942
    %1946 = vrot.lane.b32.xlu0 %v1944, 1
    %v1947 = vpop.permute.xlu0 %1946
    %v1949 = vadd.f32 %v1866, %v1947
    %v1950 = vmul.f32 %v1940, %v1940
    %v1951 = vmul.f32 %v1949, %v1949
    %1953 = vrot.lane.b32.xlu0 %v1951, 127
    %v1954 = vpop.permute.xlu0 %1953
    %v1956 = vadd.f32 %v1950, %v1954
    %v1957 = vrsqrt.pop %v1956
    %v1958 = vmul.f32 %v1956, %v1957
    %vm1959 = vcmp.eq.f32.partialorder %v1956, inf
    %v1960 = vsel %vm1959, %v1956, %v1958
    %vm1961 = vcmp.eq.f32.partialorder %v1956, 0.0
    %v1962 = vand.u32 %v1956, 2147483648
    %v1963 = vsel %vm1961, %v1962, %v1960
    %1965 = vset.pattern.permute.xlu0 0
    %1966 = vperm.xlu0 %1965, %v1884
    %v1967 = vpop.permute.xlu0 %1966
    %v1969 = vmul.f32 %v1967, %v279
    %1971 = vset.pattern.permute.xlu0 0
    %1972 = vperm.xlu0 %1971, %v1908
    %v1973 = vpop.permute.xlu0 %1972
    %v1975 = vmul.f32 %v1973, %v289
    %v1976 = vadd.f32 %v1969, %v1975
    %1978 = vset.pattern.permute.xlu0 0
    %1979 = vperm.xlu0 %1978, %v1963
    %v1980 = vpop.permute.xlu0 %1979
    %v1982 = vmul.f32 %v1980, %v300
    %v1983 = vadd.f32 %v1976, %v1982
    %v1984 = vadd.f32 %v1983, %v307
    %v1985 = vmax.f32 %v1984, 0.0
    %v1987 = vsel %vm81, %v1985, 0
    %1989 = vmatprep.subr.mxu0 0.0
    %1990 = vmatpush1.msra.mxu0 0.0
    %1991 = vmatprep.subr.mxu0 0.0
    %1992 = vmatpush1.msra.mxu0 0.0
    %1993 = vmatprep.subr.mxu0 0.0
    %1994 = vmatpush1.msra.mxu0 0.0
    %1995 = vmatprep.subr.mxu0 0.0
    %1996 = vmatpush1.msra.mxu0 0.0
    %1997 = vmatprep.subr.mxu0 0.0
    %1998 = vmatpush1.msra.mxu0 0.0
    %1999 = vmatprep.subr.mxu0 0.0
    %2000 = vmatpush1.msra.mxu0 0.0
    %2001 = vmatprep.subr.mxu0 0.0
    %2002 = vmatpush1.msra.mxu0 0.0
    %2003 = vmatprep.subr.mxu0 0.0
    %2004 = vmatpush1.msra.mxu0 0.0
    %2005 = vmatprep.subr.mxu0 0.0
    %2006 = vmatpush1.msra.mxu0 0.0
    %2007 = vmatprep.subr.mxu0 0.0
    %2008 = vmatpush1.msra.mxu0 0.0
    %2009 = vmatprep.subr.mxu0 0.0
    %2010 = vmatpush1.msra.mxu0 0.0
    %2011 = vmatprep.subr.mxu0 0.0
    %2012 = vmatpush1.msra.mxu0 0.0
    %2013 = vmatprep.subr.mxu0 0.0
    %2014 = vmatpush1.msra.mxu0 %v59
    %2015 = vmatprep.subr.mxu0 0.0
    %2016 = vmatpush1.msra.mxu0 %v58
    %2017 = vmatprep.subr.mxu0 0.0
    %2018 = vmatpush1.msra.mxu0 %v57
    %2019 = vmatprep.subr.mxu0 0.0
    %2020 = vmatpush1.msra.mxu0 %v56
    %2021 = vmatprep.subr.mxu0 0.0
    %2022 = vmatpush2.msra.mxu0 0.0
    %2023 = vmatprep.subr.mxu0 0.0
    %2024 = vmatpush2.msra.mxu0 0.0
    %2025 = vmatprep.subr.mxu0 0.0
    %2026 = vmatpush2.msra.mxu0 0.0
    %2027 = vmatprep.subr.mxu0 0.0
    %2028 = vmatpush2.msra.mxu0 0.0
    %2029 = vmatprep.subr.mxu0 0.0
    %2030 = vmatpush2.msra.mxu0 0.0
    %2031 = vmatprep.subr.mxu0 0.0
    %2032 = vmatpush2.msra.mxu0 0.0
    %2033 = vmatprep.subr.mxu0 0.0
    %2034 = vmatpush2.msra.mxu0 0.0
    %2035 = vmatprep.subr.mxu0 0.0
    %2036 = vmatpush2.msra.mxu0 0.0
    %2037 = vmatprep.subr.mxu0 0.0
    %2038 = vmatpush2.msra.mxu0 0.0
    %2039 = vmatprep.subr.mxu0 0.0
    %2040 = vmatpush2.msra.mxu0 0.0
    %2041 = vmatprep.subr.mxu0 0.0
    %2042 = vmatpush2.msra.mxu0 0.0
    %2043 = vmatprep.subr.mxu0 0.0
    %2044 = vmatpush2.msra.mxu0 0.0
    %2045 = vmatprep.subr.mxu0 0.0
    %2046 = vmatpush2.msra.mxu0 0.0
    %2047 = vmatprep.subr.mxu0 0.0
    %2048 = vmatpush2.msra.mxu0 0.0
    %2049 = vmatprep.subr.mxu0 0.0
    %2050 = vmatpush2.msra.mxu0 0.0
    %2051 = vmatprep.subr.mxu0 0.0
    %2052 = vmatpush2.msra.mxu0 0.0
    %2053 = vmatprep.mubr.f32.mxu0 0.0
    %2054 = vmatmul.mubr.f32.gmra.mxu0 %v1987
    %v2055 = vpop.f32.mrf.mxu0
    %v2056 = vadd.f32 %v315, %v2055
    %v2057 = vpop.f32.mrf.mxu0
    %2058 = vdwg.mxu0
    %v2059 = vmax.f32 %v2056, 0.0
    %v2061 = vsel %vm397, %v2059, 0
    %2063 = vmatprep.subr.mxu0 0.0
    %2064 = vmatpush1.msra.mxu0 0.0
    %2065 = vmatprep.subr.mxu0 0.0
    %2066 = vmatpush1.msra.mxu0 0.0
    %2067 = vmatprep.subr.mxu0 0.0
    %2068 = vmatpush1.msra.mxu0 0.0
    %2069 = vmatprep.subr.mxu0 0.0
    %2070 = vmatpush1.msra.mxu0 0.0
    %2071 = vmatprep.subr.mxu0 0.0
    %2072 = vmatpush1.msra.mxu0 0.0
    %2073 = vmatprep.subr.mxu0 0.0
    %2074 = vmatpush1.msra.mxu0 0.0
    %2075 = vmatprep.subr.mxu0 0.0
    %2076 = vmatpush1.msra.mxu0 0.0
    %2077 = vmatprep.subr.mxu0 0.0
    %2078 = vmatpush1.msra.mxu0 0.0
    %2079 = vmatprep.subr.mxu0 0.0
    %2080 = vmatpush1.msra.mxu0 %v68
    %2081 = vmatprep.subr.mxu0 0.0
    %2082 = vmatpush1.msra.mxu0 %v67
    %2083 = vmatprep.subr.mxu0 0.0
    %2084 = vmatpush1.msra.mxu0 %v66
    %2085 = vmatprep.subr.mxu0 0.0
    %2086 = vmatpush1.msra.mxu0 %v65
    %2087 = vmatprep.subr.mxu0 0.0
    %2088 = vmatpush1.msra.mxu0 %v64
    %2089 = vmatprep.subr.mxu0 0.0
    %2090 = vmatpush1.msra.mxu0 %v63
    %2091 = vmatprep.subr.mxu0 0.0
    %2092 = vmatpush1.msra.mxu0 %v62
    %2093 = vmatprep.subr.mxu0 0.0
    %2094 = vmatpush1.msra.mxu0 %v61
    %2095 = vmatprep.subr.mxu0 0.0
    %2096 = vmatpush2.msra.mxu0 0.0
    %2097 = vmatprep.subr.mxu0 0.0
    %2098 = vmatpush2.msra.mxu0 0.0
    %2099 = vmatprep.subr.mxu0 0.0
    %2100 = vmatpush2.msra.mxu0 0.0
    %2101 = vmatprep.subr.mxu0 0.0
    %2102 = vmatpush2.msra.mxu0 0.0
    %2103 = vmatprep.subr.mxu0 0.0
    %2104 = vmatpush2.msra.mxu0 0.0
    %2105 = vmatprep.subr.mxu0 0.0
    %2106 = vmatpush2.msra.mxu0 0.0
    %2107 = vmatprep.subr.mxu0 0.0
    %2108 = vmatpush2.msra.mxu0 0.0
    %2109 = vmatprep.subr.mxu0 0.0
    %2110 = vmatpush2.msra.mxu0 0.0
    %2111 = vmatprep.subr.mxu0 0.0
    %2112 = vmatpush2.msra.mxu0 0.0
    %2113 = vmatprep.subr.mxu0 0.0
    %2114 = vmatpush2.msra.mxu0 0.0
    %2115 = vmatprep.subr.mxu0 0.0
    %2116 = vmatpush2.msra.mxu0 0.0
    %2117 = vmatprep.subr.mxu0 0.0
    %2118 = vmatpush2.msra.mxu0 0.0
    %2119 = vmatprep.subr.mxu0 0.0
    %2120 = vmatpush2.msra.mxu0 0.0
    %2121 = vmatprep.subr.mxu0 0.0
    %2122 = vmatpush2.msra.mxu0 0.0
    %2123 = vmatprep.subr.mxu0 0.0
    %2124 = vmatpush2.msra.mxu0 0.0
    %2125 = vmatprep.subr.mxu0 0.0
    %2126 = vmatpush2.msra.mxu0 0.0
    %2127 = vmatprep.mubr.f32.mxu0 0.0
    %2128 = vmatmul.mubr.f32.gmra.mxu0 %v2061
    %v2129 = vpop.f32.mrf.mxu0
    %v2130 = vadd.f32 %v395, %v2129
    %v2131 = vpop.f32.mrf.mxu0
    %2132 = vdwg.mxu0
    %v2133 = vmul.f32 %v2130, %v152
    %v2134 = vsel %vm472, %v2133, 0.0
    %2135 = vadd.xlane.f32.xlu0 %v2134
    %v2136 = vpop.xlane.xlu0 %2135
    %v2137 = vstv %s1860
    %vm2138 = vcmp.eq.f32.partialorder %v52, %v2137
    %v2139 = vstv %s1850
    %vm2140 = vcmp.eq.s32.totalorder %v156, %v2139
    %v2141 = vsel %vm2140, -1000.0, %v2136
    %v2142 = vsel %vm2138, %v2141, -1e+30
    %v2143 = vsel %vm482, %v2142, -inf
    %v2144 = vrot.slane %v2143, 4
    %v2145 = vmax.f32 %v2143, %v2144
    %v2146 = vrot.slane %v2145, 2
    %v2147 = vmax.f32 %v2145, %v2146
    %v2148 = vrot.slane %v2147, 1
    %v2149 = vmax.f32 %v2147, %v2148
    %v2150 = vsub.f32 %v2142, %v2149
    %v2151 = vmul.f32 %v2150, 1.442695
    %v2152 = vpow.pop %v2151
    %v2153 = vsel %vm482, %v2152, 0.0
    %v2154 = vrot.slane %v2153, 4
    %v2155 = vadd.f32 %v2153, %v2154
    %v2156 = vrot.slane %v2155, 2
    %v2157 = vadd.f32 %v2155, %v2156
    %v2158 = vrot.slane %v2157, 1
    %v2159 = vadd.f32 %v2157, %v2158
    %v2160 = vrcp.pop %v2159
    %v2161 = vmul.f32 %v2152, %v2160
    %2163 = vset.pattern.permute.xlu0 4
    %2164 = vperm.xlu0 %2163, %v2161
    %v2165 = vpop.permute.xlu0 %2164
    %v2167 = vmul.f32 %v2165, %v53
    %v2168 = vsel %vm81, %v2167, 0.0
    %v2169 = vrot.slane %v2168, 4
    %v2170 = vadd.f32 %v2168, %v2169
    %v2171 = vrot.slane %v2170, 2
    %v2172 = vadd.f32 %v2170, %v2171
    %v2173 = vrot.slane %v2172, 1
    %v2174 = vadd.f32 %v2172, %v2173
    %v2175 = vstv %s1862
    %v2176 = vmul.f32 %v2174, %v2175
    %vm2177 = vcmp.eq.s32.totalorder %v156, 5
    %v2178 = vsel %vm2177, 1, 0
    %v2179 = vcvt.s32.f32 %v2178
    %v2180 = vmul.f32 %v2179, %v2176
    %v2181 = vadd.f32 %v1849, %v2180
    %s2182 = sadd.s32 %s157, 6
    %s2183 = smul.u32 %s2182, 128
    %s2184 = sld [smem:[#allocation2 + %s2183]]
    %s2185 = sadd.s32 %s2183, 1
    %s2186 = sld [smem:[#allocation2 + %s2185]]
    %s2187 = sadd.s32 %s2183, 2
    %s2188 = sld [smem:[#allocation2 + %s2187]]
    %s2189 = sadd.s32 %s2183, 3
    %s2190 = sld [smem:[#allocation2 + %s2189]]
    %s2191 = sadd.s32 %s2183, 4
    %s2192 = sld [smem:[#allocation2 + %s2191]]
    %s2193 = sadd.s32 %s2183, 5
    %s2194 = sld [smem:[#allocation2 + %s2193]]
    %v2195 = vstv %s2184
    %v2196 = vsub.f32 %v2195, %v52
    %v2197 = vstv %s2186
    %v2198 = vsub.f32 %v2197, %v52
    %v2199 = vstv %s2188
    %v2200 = vsub.f32 %v2199, %v52
    %v2201 = vstv %s2190
    %v2202 = vsub.f32 %v2201, %v52
    %v2203 = vmul.f32 %v2196, %v2196
    %v2204 = vmul.f32 %v2198, %v2198
    %2206 = vrot.lane.b32.xlu0 %v2204, 127
    %v2207 = vpop.permute.xlu0 %2206
    %v2209 = vadd.f32 %v2203, %v2207
    %v2210 = vrsqrt.pop %v2209
    %v2211 = vmul.f32 %v2209, %v2210
    %vm2212 = vcmp.eq.f32.partialorder %v2209, inf
    %v2213 = vsel %vm2212, %v2209, %v2211
    %vm2214 = vcmp.eq.f32.partialorder %v2209, 0.0
    %v2215 = vand.u32 %v2209, 2147483648
    %v2216 = vsel %vm2214, %v2215, %v2213
    %s2217 = smul.f32 %s2188, %s2188
    %s2218 = smul.f32 %s2190, %s2190
    %s2219 = sadd.f32 %s2217, %s2218
    %v2220 = vstv %s2219
    %v2221 = vrsqrt.pop %v2220
    %v2222 = vmul.f32 %v2220, %v2221
    %vm2223 = vcmp.eq.f32.partialorder %v2220, inf
    %v2224 = vsel %vm2223, %v2220, %v2222
    %vm2225 = vcmp.eq.f32.partialorder %v2220, 0.0
    %v2226 = vand.u32 %v2220, 2147483648
    %v2227 = vsel %vm2225, %v2226, %v2224
    %s2228 = vtos %v2227
    %v2229 = vmul.f32 %v2196, %v2199
    %v2230 = vmul.f32 %v2198, %v2201
    %2232 = vrot.lane.b32.xlu0 %v2230, 127
    %v2233 = vpop.permute.xlu0 %2232
    %v2235 = vadd.f32 %v2229, %v2233
    %v2236 = vstv %s2228
    %v2237 = vmul.f32 %v2216, %v2236
    %v2238 = vadd.f32 %v2237, 1e-06
    %v2239 = vrcp.pop %v2238
    %v2240 = vmul.f32 %v2235, %v2239
    %2242 = vrot.lane.b32.xlu0 %v2200, 126
    %v2243 = vpop.permute.xlu0 %2242
    %v2245 = vmul.f32 %v2196, %v2243
    %2247 = vrot.lane.b32.xlu0 %v2202, 126
    %v2248 = vpop.permute.xlu0 %2247
    %v2250 = vmul.f32 %v2198, %v2248
    %2252 = vrot.lane.b32.xlu0 %v2250, 127
    %v2253 = vpop.permute.xlu0 %2252
    %v2255 = vadd.f32 %v2245, %v2253
    %v2256 = vsub.f32 0.0, %v2255
    %v2257 = vmul.f32 %v2200, %v2200
    %v2258 = vmul.f32 %v2202, %v2202
    %2260 = vrot.lane.b32.xlu0 %v2258, 127
    %v2261 = vpop.permute.xlu0 %2260
    %v2263 = vadd.f32 %v2257, %v2261
    %v2264 = vadd.f32 %v2263, 1e-06
    %2266 = vrot.lane.b32.xlu0 %v2264, 126
    %v2267 = vpop.permute.xlu0 %2266
    %v2269 = vrcp.pop %v2267
    %v2270 = vmul.f32 %v2256, %v2269
    %v2271 = vmul.f32 %v2270, %v2243
    %v2272 = vadd.f32 %v2196, %v2271
    %2273 = vrot.lane.b32.xlu0 %v2202, 125
    %v2274 = vpop.permute.xlu0 %2273
    %v2276 = vmul.f32 %v2270, %v2274
    %2278 = vrot.lane.b32.xlu0 %v2276, 1
    %v2279 = vpop.permute.xlu0 %2278
    %v2281 = vadd.f32 %v2198, %v2279
    %v2282 = vmul.f32 %v2272, %v2272
    %v2283 = vmul.f32 %v2281, %v2281
    %2285 = vrot.lane.b32.xlu0 %v2283, 127
    %v2286 = vpop.permute.xlu0 %2285
    %v2288 = vadd.f32 %v2282, %v2286
    %v2289 = vrsqrt.pop %v2288
    %v2290 = vmul.f32 %v2288, %v2289
    %vm2291 = vcmp.eq.f32.partialorder %v2288, inf
    %v2292 = vsel %vm2291, %v2288, %v2290
    %vm2293 = vcmp.eq.f32.partialorder %v2288, 0.0
    %v2294 = vand.u32 %v2288, 2147483648
    %v2295 = vsel %vm2293, %v2294, %v2292
    %2297 = vset.pattern.permute.xlu0 0
    %2298 = vperm.xlu0 %2297, %v2216
    %v2299 = vpop.permute.xlu0 %2298
    %v2301 = vmul.f32 %v2299, %v279
    %2303 = vset.pattern.permute.xlu0 0
    %2304 = vperm.xlu0 %2303, %v2240
    %v2305 = vpop.permute.xlu0 %2304
    %v2307 = vmul.f32 %v2305, %v289
    %v2308 = vadd.f32 %v2301, %v2307
    %2310 = vset.pattern.permute.xlu0 0
    %2311 = vperm.xlu0 %2310, %v2295
    %v2312 = vpop.permute.xlu0 %2311
    %v2314 = vmul.f32 %v2312, %v300
    %v2315 = vadd.f32 %v2308, %v2314
    %v2316 = vadd.f32 %v2315, %v307
    %v2317 = vmax.f32 %v2316, 0.0
    %v2319 = vsel %vm81, %v2317, 0
    %2321 = vmatprep.subr.mxu0 0.0
    %2322 = vmatpush1.msra.mxu0 0.0
    %2323 = vmatprep.subr.mxu0 0.0
    %2324 = vmatpush1.msra.mxu0 0.0
    %2325 = vmatprep.subr.mxu0 0.0
    %2326 = vmatpush1.msra.mxu0 0.0
    %2327 = vmatprep.subr.mxu0 0.0
    %2328 = vmatpush1.msra.mxu0 0.0
    %2329 = vmatprep.subr.mxu0 0.0
    %2330 = vmatpush1.msra.mxu0 0.0
    %2331 = vmatprep.subr.mxu0 0.0
    %2332 = vmatpush1.msra.mxu0 0.0
    %2333 = vmatprep.subr.mxu0 0.0
    %2334 = vmatpush1.msra.mxu0 0.0
    %2335 = vmatprep.subr.mxu0 0.0
    %2336 = vmatpush1.msra.mxu0 0.0
    %2337 = vmatprep.subr.mxu0 0.0
    %2338 = vmatpush1.msra.mxu0 0.0
    %2339 = vmatprep.subr.mxu0 0.0
    %2340 = vmatpush1.msra.mxu0 0.0
    %2341 = vmatprep.subr.mxu0 0.0
    %2342 = vmatpush1.msra.mxu0 0.0
    %2343 = vmatprep.subr.mxu0 0.0
    %2344 = vmatpush1.msra.mxu0 0.0
    %2345 = vmatprep.subr.mxu0 0.0
    %2346 = vmatpush1.msra.mxu0 %v59
    %2347 = vmatprep.subr.mxu0 0.0
    %2348 = vmatpush1.msra.mxu0 %v58
    %2349 = vmatprep.subr.mxu0 0.0
    %2350 = vmatpush1.msra.mxu0 %v57
    %2351 = vmatprep.subr.mxu0 0.0
    %2352 = vmatpush1.msra.mxu0 %v56
    %2353 = vmatprep.subr.mxu0 0.0
    %2354 = vmatpush2.msra.mxu0 0.0
    %2355 = vmatprep.subr.mxu0 0.0
    %2356 = vmatpush2.msra.mxu0 0.0
    %2357 = vmatprep.subr.mxu0 0.0
    %2358 = vmatpush2.msra.mxu0 0.0
    %2359 = vmatprep.subr.mxu0 0.0
    %2360 = vmatpush2.msra.mxu0 0.0
    %2361 = vmatprep.subr.mxu0 0.0
    %2362 = vmatpush2.msra.mxu0 0.0
    %2363 = vmatprep.subr.mxu0 0.0
    %2364 = vmatpush2.msra.mxu0 0.0
    %2365 = vmatprep.subr.mxu0 0.0
    %2366 = vmatpush2.msra.mxu0 0.0
    %2367 = vmatprep.subr.mxu0 0.0
    %2368 = vmatpush2.msra.mxu0 0.0
    %2369 = vmatprep.subr.mxu0 0.0
    %2370 = vmatpush2.msra.mxu0 0.0
    %2371 = vmatprep.subr.mxu0 0.0
    %2372 = vmatpush2.msra.mxu0 0.0
    %2373 = vmatprep.subr.mxu0 0.0
    %2374 = vmatpush2.msra.mxu0 0.0
    %2375 = vmatprep.subr.mxu0 0.0
    %2376 = vmatpush2.msra.mxu0 0.0
    %2377 = vmatprep.subr.mxu0 0.0
    %2378 = vmatpush2.msra.mxu0 0.0
    %2379 = vmatprep.subr.mxu0 0.0
    %2380 = vmatpush2.msra.mxu0 0.0
    %2381 = vmatprep.subr.mxu0 0.0
    %2382 = vmatpush2.msra.mxu0 0.0
    %2383 = vmatprep.subr.mxu0 0.0
    %2384 = vmatpush2.msra.mxu0 0.0
    %2385 = vmatprep.mubr.f32.mxu0 0.0
    %2386 = vmatmul.mubr.f32.gmra.mxu0 %v2319
    %v2387 = vpop.f32.mrf.mxu0
    %v2388 = vadd.f32 %v315, %v2387
    %v2389 = vpop.f32.mrf.mxu0
    %2390 = vdwg.mxu0
    %v2391 = vmax.f32 %v2388, 0.0
    %v2393 = vsel %vm397, %v2391, 0
    %2395 = vmatprep.subr.mxu0 0.0
    %2396 = vmatpush1.msra.mxu0 0.0
    %2397 = vmatprep.subr.mxu0 0.0
    %2398 = vmatpush1.msra.mxu0 0.0
    %2399 = vmatprep.subr.mxu0 0.0
    %2400 = vmatpush1.msra.mxu0 0.0
    %2401 = vmatprep.subr.mxu0 0.0
    %2402 = vmatpush1.msra.mxu0 0.0
    %2403 = vmatprep.subr.mxu0 0.0
    %2404 = vmatpush1.msra.mxu0 0.0
    %2405 = vmatprep.subr.mxu0 0.0
    %2406 = vmatpush1.msra.mxu0 0.0
    %2407 = vmatprep.subr.mxu0 0.0
    %2408 = vmatpush1.msra.mxu0 0.0
    %2409 = vmatprep.subr.mxu0 0.0
    %2410 = vmatpush1.msra.mxu0 0.0
    %2411 = vmatprep.subr.mxu0 0.0
    %2412 = vmatpush1.msra.mxu0 %v68
    %2413 = vmatprep.subr.mxu0 0.0
    %2414 = vmatpush1.msra.mxu0 %v67
    %2415 = vmatprep.subr.mxu0 0.0
    %2416 = vmatpush1.msra.mxu0 %v66
    %2417 = vmatprep.subr.mxu0 0.0
    %2418 = vmatpush1.msra.mxu0 %v65
    %2419 = vmatprep.subr.mxu0 0.0
    %2420 = vmatpush1.msra.mxu0 %v64
    %2421 = vmatprep.subr.mxu0 0.0
    %2422 = vmatpush1.msra.mxu0 %v63
    %2423 = vmatprep.subr.mxu0 0.0
    %2424 = vmatpush1.msra.mxu0 %v62
    %2425 = vmatprep.subr.mxu0 0.0
    %2426 = vmatpush1.msra.mxu0 %v61
    %2427 = vmatprep.subr.mxu0 0.0
    %2428 = vmatpush2.msra.mxu0 0.0
    %2429 = vmatprep.subr.mxu0 0.0
    %2430 = vmatpush2.msra.mxu0 0.0
    %2431 = vmatprep.subr.mxu0 0.0
    %2432 = vmatpush2.msra.mxu0 0.0
    %2433 = vmatprep.subr.mxu0 0.0
    %2434 = vmatpush2.msra.mxu0 0.0
    %2435 = vmatprep.subr.mxu0 0.0
    %2436 = vmatpush2.msra.mxu0 0.0
    %2437 = vmatprep.subr.mxu0 0.0
    %2438 = vmatpush2.msra.mxu0 0.0
    %2439 = vmatprep.subr.mxu0 0.0
    %2440 = vmatpush2.msra.mxu0 0.0
    %2441 = vmatprep.subr.mxu0 0.0
    %2442 = vmatpush2.msra.mxu0 0.0
    %2443 = vmatprep.subr.mxu0 0.0
    %2444 = vmatpush2.msra.mxu0 0.0
    %2445 = vmatprep.subr.mxu0 0.0
    %2446 = vmatpush2.msra.mxu0 0.0
    %2447 = vmatprep.subr.mxu0 0.0
    %2448 = vmatpush2.msra.mxu0 0.0
    %2449 = vmatprep.subr.mxu0 0.0
    %2450 = vmatpush2.msra.mxu0 0.0
    %2451 = vmatprep.subr.mxu0 0.0
    %2452 = vmatpush2.msra.mxu0 0.0
    %2453 = vmatprep.subr.mxu0 0.0
    %2454 = vmatpush2.msra.mxu0 0.0
    %2455 = vmatprep.subr.mxu0 0.0
    %2456 = vmatpush2.msra.mxu0 0.0
    %2457 = vmatprep.subr.mxu0 0.0
    %2458 = vmatpush2.msra.mxu0 0.0
    %2459 = vmatprep.mubr.f32.mxu0 0.0
    %2460 = vmatmul.mubr.f32.gmra.mxu0 %v2393
    %v2461 = vpop.f32.mrf.mxu0
    %v2462 = vadd.f32 %v395, %v2461
    %v2463 = vpop.f32.mrf.mxu0
    %2464 = vdwg.mxu0
    %v2465 = vmul.f32 %v2462, %v152
    %v2466 = vsel %vm472, %v2465, 0.0
    %2467 = vadd.xlane.f32.xlu0 %v2466
    %v2468 = vpop.xlane.xlu0 %2467
    %v2469 = vstv %s2192
    %vm2470 = vcmp.eq.f32.partialorder %v52, %v2469
    %v2471 = vstv %s2182
    %vm2472 = vcmp.eq.s32.totalorder %v156, %v2471
    %v2473 = vsel %vm2472, -1000.0, %v2468
    %v2474 = vsel %vm2470, %v2473, -1e+30
    %v2475 = vsel %vm482, %v2474, -inf
    %v2476 = vrot.slane %v2475, 4
    %v2477 = vmax.f32 %v2475, %v2476
    %v2478 = vrot.slane %v2477, 2
    %v2479 = vmax.f32 %v2477, %v2478
    %v2480 = vrot.slane %v2479, 1
    %v2481 = vmax.f32 %v2479, %v2480
    %v2482 = vsub.f32 %v2474, %v2481
    %v2483 = vmul.f32 %v2482, 1.442695
    %v2484 = vpow.pop %v2483
    %v2485 = vsel %vm482, %v2484, 0.0
    %v2486 = vrot.slane %v2485, 4
    %v2487 = vadd.f32 %v2485, %v2486
    %v2488 = vrot.slane %v2487, 2
    %v2489 = vadd.f32 %v2487, %v2488
    %v2490 = vrot.slane %v2489, 1
    %v2491 = vadd.f32 %v2489, %v2490
    %v2492 = vrcp.pop %v2491
    %v2493 = vmul.f32 %v2484, %v2492
    %2495 = vset.pattern.permute.xlu0 4
    %2496 = vperm.xlu0 %2495, %v2493
    %v2497 = vpop.permute.xlu0 %2496
    %v2499 = vmul.f32 %v2497, %v53
    %v2500 = vsel %vm81, %v2499, 0.0
    %v2501 = vrot.slane %v2500, 4
    %v2502 = vadd.f32 %v2500, %v2501
    %v2503 = vrot.slane %v2502, 2
    %v2504 = vadd.f32 %v2502, %v2503
    %v2505 = vrot.slane %v2504, 1
    %v2506 = vadd.f32 %v2504, %v2505
    %v2507 = vstv %s2194
    %v2508 = vmul.f32 %v2506, %v2507
    %vm2509 = vcmp.eq.s32.totalorder %v156, 6
    %v2510 = vsel %vm2509, 1, 0
    %v2511 = vcvt.s32.f32 %v2510
    %v2512 = vmul.f32 %v2511, %v2508
    %v2513 = vadd.f32 %v2181, %v2512
    %s2514 = sadd.s32 %s157, 7
    %s2515 = smul.u32 %s2514, 128
    %s2516 = sld [smem:[#allocation2 + %s2515]]
    %s2517 = sadd.s32 %s2515, 1
    %s2518 = sld [smem:[#allocation2 + %s2517]]
    %s2519 = sadd.s32 %s2515, 2
    %s2520 = sld [smem:[#allocation2 + %s2519]]
    %s2521 = sadd.s32 %s2515, 3
    %s2522 = sld [smem:[#allocation2 + %s2521]]
    %s2523 = sadd.s32 %s2515, 4
    %s2524 = sld [smem:[#allocation2 + %s2523]]
    %s2525 = sadd.s32 %s2515, 5
    %s2526 = sld [smem:[#allocation2 + %s2525]]
    %v2527 = vstv %s2516
    %v2528 = vsub.f32 %v2527, %v52
    %v2529 = vstv %s2518
    %v2530 = vsub.f32 %v2529, %v52
    %v2531 = vstv %s2520
    %v2532 = vsub.f32 %v2531, %v52
    %v2533 = vstv %s2522
    %v2534 = vsub.f32 %v2533, %v52
    %v2535 = vmul.f32 %v2528, %v2528
    %v2536 = vmul.f32 %v2530, %v2530
    %2538 = vrot.lane.b32.xlu0 %v2536, 127
    %v2539 = vpop.permute.xlu0 %2538
    %v2541 = vadd.f32 %v2535, %v2539
    %v2542 = vrsqrt.pop %v2541
    %v2543 = vmul.f32 %v2541, %v2542
    %vm2544 = vcmp.eq.f32.partialorder %v2541, inf
    %v2545 = vsel %vm2544, %v2541, %v2543
    %vm2546 = vcmp.eq.f32.partialorder %v2541, 0.0
    %v2547 = vand.u32 %v2541, 2147483648
    %v2548 = vsel %vm2546, %v2547, %v2545
    %s2549 = smul.f32 %s2520, %s2520
    %s2550 = smul.f32 %s2522, %s2522
    %s2551 = sadd.f32 %s2549, %s2550
    %v2552 = vstv %s2551
    %v2553 = vrsqrt.pop %v2552
    %v2554 = vmul.f32 %v2552, %v2553
    %vm2555 = vcmp.eq.f32.partialorder %v2552, inf
    %v2556 = vsel %vm2555, %v2552, %v2554
    %vm2557 = vcmp.eq.f32.partialorder %v2552, 0.0
    %v2558 = vand.u32 %v2552, 2147483648
    %v2559 = vsel %vm2557, %v2558, %v2556
    %s2560 = vtos %v2559
    %v2561 = vmul.f32 %v2528, %v2531
    %v2562 = vmul.f32 %v2530, %v2533
    %2564 = vrot.lane.b32.xlu0 %v2562, 127
    %v2565 = vpop.permute.xlu0 %2564
    %v2567 = vadd.f32 %v2561, %v2565
    %v2568 = vstv %s2560
    %v2569 = vmul.f32 %v2548, %v2568
    %v2570 = vadd.f32 %v2569, 1e-06
    %v2571 = vrcp.pop %v2570
    %v2572 = vmul.f32 %v2567, %v2571
    %2574 = vrot.lane.b32.xlu0 %v2532, 126
    %v2575 = vpop.permute.xlu0 %2574
    %v2577 = vmul.f32 %v2528, %v2575
    %2579 = vrot.lane.b32.xlu0 %v2534, 126
    %v2580 = vpop.permute.xlu0 %2579
    %v2582 = vmul.f32 %v2530, %v2580
    %2584 = vrot.lane.b32.xlu0 %v2582, 127
    %v2585 = vpop.permute.xlu0 %2584
    %v2587 = vadd.f32 %v2577, %v2585
    %v2588 = vsub.f32 0.0, %v2587
    %v2589 = vmul.f32 %v2532, %v2532
    %v2590 = vmul.f32 %v2534, %v2534
    %2592 = vrot.lane.b32.xlu0 %v2590, 127
    %v2593 = vpop.permute.xlu0 %2592
    %v2595 = vadd.f32 %v2589, %v2593
    %v2596 = vadd.f32 %v2595, 1e-06
    %2598 = vrot.lane.b32.xlu0 %v2596, 126
    %v2599 = vpop.permute.xlu0 %2598
    %v2601 = vrcp.pop %v2599
    %v2602 = vmul.f32 %v2588, %v2601
    %v2603 = vmul.f32 %v2602, %v2575
    %v2604 = vadd.f32 %v2528, %v2603
    %2605 = vrot.lane.b32.xlu0 %v2534, 125
    %v2606 = vpop.permute.xlu0 %2605
    %v2608 = vmul.f32 %v2602, %v2606
    %2610 = vrot.lane.b32.xlu0 %v2608, 1
    %v2611 = vpop.permute.xlu0 %2610
    %v2613 = vadd.f32 %v2530, %v2611
    %v2614 = vmul.f32 %v2604, %v2604
    %v2615 = vmul.f32 %v2613, %v2613
    %2617 = vrot.lane.b32.xlu0 %v2615, 127
    %v2618 = vpop.permute.xlu0 %2617
    %v2620 = vadd.f32 %v2614, %v2618
    %v2621 = vrsqrt.pop %v2620
    %v2622 = vmul.f32 %v2620, %v2621
    %vm2623 = vcmp.eq.f32.partialorder %v2620, inf
    %v2624 = vsel %vm2623, %v2620, %v2622
    %vm2625 = vcmp.eq.f32.partialorder %v2620, 0.0
    %v2626 = vand.u32 %v2620, 2147483648
    %v2627 = vsel %vm2625, %v2626, %v2624
    %2629 = vset.pattern.permute.xlu0 0
    %2630 = vperm.xlu0 %2629, %v2548
    %v2631 = vpop.permute.xlu0 %2630
    %v2633 = vmul.f32 %v2631, %v279
    %2635 = vset.pattern.permute.xlu0 0
    %2636 = vperm.xlu0 %2635, %v2572
    %v2637 = vpop.permute.xlu0 %2636
    %v2639 = vmul.f32 %v2637, %v289
    %v2640 = vadd.f32 %v2633, %v2639
    %2642 = vset.pattern.permute.xlu0 0
    %2643 = vperm.xlu0 %2642, %v2627
    %v2644 = vpop.permute.xlu0 %2643
    %v2646 = vmul.f32 %v2644, %v300
    %v2647 = vadd.f32 %v2640, %v2646
    %v2648 = vadd.f32 %v2647, %v307
    %v2649 = vmax.f32 %v2648, 0.0
    %v2651 = vsel %vm81, %v2649, 0
    %2653 = vmatprep.subr.mxu0 0.0
    %2654 = vmatpush1.msra.mxu0 0.0
    %2655 = vmatprep.subr.mxu0 0.0
    %2656 = vmatpush1.msra.mxu0 0.0
    %2657 = vmatprep.subr.mxu0 0.0
    %2658 = vmatpush1.msra.mxu0 0.0
    %2659 = vmatprep.subr.mxu0 0.0
    %2660 = vmatpush1.msra.mxu0 0.0
    %2661 = vmatprep.subr.mxu0 0.0
    %2662 = vmatpush1.msra.mxu0 0.0
    %2663 = vmatprep.subr.mxu0 0.0
    %2664 = vmatpush1.msra.mxu0 0.0
    %2665 = vmatprep.subr.mxu0 0.0
    %2666 = vmatpush1.msra.mxu0 0.0
    %2667 = vmatprep.subr.mxu0 0.0
    %2668 = vmatpush1.msra.mxu0 0.0
    %2669 = vmatprep.subr.mxu0 0.0
    %2670 = vmatpush1.msra.mxu0 0.0
    %2671 = vmatprep.subr.mxu0 0.0
    %2672 = vmatpush1.msra.mxu0 0.0
    %2673 = vmatprep.subr.mxu0 0.0
    %2674 = vmatpush1.msra.mxu0 0.0
    %2675 = vmatprep.subr.mxu0 0.0
    %2676 = vmatpush1.msra.mxu0 0.0
    %2677 = vmatprep.subr.mxu0 0.0
    %2678 = vmatpush1.msra.mxu0 %v59
    %2679 = vmatprep.subr.mxu0 0.0
    %2680 = vmatpush1.msra.mxu0 %v58
    %2681 = vmatprep.subr.mxu0 0.0
    %2682 = vmatpush1.msra.mxu0 %v57
    %2683 = vmatprep.subr.mxu0 0.0
    %2684 = vmatpush1.msra.mxu0 %v56
    %2685 = vmatprep.subr.mxu0 0.0
    %2686 = vmatpush2.msra.mxu0 0.0
    %2687 = vmatprep.subr.mxu0 0.0
    %2688 = vmatpush2.msra.mxu0 0.0
    %2689 = vmatprep.subr.mxu0 0.0
    %2690 = vmatpush2.msra.mxu0 0.0
    %2691 = vmatprep.subr.mxu0 0.0
    %2692 = vmatpush2.msra.mxu0 0.0
    %2693 = vmatprep.subr.mxu0 0.0
    %2694 = vmatpush2.msra.mxu0 0.0
    %2695 = vmatprep.subr.mxu0 0.0
    %2696 = vmatpush2.msra.mxu0 0.0
    %2697 = vmatprep.subr.mxu0 0.0
    %2698 = vmatpush2.msra.mxu0 0.0
    %2699 = vmatprep.subr.mxu0 0.0
    %2700 = vmatpush2.msra.mxu0 0.0
    %2701 = vmatprep.subr.mxu0 0.0
    %2702 = vmatpush2.msra.mxu0 0.0
    %2703 = vmatprep.subr.mxu0 0.0
    %2704 = vmatpush2.msra.mxu0 0.0
    %2705 = vmatprep.subr.mxu0 0.0
    %2706 = vmatpush2.msra.mxu0 0.0
    %2707 = vmatprep.subr.mxu0 0.0
    %2708 = vmatpush2.msra.mxu0 0.0
    %2709 = vmatprep.subr.mxu0 0.0
    %2710 = vmatpush2.msra.mxu0 0.0
    %2711 = vmatprep.subr.mxu0 0.0
    %2712 = vmatpush2.msra.mxu0 0.0
    %2713 = vmatprep.subr.mxu0 0.0
    %2714 = vmatpush2.msra.mxu0 0.0
    %2715 = vmatprep.subr.mxu0 0.0
    %2716 = vmatpush2.msra.mxu0 0.0
    %2717 = vmatprep.mubr.f32.mxu0 0.0
    %2718 = vmatmul.mubr.f32.gmra.mxu0 %v2651
    %v2719 = vpop.f32.mrf.mxu0
    %v2720 = vadd.f32 %v315, %v2719
    %v2721 = vpop.f32.mrf.mxu0
    %2722 = vdwg.mxu0
    %v2723 = vmax.f32 %v2720, 0.0
    %v2725 = vsel %vm397, %v2723, 0
    %2727 = vmatprep.subr.mxu0 0.0
    %2728 = vmatpush1.msra.mxu0 0.0
    %2729 = vmatprep.subr.mxu0 0.0
    %2730 = vmatpush1.msra.mxu0 0.0
    %2731 = vmatprep.subr.mxu0 0.0
    %2732 = vmatpush1.msra.mxu0 0.0
    %2733 = vmatprep.subr.mxu0 0.0
    %2734 = vmatpush1.msra.mxu0 0.0
    %2735 = vmatprep.subr.mxu0 0.0
    %2736 = vmatpush1.msra.mxu0 0.0
    %2737 = vmatprep.subr.mxu0 0.0
    %2738 = vmatpush1.msra.mxu0 0.0
    %2739 = vmatprep.subr.mxu0 0.0
    %2740 = vmatpush1.msra.mxu0 0.0
    %2741 = vmatprep.subr.mxu0 0.0
    %2742 = vmatpush1.msra.mxu0 0.0
    %2743 = vmatprep.subr.mxu0 0.0
    %2744 = vmatpush1.msra.mxu0 %v68
    %2745 = vmatprep.subr.mxu0 0.0
    %2746 = vmatpush1.msra.mxu0 %v67
    %2747 = vmatprep.subr.mxu0 0.0
    %2748 = vmatpush1.msra.mxu0 %v66
    %2749 = vmatprep.subr.mxu0 0.0
    %2750 = vmatpush1.msra.mxu0 %v65
    %2751 = vmatprep.subr.mxu0 0.0
    %2752 = vmatpush1.msra.mxu0 %v64
    %2753 = vmatprep.subr.mxu0 0.0
    %2754 = vmatpush1.msra.mxu0 %v63
    %2755 = vmatprep.subr.mxu0 0.0
    %2756 = vmatpush1.msra.mxu0 %v62
    %2757 = vmatprep.subr.mxu0 0.0
    %2758 = vmatpush1.msra.mxu0 %v61
    %2759 = vmatprep.subr.mxu0 0.0
    %2760 = vmatpush2.msra.mxu0 0.0
    %2761 = vmatprep.subr.mxu0 0.0
    %2762 = vmatpush2.msra.mxu0 0.0
    %2763 = vmatprep.subr.mxu0 0.0
    %2764 = vmatpush2.msra.mxu0 0.0
    %2765 = vmatprep.subr.mxu0 0.0
    %2766 = vmatpush2.msra.mxu0 0.0
    %2767 = vmatprep.subr.mxu0 0.0
    %2768 = vmatpush2.msra.mxu0 0.0
    %2769 = vmatprep.subr.mxu0 0.0
    %2770 = vmatpush2.msra.mxu0 0.0
    %2771 = vmatprep.subr.mxu0 0.0
    %2772 = vmatpush2.msra.mxu0 0.0
    %2773 = vmatprep.subr.mxu0 0.0
    %2774 = vmatpush2.msra.mxu0 0.0
    %2775 = vmatprep.subr.mxu0 0.0
    %2776 = vmatpush2.msra.mxu0 0.0
    %2777 = vmatprep.subr.mxu0 0.0
    %2778 = vmatpush2.msra.mxu0 0.0
    %2779 = vmatprep.subr.mxu0 0.0
    %2780 = vmatpush2.msra.mxu0 0.0
    %2781 = vmatprep.subr.mxu0 0.0
    %2782 = vmatpush2.msra.mxu0 0.0
    %2783 = vmatprep.subr.mxu0 0.0
    %2784 = vmatpush2.msra.mxu0 0.0
    %2785 = vmatprep.subr.mxu0 0.0
    %2786 = vmatpush2.msra.mxu0 0.0
    %2787 = vmatprep.subr.mxu0 0.0
    %2788 = vmatpush2.msra.mxu0 0.0
    %2789 = vmatprep.subr.mxu0 0.0
    %2790 = vmatpush2.msra.mxu0 0.0
    %2791 = vmatprep.mubr.f32.mxu0 0.0
    %2792 = vmatmul.mubr.f32.gmra.mxu0 %v2725
    %v2793 = vpop.f32.mrf.mxu0
    %v2794 = vadd.f32 %v395, %v2793
    %v2795 = vpop.f32.mrf.mxu0
    %2796 = vdwg.mxu0
    %v2797 = vmul.f32 %v2794, %v152
    %v2798 = vsel %vm472, %v2797, 0.0
    %2799 = vadd.xlane.f32.xlu0 %v2798
    %v2800 = vpop.xlane.xlu0 %2799
    %v2801 = vstv %s2524
    %vm2802 = vcmp.eq.f32.partialorder %v52, %v2801
    %v2803 = vstv %s2514
    %vm2804 = vcmp.eq.s32.totalorder %v156, %v2803
    %v2805 = vsel %vm2804, -1000.0, %v2800
    %v2806 = vsel %vm2802, %v2805, -1e+30
    %v2807 = vsel %vm482, %v2806, -inf
    %v2808 = vrot.slane %v2807, 4
    %v2809 = vmax.f32 %v2807, %v2808
    %v2810 = vrot.slane %v2809, 2
    %v2811 = vmax.f32 %v2809, %v2810
    %v2812 = vrot.slane %v2811, 1
    %v2813 = vmax.f32 %v2811, %v2812
    %v2814 = vsub.f32 %v2806, %v2813
    %v2815 = vmul.f32 %v2814, 1.442695
    %v2816 = vpow.pop %v2815
    %v2817 = vsel %vm482, %v2816, 0.0
    %v2818 = vrot.slane %v2817, 4
    %v2819 = vadd.f32 %v2817, %v2818
    %v2820 = vrot.slane %v2819, 2
    %v2821 = vadd.f32 %v2819, %v2820
    %v2822 = vrot.slane %v2821, 1
    %v2823 = vadd.f32 %v2821, %v2822
    %v2824 = vrcp.pop %v2823
    %v2825 = vmul.f32 %v2816, %v2824
    %2827 = vset.pattern.permute.xlu0 4
    %2828 = vperm.xlu0 %2827, %v2825
    %v2829 = vpop.permute.xlu0 %2828
    %v2831 = vmul.f32 %v2829, %v53
    %v2832 = vsel %vm81, %v2831, 0.0
    %v2833 = vrot.slane %v2832, 4
    %v2834 = vadd.f32 %v2832, %v2833
    %v2835 = vrot.slane %v2834, 2
    %v2836 = vadd.f32 %v2834, %v2835
    %v2837 = vrot.slane %v2836, 1
    %v2838 = vadd.f32 %v2836, %v2837
    %v2839 = vstv %s2526
    %v2840 = vmul.f32 %v2838, %v2839
    %vm2841 = vcmp.eq.s32.totalorder %v156, 7
    %v2842 = vsel %vm2841, 1, 0
    %v2843 = vcvt.s32.f32 %v2842
    %v2844 = vmul.f32 %v2843, %v2840
    %v2845 = vadd.f32 %v2513, %v2844
    %2846 = vst.msk [vmem:[#allocation5] sm:$0xff] %vm81, %v2845
    // Predicated region
    $region50: #{tpu_custom_call.1} parent=1 // pred_check
      _
    $region51: #{tpu_custom_call.1} parent=1 // pred_check_branch
      %2848 = sbr.rel (0) target = $region53
    $region52: #{tpu_custom_call.1} parent=1 // pred_region
      %s2850 = ssub.s32 128, 128
      %2851 = vsyncadd [#allocation3], %s2850
      %s2853 = sshll.u32 [#allocation5], 4
      %s2854 = int_to_ptr.vmem [resolvable:$true] %s2853
      %2856 = dma.vmem_to_hbm [thread:$0]  %s2854, 128, %s11, [#allocation3]
    $region53: #{tpu_custom_call.1} parent=1 // pred_fallthru
      _
    // Predicated region
    $region54: #{tpu_custom_call.1} parent=1 // pred_check
      _
    $region55: #{tpu_custom_call.1} parent=1 // pred_check_branch
      %2858 = sbr.rel (0) target = $region57
    $region56: #{tpu_custom_call.1} parent=1 // pred_region
      %2859 = dma.done [#allocation3], 128
    $region57: #{tpu_custom_call.1} parent=1 // pred_fallthru
      _
    %2860 = vsyncpa [#allocation3], 1
    %2861 = vsyncpa [#allocation4], 1

</llo_original>
